<compile_context>
chip_gen: v6e
topology: v6e:2x2x1
jax: 0.10.0
libtpu: 0.0.40
codegen_flags: <defaults>
</compile_context>

<pallas_src>
import jax
import jax.numpy as jnp
import numpy as np
from jax.experimental import pallas as pl
from jax.experimental.pallas import tpu as pltpu

LEAKY_SLOPE = 0.01              # nn.LeakyReLU default
BN_EPS = 1e-5                   # nn.BatchNorm1d default
_VMEM_LIMIT = 48 * 1024 * 1024  # fits v7x's 64 MiB/TC with headroom; fine on v5e/v6e
_VMEM_BUDGET = 24 * 1024 * 1024  # target for double-buffered in+out blocks


# --------------------------------------------------------------------------------------
# Stage kernel: (prev-BN apply) -> 3x3-tap conv (3 wide matmuls) -> LeakyReLU -> stats
# --------------------------------------------------------------------------------------
def _make_stage_kernel(PB, R, Nout):
    def kernel(x_ref, w_ref, scale_ref, shift_ref, y_ref, sum_ref, ssq_ref):
        sc = scale_ref[...]                             # (1, Kin) previous-stage BN scale
        sh = shift_ref[...]                             # (1, Kin) previous-stage BN shift
        rows = jax.lax.broadcasted_iota(jnp.int32, (R, 1), 0)

        def plane(p, carry):
            s_acc, q_acc = carry
            x2 = x_ref[p] * sc + sh                     # (R, Kin) BN-applied plane
            # Row-tap views with implicit zero padding at the top / bottom row.
            x_dn = jnp.where(rows >= 1, pltpu.roll(x2, shift=1, axis=0), 0.0)
            x_up = jnp.where(rows <= R - 2, pltpu.roll(x2, shift=R - 1, axis=0), 0.0)
            # Column taps live inside the banded weight matrices: 3 wide MXU matmuls.
            acc = jnp.dot(x_dn, w_ref[0], preferred_element_type=jnp.float32)
            acc = acc + jnp.dot(x2, w_ref[1], preferred_element_type=jnp.float32)
            acc = acc + jnp.dot(x_up, w_ref[2], preferred_element_type=jnp.float32)
            y = jnp.where(acc >= 0, acc, jnp.float32(LEAKY_SLOPE) * acc)
            y_ref[p] = y                                # full-width (lane-dense) store
            s_acc = s_acc + jnp.sum(y, axis=0, keepdims=True)
            q_acc = q_acc + jnp.sum(y * y, axis=0, keepdims=True)
            return s_acc, q_acc

        zero = jnp.zeros((1, Nout), jnp.float32)
        s_acc, q_acc = jax.lax.fori_loop(0, PB, plane, (zero, zero))
        sum_ref[...] = s_acc
        ssq_ref[...] = q_acc

    return kernel


def _pick_pb(B, R, Kin, Nout):
    """Largest plane-block fitting the double-buffered VMEM budget; prefer an even
    number of grid steps so the 'parallel' axis shards evenly across v7x's 2 TCs."""
    subl = max(-(-R // 8) * 8, 8)
    lanes = (-(-Kin // 128) + -(-Nout // 128)) * 128
    per_plane = subl * lanes * 4
    fits = [d for d in range(1, B + 1)
            if B % d == 0 and 2 * d * per_plane <= _VMEM_BUDGET]
    fits = fits or [1]
    even = [d for d in fits if (B // d) % 2 == 0]
    return max(even) if even else max(fits)


def _banded_weights(w3, Wd):
    """Fold the 3 column taps + implicit zero column-padding into banded matrices:
    (3, 3, Cin, Cout) -> (3, Wd*Cin, Wd*Cout)."""
    _, _, Cin, Cout = w3.shape
    sel = np.zeros((3, Wd, Wd), np.float32)
    for b in range(3):
        for w in range(Wd):
            s = w + b - 1
            if 0 <= s < Wd:
                sel[b, s, w] = 1.0
    m = jnp.einsum('bsw,abio->asiwo', jnp.asarray(sel), w3.astype(jnp.float32))
    return m.reshape(3, Wd * Cin, Wd * Cout)


def conv_lrelu_bn_stage(xp, w_banded, scale_in, shift_in, gamma, beta, Wd, Cout):
    """One (conv -> LeakyReLU -> BatchNorm1d batch-stats) stage on lane-dense planes.

    xp        : (B, R, Wd*Cin)   planes (raw previous-stage activations, or the input)
    w_banded  : (3, Wd*Cin, Wd*Cout)
    scale_in / shift_in : (1, Wd*Cin)  BN apply of the PREVIOUS stage (identity for x)
    returns   : (y_raw (B, R, Wd*Cout), scale_out (1, Wd*Cout), shift_out (1, Wd*Cout))
    """
    B, R, Kin = xp.shape
    Nout = w_banded.shape[-1]
    PB = _pick_pb(B, R, Kin, Nout)
    G = B // PB

    cparams = pltpu.CompilerParams(dimension_semantics=("parallel",),
                                   vmem_limit_bytes=_VMEM_LIMIT)

    y_raw, psum, pssq = pl.pallas_call(
        _make_stage_kernel(PB, R, Nout),
        grid=(G,),
        in_specs=[
            pl.BlockSpec((PB, R, Kin), lambda g: (g, 0, 0)),
            pl.BlockSpec((3, Kin, Nout), lambda g: (0, 0, 0)),
            pl.BlockSpec((1, Kin), lambda g: (0, 0)),
            pl.BlockSpec((1, Kin), lambda g: (0, 0)),
        ],
        out_specs=(
            pl.BlockSpec((PB, R, Nout), lambda g: (g, 0, 0)),
            pl.BlockSpec((None, 1, Nout), lambda g: (g, 0, 0)),
            pl.BlockSpec((None, 1, Nout), lambda g: (g, 0, 0)),
        ),
        out_shape=(
            jax.ShapeDtypeStruct((B, R, Nout), jnp.float32),
            jax.ShapeDtypeStruct((G, 1, Nout), jnp.float32),
            jax.ShapeDtypeStruct((G, 1, Nout), jnp.float32),
        ),
        compiler_params=cparams,
    )(xp, w_banded, scale_in, shift_in)

    # BatchNorm1d batch statistics (biased variance) from tiny per-block partials.
    # TODO(synk): one-pass E[x^2]-E[x]^2 can lose precision on very large grids.
    count = jnp.float32(B * R * Wd)
    s = jnp.sum(psum, axis=(0, 1)).reshape(Wd, Cout).sum(axis=0)
    q = jnp.sum(pssq, axis=(0, 1)).reshape(Wd, Cout).sum(axis=0)
    mean = s / count
    var = jnp.maximum(q / count - mean * mean, 0.0)
    scale_c = gamma.reshape(-1) * jax.lax.rsqrt(var + jnp.float32(BN_EPS))
    shift_c = beta.reshape(-1) - mean * scale_c
    scale_out = jnp.tile(scale_c, Wd).reshape(1, Wd * Cout)
    shift_out = jnp.tile(shift_c, Wd).reshape(1, Wd * Cout)
    return y_raw, scale_out, shift_out


def res_context_block(x, params):
    """Forward pass of ResContextBlock on a dense voxel grid (channels-last)."""
    N, D, H, W, Cin = x.shape
    Cout = params["w1"].shape[-1]
    one = jnp.ones((1, W * Cin), jnp.float32)
    zero = jnp.zeros((1, W * Cin), jnp.float32)

    # shortcut branch: conv1x3 (taps over H, W) -> act -> bn, twice.
    xp1 = x.reshape(N * D, H, W * Cin)                       # free reshape, no pad pass
    s1, sc1, sh1 = conv_lrelu_bn_stage(
        xp1, _banded_weights(params["w1"].reshape(3, 3, Cin, Cout), W),
        one, zero, params["g1"], params["b1"], W, Cout)
    s2, sc2, sh2 = conv_lrelu_bn_stage(
        s1, _banded_weights(params["w1_2"].reshape(3, 3, Cout, Cout), W),
        sc1, sh1, params["g1_2"], params["b1_2"], W, Cout)
    shortcut = (s2 * sc2 + sh2).reshape(N, D, H, W, Cout)    # final BN in the epilogue

    # main branch: conv3x1 (taps over D, W) -> act -> bn, twice.
    # TODO(synk): this transpose is one extra XLA pass over x; a gather-style index_map
    # could fold it into the first stage's loads.
    xp2 = jnp.transpose(x, (0, 2, 1, 3, 4)).reshape(N * H, D, W * Cin)
    r1, rc1, rh1 = conv_lrelu_bn_stage(
        xp2, _banded_weights(params["w2"].reshape(3, 3, Cin, Cout), W),
        one, zero, params["g2"], params["b2"], W, Cout)
    r2, rc2, rh2 = conv_lrelu_bn_stage(
        r1, _banded_weights(params["w3"].reshape(3, 3, Cout, Cout), W),
        rc1, rh1, params["g3"], params["b3"], W, Cout)
    resA = (r2 * rc2 + rh2).reshape(N, H, D, W, Cout).transpose(0, 2, 1, 3, 4)

    # residual add fused with the two final BN applies in a single XLA elementwise pass
    return resA + shortcut


# ---------------- pure-JAX reference (for correctness check only) ----------------
def _ref_stage(x, w, gamma, beta, pad, residual=None):
    y = jax.lax.conv_general_dilated(
        x, w, window_strides=(1, 1, 1),
        padding=[(pad[0], pad[0]), (pad[1], pad[1]), (pad[2], pad[2])],
        dimension_numbers=("NDHWC", "DHWIO", "NDHWC"))
    y = jnp.where(y >= 0, y, LEAKY_SLOPE * y)
    N, D, H, W, C = y.shape
    yf = y.reshape(-1, C)
    mean = yf.mean(axis=0, keepdims=True)
    var = ((yf - mean) ** 2).mean(axis=0, keepdims=True)
    yf = (yf - mean) * jax.lax.rsqrt(var + BN_EPS) * gamma + beta
    y = yf.reshape(N, D, H, W, C)
    if residual is not None:
        y = y + residual
    return y


def _ref_block(x, p):
    s = _ref_stage(x, p["w1"], p["g1"], p["b1"], (0, 1, 1))
    s = _ref_stage(s, p["w1_2"], p["g1_2"], p["b1_2"], (0, 1, 1))
    r = _ref_stage(x, p["w2"], p["g2"], p["b2"], (1, 0, 1))
    r = _ref_stage(r, p["w3"], p["g3"], p["b3"], (1, 0, 1), residual=s)
    return r


if __name__ == "__main__":
    # Small shapes: batch=2, in_filters=4, out_filters=8, spatial (D, H, W) = (8, 16, 16)
    N, D, H, W = 2, 8, 16, 16
    Cin, Cout = 4, 8

    key = jax.random.PRNGKey(0)
    k = jax.random.split(key, 5)
    params = {
        "w1":   0.1 * jax.random.normal(k[0], (1, 3, 3, Cin, Cout), jnp.float32),
        "w1_2": 0.1 * jax.random.normal(k[1], (1, 3, 3, Cout, Cout), jnp.float32),
        "w2":   0.1 * jax.random.normal(k[2], (3, 1, 3, Cin, Cout), jnp.float32),
        "w3":   0.1 * jax.random.normal(k[3], (3, 1, 3, Cout, Cout), jnp.float32),
        # BatchNorm1d params initialised to weight=1, bias=0 per weight_initialization()
        "g1":   jnp.ones((1, Cout), jnp.float32), "b1":   jnp.zeros((1, Cout), jnp.float32),
        "g1_2": jnp.ones((1, Cout), jnp.float32), "b1_2": jnp.zeros((1, Cout), jnp.float32),
        "g2":   jnp.ones((1, Cout), jnp.float32), "b2":   jnp.zeros((1, Cout), jnp.float32),
        "g3":   jnp.ones((1, Cout), jnp.float32), "b3":   jnp.zeros((1, Cout), jnp.float32),
    }
    x = jax.random.normal(k[4], (N, D, H, W, Cin), jnp.float32)

    out = jax.jit(res_context_block)(x, params)
    out = jax.block_until_ready(out)

    ref = jax.block_until_ready(_ref_block(x, params))
    np.testing.assert_allclose(np.asarray(out), np.asarray(ref), rtol=1e-3, atol=1e-3)

    print("KERNEL_OK")
</pallas_src>

<mosaic_0001>
module attributes {stable_mosaic.version = 11 : i64} {
  func.func @kernel(%arg0: i32, %arg1: memref<8x16x64xf32, #tpu.memory_space<vmem>>, %arg2: memref<3x64x128xf32, #tpu.memory_space<vmem>>, %arg3: memref<1x64xf32, #tpu.memory_space<vmem>>, %arg4: memref<1x64xf32, #tpu.memory_space<vmem>>, %arg5: memref<8x16x128xf32, #tpu.memory_space<vmem>>, %arg6: memref<1x1x128xf32, #tpu.memory_space<vmem>>, %arg7: memref<1x1x128xf32, #tpu.memory_space<vmem>>) attributes {dimension_semantics = [#tpu.dimension_semantics<parallel>], iteration_bounds = array<i64: 2>, scalar_prefetch = 0 : i64, scratch_operands = 0 : i64, tpu.core_type = #tpu.core_type<tc>, window_params = [{transform_indices = @transform_0, window_bounds = array<i64: 8, 16, 64>}, {pipeline_mode = #tpu.pipeline_mode<synchronous>, transform_indices = @transform_1, window_bounds = array<i64: 3, 64, 128>}, {pipeline_mode = #tpu.pipeline_mode<synchronous>, transform_indices = @transform_2, window_bounds = array<i64: 1, 64>}, {pipeline_mode = #tpu.pipeline_mode<synchronous>, transform_indices = @transform_3, window_bounds = array<i64: 1, 64>}, {transform_indices = @transform_4, window_bounds = array<i64: 8, 16, 128>}, {transform_indices = @transform_5, window_bounds = array<i64: 1, 1, 128>}, {transform_indices = @transform_6, window_bounds = array<i64: 1, 1, 128>}]} {
    %c0 = arith.constant 0 : index
    %c0_0 = arith.constant 0 : index
    %0 = vector.load %arg3[%c0, %c0_0] : memref<1x64xf32, #tpu.memory_space<vmem>>, vector<1x64xf32>
    %c0_1 = arith.constant 0 : index
    %c0_2 = arith.constant 0 : index
    %1 = vector.load %arg4[%c0_1, %c0_2] : memref<1x64xf32, #tpu.memory_space<vmem>>, vector<1x64xf32>
    %2 = tpu.iota {dimensions = array<i32: 0>} : vector<16x1xi32>
    %cst = arith.constant 0.000000e+00 : f32
    %3 = vector.broadcast %cst : f32 to vector<1x128xf32>
    %c0_i32 = arith.constant 0 : i32
    %c8_i32 = arith.constant 8 : i32
    %4 = arith.addi %c0_i32, %c8_i32 : i32
    %c1_i32 = arith.constant 1 : i32
    %5:2 = scf.for %arg8 = %c0_i32 to %4 step %c1_i32 iter_args(%arg9 = %3, %arg10 = %3) -> (vector<1x128xf32>, vector<1x128xf32>)  : i32 {
      %12 = arith.index_cast %arg8 : i32 to index
      %c0_10 = arith.constant 0 : index
      %c0_11 = arith.constant 0 : index
      %13 = vector.load %arg1[%12, %c0_10, %c0_11] : memref<8x16x64xf32, #tpu.memory_space<vmem>>, vector<1x16x64xf32>
      %14 = vector.shape_cast %13 : vector<1x16x64xf32> to vector<16x64xf32>
      %15 = vector.broadcast %0 : vector<1x64xf32> to vector<16x64xf32>
      %16 = arith.mulf %14, %15 : vector<16x64xf32>
      %17 = vector.broadcast %1 : vector<1x64xf32> to vector<16x64xf32>
      %18 = arith.addf %16, %17 : vector<16x64xf32>
      %c1_i32_12 = arith.constant 1 : i32
      %19 = vector.broadcast %c1_i32_12 : i32 to vector<16x1xi32>
      %20 = arith.cmpi sge, %2, %19 : vector<16x1xi32>
      %c1_i32_13 = arith.constant 1 : i32
      %21 = tpu.dynamic_rotate %18 by %c1_i32_13 dim 0 : vector<16x64xf32>, i32 -> vector<16x64xf32>
      %cst_14 = arith.constant 0.000000e+00 : f32
      %22 = vector.shape_cast %20 : vector<16x1xi1> to vector<16x1xi1>
      %23 = vector.broadcast %22 : vector<16x1xi1> to vector<16x64xi1>
      %24 = vector.broadcast %cst_14 : f32 to vector<16x64xf32>
      %25 = arith.select %23, %21, %24 : vector<16x64xi1>, vector<16x64xf32>
      %c14_i32 = arith.constant 14 : i32
      %26 = vector.broadcast %c14_i32 : i32 to vector<16x1xi32>
      %27 = arith.cmpi sle, %2, %26 : vector<16x1xi32>
      %c15_i32 = arith.constant 15 : i32
      %28 = tpu.dynamic_rotate %18 by %c15_i32 dim 0 : vector<16x64xf32>, i32 -> vector<16x64xf32>
      %cst_15 = arith.constant 0.000000e+00 : f32
      %29 = vector.shape_cast %27 : vector<16x1xi1> to vector<16x1xi1>
      %30 = vector.broadcast %29 : vector<16x1xi1> to vector<16x64xi1>
      %31 = vector.broadcast %cst_15 : f32 to vector<16x64xf32>
      %32 = arith.select %30, %28, %31 : vector<16x64xi1>, vector<16x64xf32>
      %c0_16 = arith.constant 0 : index
      %c0_17 = arith.constant 0 : index
      %c0_18 = arith.constant 0 : index
      %33 = vector.load %arg2[%c0_16, %c0_17, %c0_18] : memref<3x64x128xf32, #tpu.memory_space<vmem>>, vector<1x64x128xf32>
      %34 = vector.shape_cast %33 : vector<1x64x128xf32> to vector<64x128xf32>
      %cst_19 = arith.constant dense<0.000000e+00> : vector<16x128xf32>
      %35 = tpu.matmul %25, %34, %cst_19 {dimension_numbers = #tpu.dot_dimension_numbers<[1], [0], [0], [1], [0, 0, 1, 1], [], []>} : vector<16x64xf32>, vector<64x128xf32>, vector<16x128xf32> -> vector<16x128xf32>
      %c1 = arith.constant 1 : index
      %c0_20 = arith.constant 0 : index
      %c0_21 = arith.constant 0 : index
      %36 = vector.load %arg2[%c1, %c0_20, %c0_21] : memref<3x64x128xf32, #tpu.memory_space<vmem>>, vector<1x64x128xf32>
      %37 = vector.shape_cast %36 : vector<1x64x128xf32> to vector<64x128xf32>
      %cst_22 = arith.constant dense<0.000000e+00> : vector<16x128xf32>
      %38 = tpu.matmul %18, %37, %cst_22 {dimension_numbers = #tpu.dot_dimension_numbers<[1], [0], [0], [1], [0, 0, 1, 1], [], []>} : vector<16x64xf32>, vector<64x128xf32>, vector<16x128xf32> -> vector<16x128xf32>
      %39 = arith.addf %35, %38 : vector<16x128xf32>
      %c2 = arith.constant 2 : index
      %c0_23 = arith.constant 0 : index
      %c0_24 = arith.constant 0 : index
      %40 = vector.load %arg2[%c2, %c0_23, %c0_24] : memref<3x64x128xf32, #tpu.memory_space<vmem>>, vector<1x64x128xf32>
      %41 = vector.shape_cast %40 : vector<1x64x128xf32> to vector<64x128xf32>
      %cst_25 = arith.constant dense<0.000000e+00> : vector<16x128xf32>
      %42 = tpu.matmul %32, %41, %cst_25 {dimension_numbers = #tpu.dot_dimension_numbers<[1], [0], [0], [1], [0, 0, 1, 1], [], []>} : vector<16x64xf32>, vector<64x128xf32>, vector<16x128xf32> -> vector<16x128xf32>
      %43 = arith.addf %39, %42 : vector<16x128xf32>
      %cst_26 = arith.constant 0.000000e+00 : f32
      %44 = vector.broadcast %cst_26 : f32 to vector<16x128xf32>
      %45 = arith.cmpf oge, %43, %44 : vector<16x128xf32>
      %cst_27 = arith.constant 0.00999999977 : f32
      %46 = vector.broadcast %cst_27 : f32 to vector<16x128xf32>
      %47 = arith.mulf %46, %43 : vector<16x128xf32>
      %48 = arith.select %45, %43, %47 : vector<16x128xi1>, vector<16x128xf32>
      %49 = arith.index_cast %arg8 : i32 to index
      %c0_28 = arith.constant 0 : index
      %c0_29 = arith.constant 0 : index
      %50 = vector.load %arg5[%49, %c0_28, %c0_29] : memref<8x16x128xf32, #tpu.memory_space<vmem>>, vector<1x16x128xf32>
      %51 = vector.shape_cast %50 : vector<1x16x128xf32> to vector<16x128xf32>
      %52 = vector.shape_cast %48 : vector<16x128xf32> to vector<1x16x128xf32>
      tpu.vector_store %arg5[%49, %c0_28, %c0_29], %52 {strides = array<i32>} : memref<8x16x128xf32, #tpu.memory_space<vmem>>, vector<1x16x128xf32>,
      %cst_30 = arith.constant dense<0.000000e+00> : vector<128xf32>
      %53 = vector.multi_reduction <add>, %48, %cst_30 [0] : vector<16x128xf32> to vector<128xf32>
      %54 = vector.shape_cast %53 : vector<128xf32> to vector<1x128xf32>
      %55 = arith.addf %arg9, %54 : vector<1x128xf32>
      %56 = arith.mulf %48, %48 : vector<16x128xf32>
      %cst_31 = arith.constant dense<0.000000e+00> : vector<128xf32>
      %57 = vector.multi_reduction <add>, %56, %cst_31 [0] : vector<16x128xf32> to vector<128xf32>
      %58 = vector.shape_cast %57 : vector<128xf32> to vector<1x128xf32>
      %59 = arith.addf %arg10, %58 : vector<1x128xf32>
      scf.yield %55, %59 : vector<1x128xf32>, vector<1x128xf32>
    }
    %c8_i32_3 = arith.constant 8 : i32
    %c0_4 = arith.constant 0 : index
    %c0_5 = arith.constant 0 : index
    %c0_6 = arith.constant 0 : index
    %6 = vector.load %arg6[%c0_4, %c0_5, %c0_6] : memref<1x1x128xf32, #tpu.memory_space<vmem>>, vector<1x1x128xf32>
    %7 = vector.shape_cast %6 : vector<1x1x128xf32> to vector<1x128xf32>
    %8 = vector.shape_cast %5#0 : vector<1x128xf32> to vector<1x1x128xf32>
    tpu.vector_store %arg6[%c0_4, %c0_5, %c0_6], %8 {strides = array<i32>} : memref<1x1x128xf32, #tpu.memory_space<vmem>>, vector<1x1x128xf32>,
    %c0_7 = arith.constant 0 : index
    %c0_8 = arith.constant 0 : index
    %c0_9 = arith.constant 0 : index
    %9 = vector.load %arg7[%c0_7, %c0_8, %c0_9] : memref<1x1x128xf32, #tpu.memory_space<vmem>>, vector<1x1x128xf32>
    %10 = vector.shape_cast %9 : vector<1x1x128xf32> to vector<1x128xf32>
    %11 = vector.shape_cast %5#1 : vector<1x128xf32> to vector<1x1x128xf32>
    tpu.vector_store %arg7[%c0_7, %c0_8, %c0_9], %11 {strides = array<i32>} : memref<1x1x128xf32, #tpu.memory_space<vmem>>, vector<1x1x128xf32>,
    return
  }
  func.func @transform_0(%arg0: i32) -> (i32, i32, i32) {
    %c0_i32 = arith.constant 0 : i32
    %c0_i32_0 = arith.constant 0 : i32
    %c0_i32_1 = arith.constant 0 : i32
    return %arg0, %c0_i32, %c0_i32_0 : i32, i32, i32
  }
  func.func @transform_1(%arg0: i32) -> (i32, i32, i32) {
    %c0_i32 = arith.constant 0 : i32
    %c0_i32_0 = arith.constant 0 : i32
    %c0_i32_1 = arith.constant 0 : i32
    %c0_i32_2 = arith.constant 0 : i32
    return %c0_i32, %c0_i32_0, %c0_i32_1 : i32, i32, i32
  }
  func.func @transform_2(%arg0: i32) -> (i32, i32) {
    %c0_i32 = arith.constant 0 : i32
    %c0_i32_0 = arith.constant 0 : i32
    %c0_i32_1 = arith.constant 0 : i32
    return %c0_i32, %c0_i32_0 : i32, i32
  }
  func.func @transform_3(%arg0: i32) -> (i32, i32) {
    %c0_i32 = arith.constant 0 : i32
    %c0_i32_0 = arith.constant 0 : i32
    %c0_i32_1 = arith.constant 0 : i32
    return %c0_i32, %c0_i32_0 : i32, i32
  }
  func.func @transform_4(%arg0: i32) -> (i32, i32, i32) {
    %c0_i32 = arith.constant 0 : i32
    %c0_i32_0 = arith.constant 0 : i32
    %c0_i32_1 = arith.constant 0 : i32
    return %arg0, %c0_i32, %c0_i32_0 : i32, i32, i32
  }
  func.func @transform_5(%arg0: i32) -> (i32, i32, i32) {
    %c0_i32 = arith.constant 0 : i32
    %c0_i32_0 = arith.constant 0 : i32
    %c0_i32_1 = arith.constant 0 : i32
    return %arg0, %c0_i32, %c0_i32_0 : i32, i32, i32
  }
  func.func @transform_6(%arg0: i32) -> (i32, i32, i32) {
    %c0_i32 = arith.constant 0 : i32
    %c0_i32_0 = arith.constant 0 : i32
    %c0_i32_1 = arith.constant 0 : i32
    return %arg0, %c0_i32, %c0_i32_0 : i32, i32, i32
  }
}

module attributes {stable_mosaic.version = 11 : i64} {
  func.func @kernel(%arg0: i32, %arg1: memref<16x8x64xf32, #tpu.memory_space<vmem>>, %arg2: memref<3x64x128xf32, #tpu.memory_space<vmem>>, %arg3: memref<1x64xf32, #tpu.memory_space<vmem>>, %arg4: memref<1x64xf32, #tpu.memory_space<vmem>>, %arg5: memref<16x8x128xf32, #tpu.memory_space<vmem>>, %arg6: memref<1x1x128xf32, #tpu.memory_space<vmem>>, %arg7: memref<1x1x128xf32, #tpu.memory_space<vmem>>) attributes {dimension_semantics = [#tpu.dimension_semantics<parallel>], iteration_bounds = array<i64: 2>, scalar_prefetch = 0 : i64, scratch_operands = 0 : i64, tpu.core_type = #tpu.core_type<tc>, window_params = [{transform_indices = @transform_0, window_bounds = array<i64: 16, 8, 64>}, {pipeline_mode = #tpu.pipeline_mode<synchronous>, transform_indices = @transform_1, window_bounds = array<i64: 3, 64, 128>}, {pipeline_mode = #tpu.pipeline_mode<synchronous>, transform_indices = @transform_2, window_bounds = array<i64: 1, 64>}, {pipeline_mode = #tpu.pipeline_mode<synchronous>, transform_indices = @transform_3, window_bounds = array<i64: 1, 64>}, {transform_indices = @transform_4, window_bounds = array<i64: 16, 8, 128>}, {transform_indices = @transform_5, window_bounds = array<i64: 1, 1, 128>}, {transform_indices = @transform_6, window_bounds = array<i64: 1, 1, 128>}]} {
    %c0 = arith.constant 0 : index
    %c0_0 = arith.constant 0 : index
    %0 = vector.load %arg3[%c0, %c0_0] : memref<1x64xf32, #tpu.memory_space<vmem>>, vector<1x64xf32>
    %c0_1 = arith.constant 0 : index
    %c0_2 = arith.constant 0 : index
    %1 = vector.load %arg4[%c0_1, %c0_2] : memref<1x64xf32, #tpu.memory_space<vmem>>, vector<1x64xf32>
    %2 = tpu.iota {dimensions = array<i32: 0>} : vector<8x1xi32>
    %cst = arith.constant 0.000000e+00 : f32
    %3 = vector.broadcast %cst : f32 to vector<1x128xf32>
    %c0_i32 = arith.constant 0 : i32
    %c16_i32 = arith.constant 16 : i32
    %4 = arith.addi %c0_i32, %c16_i32 : i32
    %c1_i32 = arith.constant 1 : i32
    %5:2 = scf.for %arg8 = %c0_i32 to %4 step %c1_i32 iter_args(%arg9 = %3, %arg10 = %3) -> (vector<1x128xf32>, vector<1x128xf32>)  : i32 {
      %12 = arith.index_cast %arg8 : i32 to index
      %c0_10 = arith.constant 0 : index
      %c0_11 = arith.constant 0 : index
      %13 = vector.load %arg1[%12, %c0_10, %c0_11] : memref<16x8x64xf32, #tpu.memory_space<vmem>>, vector<1x8x64xf32>
      %14 = vector.shape_cast %13 : vector<1x8x64xf32> to vector<8x64xf32>
      %15 = vector.broadcast %0 : vector<1x64xf32> to vector<8x64xf32>
      %16 = arith.mulf %14, %15 : vector<8x64xf32>
      %17 = vector.broadcast %1 : vector<1x64xf32> to vector<8x64xf32>
      %18 = arith.addf %16, %17 : vector<8x64xf32>
      %c1_i32_12 = arith.constant 1 : i32
      %19 = vector.broadcast %c1_i32_12 : i32 to vector<8x1xi32>
      %20 = arith.cmpi sge, %2, %19 : vector<8x1xi32>
      %c1_i32_13 = arith.constant 1 : i32
      %21 = tpu.dynamic_rotate %18 by %c1_i32_13 dim 0 : vector<8x64xf32>, i32 -> vector<8x64xf32>
      %cst_14 = arith.constant 0.000000e+00 : f32
      %22 = vector.shape_cast %20 : vector<8x1xi1> to vector<8x1xi1>
      %23 = vector.broadcast %22 : vector<8x1xi1> to vector<8x64xi1>
      %24 = vector.broadcast %cst_14 : f32 to vector<8x64xf32>
      %25 = arith.select %23, %21, %24 : vector<8x64xi1>, vector<8x64xf32>
      %c6_i32 = arith.constant 6 : i32
      %26 = vector.broadcast %c6_i32 : i32 to vector<8x1xi32>
      %27 = arith.cmpi sle, %2, %26 : vector<8x1xi32>
      %c7_i32 = arith.constant 7 : i32
      %28 = tpu.dynamic_rotate %18 by %c7_i32 dim 0 : vector<8x64xf32>, i32 -> vector<8x64xf32>
      %cst_15 = arith.constant 0.000000e+00 : f32
      %29 = vector.shape_cast %27 : vector<8x1xi1> to vector<8x1xi1>
      %30 = vector.broadcast %29 : vector<8x1xi1> to vector<8x64xi1>
      %31 = vector.broadcast %cst_15 : f32 to vector<8x64xf32>
      %32 = arith.select %30, %28, %31 : vector<8x64xi1>, vector<8x64xf32>
      %c0_16 = arith.constant 0 : index
      %c0_17 = arith.constant 0 : index
      %c0_18 = arith.constant 0 : index
      %33 = vector.load %arg2[%c0_16, %c0_17, %c0_18] : memref<3x64x128xf32, #tpu.memory_space<vmem>>, vector<1x64x128xf32>
      %34 = vector.shape_cast %33 : vector<1x64x128xf32> to vector<64x128xf32>
      %cst_19 = arith.constant dense<0.000000e+00> : vector<8x128xf32>
      %35 = tpu.matmul %25, %34, %cst_19 {dimension_numbers = #tpu.dot_dimension_numbers<[1], [0], [0], [1], [0, 0, 1, 1], [], []>} : vector<8x64xf32>, vector<64x128xf32>, vector<8x128xf32> -> vector<8x128xf32>
      %c1 = arith.constant 1 : index
      %c0_20 = arith.constant 0 : index
      %c0_21 = arith.constant 0 : index
      %36 = vector.load %arg2[%c1, %c0_20, %c0_21] : memref<3x64x128xf32, #tpu.memory_space<vmem>>, vector<1x64x128xf32>
      %37 = vector.shape_cast %36 : vector<1x64x128xf32> to vector<64x128xf32>
      %cst_22 = arith.constant dense<0.000000e+00> : vector<8x128xf32>
      %38 = tpu.matmul %18, %37, %cst_22 {dimension_numbers = #tpu.dot_dimension_numbers<[1], [0], [0], [1], [0, 0, 1, 1], [], []>} : vector<8x64xf32>, vector<64x128xf32>, vector<8x128xf32> -> vector<8x128xf32>
      %39 = arith.addf %35, %38 : vector<8x128xf32>
      %c2 = arith.constant 2 : index
      %c0_23 = arith.constant 0 : index
      %c0_24 = arith.constant 0 : index
      %40 = vector.load %arg2[%c2, %c0_23, %c0_24] : memref<3x64x128xf32, #tpu.memory_space<vmem>>, vector<1x64x128xf32>
      %41 = vector.shape_cast %40 : vector<1x64x128xf32> to vector<64x128xf32>
      %cst_25 = arith.constant dense<0.000000e+00> : vector<8x128xf32>
      %42 = tpu.matmul %32, %41, %cst_25 {dimension_numbers = #tpu.dot_dimension_numbers<[1], [0], [0], [1], [0, 0, 1, 1], [], []>} : vector<8x64xf32>, vector<64x128xf32>, vector<8x128xf32> -> vector<8x128xf32>
      %43 = arith.addf %39, %42 : vector<8x128xf32>
      %cst_26 = arith.constant 0.000000e+00 : f32
      %44 = vector.broadcast %cst_26 : f32 to vector<8x128xf32>
      %45 = arith.cmpf oge, %43, %44 : vector<8x128xf32>
      %cst_27 = arith.constant 0.00999999977 : f32
      %46 = vector.broadcast %cst_27 : f32 to vector<8x128xf32>
      %47 = arith.mulf %46, %43 : vector<8x128xf32>
      %48 = arith.select %45, %43, %47 : vector<8x128xi1>, vector<8x128xf32>
      %49 = arith.index_cast %arg8 : i32 to index
      %c0_28 = arith.constant 0 : index
      %c0_29 = arith.constant 0 : index
      %50 = vector.load %arg5[%49, %c0_28, %c0_29] : memref<16x8x128xf32, #tpu.memory_space<vmem>>, vector<1x8x128xf32>
      %51 = vector.shape_cast %50 : vector<1x8x128xf32> to vector<8x128xf32>
      %52 = vector.shape_cast %48 : vector<8x128xf32> to vector<1x8x128xf32>
      tpu.vector_store %arg5[%49, %c0_28, %c0_29], %52 {strides = array<i32>} : memref<16x8x128xf32, #tpu.memory_space<vmem>>, vector<1x8x128xf32>,
      %cst_30 = arith.constant dense<0.000000e+00> : vector<128xf32>
      %53 = vector.multi_reduction <add>, %48, %cst_30 [0] : vector<8x128xf32> to vector<128xf32>
      %54 = vector.shape_cast %53 : vector<128xf32> to vector<1x128xf32>
      %55 = arith.addf %arg9, %54 : vector<1x128xf32>
      %56 = arith.mulf %48, %48 : vector<8x128xf32>
      %cst_31 = arith.constant dense<0.000000e+00> : vector<128xf32>
      %57 = vector.multi_reduction <add>, %56, %cst_31 [0] : vector<8x128xf32> to vector<128xf32>
      %58 = vector.shape_cast %57 : vector<128xf32> to vector<1x128xf32>
      %59 = arith.addf %arg10, %58 : vector<1x128xf32>
      scf.yield %55, %59 : vector<1x128xf32>, vector<1x128xf32>
    }
    %c16_i32_3 = arith.constant 16 : i32
    %c0_4 = arith.constant 0 : index
    %c0_5 = arith.constant 0 : index
    %c0_6 = arith.constant 0 : index
    %6 = vector.load %arg6[%c0_4, %c0_5, %c0_6] : memref<1x1x128xf32, #tpu.memory_space<vmem>>, vector<1x1x128xf32>
    %7 = vector.shape_cast %6 : vector<1x1x128xf32> to vector<1x128xf32>
    %8 = vector.shape_cast %5#0 : vector<1x128xf32> to vector<1x1x128xf32>
    tpu.vector_store %arg6[%c0_4, %c0_5, %c0_6], %8 {strides = array<i32>} : memref<1x1x128xf32, #tpu.memory_space<vmem>>, vector<1x1x128xf32>,
    %c0_7 = arith.constant 0 : index
    %c0_8 = arith.constant 0 : index
    %c0_9 = arith.constant 0 : index
    %9 = vector.load %arg7[%c0_7, %c0_8, %c0_9] : memref<1x1x128xf32, #tpu.memory_space<vmem>>, vector<1x1x128xf32>
    %10 = vector.shape_cast %9 : vector<1x1x128xf32> to vector<1x128xf32>
    %11 = vector.shape_cast %5#1 : vector<1x128xf32> to vector<1x1x128xf32>
    tpu.vector_store %arg7[%c0_7, %c0_8, %c0_9], %11 {strides = array<i32>} : memref<1x1x128xf32, #tpu.memory_space<vmem>>, vector<1x1x128xf32>,
    return
  }
  func.func @transform_0(%arg0: i32) -> (i32, i32, i32) {
    %c0_i32 = arith.constant 0 : i32
    %c0_i32_0 = arith.constant 0 : i32
    %c0_i32_1 = arith.constant 0 : i32
    return %arg0, %c0_i32, %c0_i32_0 : i32, i32, i32
  }
  func.func @transform_1(%arg0: i32) -> (i32, i32, i32) {
    %c0_i32 = arith.constant 0 : i32
    %c0_i32_0 = arith.constant 0 : i32
    %c0_i32_1 = arith.constant 0 : i32
    %c0_i32_2 = arith.constant 0 : i32
    return %c0_i32, %c0_i32_0, %c0_i32_1 : i32, i32, i32
  }
  func.func @transform_2(%arg0: i32) -> (i32, i32) {
    %c0_i32 = arith.constant 0 : i32
    %c0_i32_0 = arith.constant 0 : i32
    %c0_i32_1 = arith.constant 0 : i32
    return %c0_i32, %c0_i32_0 : i32, i32
  }
  func.func @transform_3(%arg0: i32) -> (i32, i32) {
    %c0_i32 = arith.constant 0 : i32
    %c0_i32_0 = arith.constant 0 : i32
    %c0_i32_1 = arith.constant 0 : i32
    return %c0_i32, %c0_i32_0 : i32, i32
  }
  func.func @transform_4(%arg0: i32) -> (i32, i32, i32) {
    %c0_i32 = arith.constant 0 : i32
    %c0_i32_0 = arith.constant 0 : i32
    %c0_i32_1 = arith.constant 0 : i32
    return %arg0, %c0_i32, %c0_i32_0 : i32, i32, i32
  }
  func.func @transform_5(%arg0: i32) -> (i32, i32, i32) {
    %c0_i32 = arith.constant 0 : i32
    %c0_i32_0 = arith.constant 0 : i32
    %c0_i32_1 = arith.constant 0 : i32
    return %arg0, %c0_i32, %c0_i32_0 : i32, i32, i32
  }
  func.func @transform_6(%arg0: i32) -> (i32, i32, i32) {
    %c0_i32 = arith.constant 0 : i32
    %c0_i32_0 = arith.constant 0 : i32
    %c0_i32_1 = arith.constant 0 : i32
    return %arg0, %c0_i32, %c0_i32_0 : i32, i32, i32
  }
}

module attributes {stable_mosaic.version = 11 : i64} {
  func.func @kernel(%arg0: i32, %arg1: memref<8x16x128xf32, #tpu.memory_space<vmem>>, %arg2: memref<3x128x128xf32, #tpu.memory_space<vmem>>, %arg3: memref<1x128xf32, #tpu.memory_space<vmem>>, %arg4: memref<1x128xf32, #tpu.memory_space<vmem>>, %arg5: memref<8x16x128xf32, #tpu.memory_space<vmem>>, %arg6: memref<1x1x128xf32, #tpu.memory_space<vmem>>, %arg7: memref<1x1x128xf32, #tpu.memory_space<vmem>>) attributes {dimension_semantics = [#tpu.dimension_semantics<parallel>], iteration_bounds = array<i64: 2>, scalar_prefetch = 0 : i64, scratch_operands = 0 : i64, tpu.core_type = #tpu.core_type<tc>, window_params = [{transform_indices = @transform_0, window_bounds = array<i64: 8, 16, 128>}, {pipeline_mode = #tpu.pipeline_mode<synchronous>, transform_indices = @transform_1, window_bounds = array<i64: 3, 128, 128>}, {pipeline_mode = #tpu.pipeline_mode<synchronous>, transform_indices = @transform_2, window_bounds = array<i64: 1, 128>}, {pipeline_mode = #tpu.pipeline_mode<synchronous>, transform_indices = @transform_3, window_bounds = array<i64: 1, 128>}, {transform_indices = @transform_4, window_bounds = array<i64: 8, 16, 128>}, {transform_indices = @transform_5, window_bounds = array<i64: 1, 1, 128>}, {transform_indices = @transform_6, window_bounds = array<i64: 1, 1, 128>}]} {
    %c0 = arith.constant 0 : index
    %c0_0 = arith.constant 0 : index
    %0 = vector.load %arg3[%c0, %c0_0] : memref<1x128xf32, #tpu.memory_space<vmem>>, vector<1x128xf32>
    %c0_1 = arith.constant 0 : index
    %c0_2 = arith.constant 0 : index
    %1 = vector.load %arg4[%c0_1, %c0_2] : memref<1x128xf32, #tpu.memory_space<vmem>>, vector<1x128xf32>
    %2 = tpu.iota {dimensions = array<i32: 0>} : vector<16x1xi32>
    %cst = arith.constant 0.000000e+00 : f32
    %3 = vector.broadcast %cst : f32 to vector<1x128xf32>
    %c0_i32 = arith.constant 0 : i32
    %c8_i32 = arith.constant 8 : i32
    %4 = arith.addi %c0_i32, %c8_i32 : i32
    %c1_i32 = arith.constant 1 : i32
    %5:2 = scf.for %arg8 = %c0_i32 to %4 step %c1_i32 iter_args(%arg9 = %3, %arg10 = %3) -> (vector<1x128xf32>, vector<1x128xf32>)  : i32 {
      %12 = arith.index_cast %arg8 : i32 to index
      %c0_10 = arith.constant 0 : index
      %c0_11 = arith.constant 0 : index
      %13 = vector.load %arg1[%12, %c0_10, %c0_11] : memref<8x16x128xf32, #tpu.memory_space<vmem>>, vector<1x16x128xf32>
      %14 = vector.shape_cast %13 : vector<1x16x128xf32> to vector<16x128xf32>
      %15 = vector.broadcast %0 : vector<1x128xf32> to vector<16x128xf32>
      %16 = arith.mulf %14, %15 : vector<16x128xf32>
      %17 = vector.broadcast %1 : vector<1x128xf32> to vector<16x128xf32>
      %18 = arith.addf %16, %17 : vector<16x128xf32>
      %c1_i32_12 = arith.constant 1 : i32
      %19 = vector.broadcast %c1_i32_12 : i32 to vector<16x1xi32>
      %20 = arith.cmpi sge, %2, %19 : vector<16x1xi32>
      %c1_i32_13 = arith.constant 1 : i32
      %21 = tpu.dynamic_rotate %18 by %c1_i32_13 dim 0 : vector<16x128xf32>, i32 -> vector<16x128xf32>
      %cst_14 = arith.constant 0.000000e+00 : f32
      %22 = vector.shape_cast %20 : vector<16x1xi1> to vector<16x1xi1>
      %23 = vector.broadcast %22 : vector<16x1xi1> to vector<16x128xi1>
      %24 = vector.broadcast %cst_14 : f32 to vector<16x128xf32>
      %25 = arith.select %23, %21, %24 : vector<16x128xi1>, vector<16x128xf32>
      %c14_i32 = arith.constant 14 : i32
      %26 = vector.broadcast %c14_i32 : i32 to vector<16x1xi32>
      %27 = arith.cmpi sle, %2, %26 : vector<16x1xi32>
      %c15_i32 = arith.constant 15 : i32
      %28 = tpu.dynamic_rotate %18 by %c15_i32 dim 0 : vector<16x128xf32>, i32 -> vector<16x128xf32>
      %cst_15 = arith.constant 0.000000e+00 : f32
      %29 = vector.shape_cast %27 : vector<16x1xi1> to vector<16x1xi1>
      %30 = vector.broadcast %29 : vector<16x1xi1> to vector<16x128xi1>
      %31 = vector.broadcast %cst_15 : f32 to vector<16x128xf32>
      %32 = arith.select %30, %28, %31 : vector<16x128xi1>, vector<16x128xf32>
      %c0_16 = arith.constant 0 : index
      %c0_17 = arith.constant 0 : index
      %c0_18 = arith.constant 0 : index
      %33 = vector.load %arg2[%c0_16, %c0_17, %c0_18] : memref<3x128x128xf32, #tpu.memory_space<vmem>>, vector<1x128x128xf32>
      %34 = vector.shape_cast %33 : vector<1x128x128xf32> to vector<128x128xf32>
      %cst_19 = arith.constant dense<0.000000e+00> : vector<16x128xf32>
      %35 = tpu.matmul %25, %34, %cst_19 {dimension_numbers = #tpu.dot_dimension_numbers<[1], [0], [0], [1], [0, 0, 1, 1], [], []>} : vector<16x128xf32>, vector<128x128xf32>, vector<16x128xf32> -> vector<16x128xf32>
      %c1 = arith.constant 1 : index
      %c0_20 = arith.constant 0 : index
      %c0_21 = arith.constant 0 : index
      %36 = vector.load %arg2[%c1, %c0_20, %c0_21] : memref<3x128x128xf32, #tpu.memory_space<vmem>>, vector<1x128x128xf32>
      %37 = vector.shape_cast %36 : vector<1x128x128xf32> to vector<128x128xf32>
      %cst_22 = arith.constant dense<0.000000e+00> : vector<16x128xf32>
      %38 = tpu.matmul %18, %37, %cst_22 {dimension_numbers = #tpu.dot_dimension_numbers<[1], [0], [0], [1], [0, 0, 1, 1], [], []>} : vector<16x128xf32>, vector<128x128xf32>, vector<16x128xf32> -> vector<16x128xf32>
      %39 = arith.addf %35, %38 : vector<16x128xf32>
      %c2 = arith.constant 2 : index
      %c0_23 = arith.constant 0 : index
      %c0_24 = arith.constant 0 : index
      %40 = vector.load %arg2[%c2, %c0_23, %c0_24] : memref<3x128x128xf32, #tpu.memory_space<vmem>>, vector<1x128x128xf32>
      %41 = vector.shape_cast %40 : vector<1x128x128xf32> to vector<128x128xf32>
      %cst_25 = arith.constant dense<0.000000e+00> : vector<16x128xf32>
      %42 = tpu.matmul %32, %41, %cst_25 {dimension_numbers = #tpu.dot_dimension_numbers<[1], [0], [0], [1], [0, 0, 1, 1], [], []>} : vector<16x128xf32>, vector<128x128xf32>, vector<16x128xf32> -> vector<16x128xf32>
      %43 = arith.addf %39, %42 : vector<16x128xf32>
      %cst_26 = arith.constant 0.000000e+00 : f32
      %44 = vector.broadcast %cst_26 : f32 to vector<16x128xf32>
      %45 = arith.cmpf oge, %43, %44 : vector<16x128xf32>
      %cst_27 = arith.constant 0.00999999977 : f32
      %46 = vector.broadcast %cst_27 : f32 to vector<16x128xf32>
      %47 = arith.mulf %46, %43 : vector<16x128xf32>
      %48 = arith.select %45, %43, %47 : vector<16x128xi1>, vector<16x128xf32>
      %49 = arith.index_cast %arg8 : i32 to index
      %c0_28 = arith.constant 0 : index
      %c0_29 = arith.constant 0 : index
      %50 = vector.load %arg5[%49, %c0_28, %c0_29] : memref<8x16x128xf32, #tpu.memory_space<vmem>>, vector<1x16x128xf32>
      %51 = vector.shape_cast %50 : vector<1x16x128xf32> to vector<16x128xf32>
      %52 = vector.shape_cast %48 : vector<16x128xf32> to vector<1x16x128xf32>
      tpu.vector_store %arg5[%49, %c0_28, %c0_29], %52 {strides = array<i32>} : memref<8x16x128xf32, #tpu.memory_space<vmem>>, vector<1x16x128xf32>,
      %cst_30 = arith.constant dense<0.000000e+00> : vector<128xf32>
      %53 = vector.multi_reduction <add>, %48, %cst_30 [0] : vector<16x128xf32> to vector<128xf32>
      %54 = vector.shape_cast %53 : vector<128xf32> to vector<1x128xf32>
      %55 = arith.addf %arg9, %54 : vector<1x128xf32>
      %56 = arith.mulf %48, %48 : vector<16x128xf32>
      %cst_31 = arith.constant dense<0.000000e+00> : vector<128xf32>
      %57 = vector.multi_reduction <add>, %56, %cst_31 [0] : vector<16x128xf32> to vector<128xf32>
      %58 = vector.shape_cast %57 : vector<128xf32> to vector<1x128xf32>
      %59 = arith.addf %arg10, %58 : vector<1x128xf32>
      scf.yield %55, %59 : vector<1x128xf32>, vector<1x128xf32>
    }
    %c8_i32_3 = arith.constant 8 : i32
    %c0_4 = arith.constant 0 : index
    %c0_5 = arith.constant 0 : index
    %c0_6 = arith.constant 0 : index
    %6 = vector.load %arg6[%c0_4, %c0_5, %c0_6] : memref<1x1x128xf32, #tpu.memory_space<vmem>>, vector<1x1x128xf32>
    %7 = vector.shape_cast %6 : vector<1x1x128xf32> to vector<1x128xf32>
    %8 = vector.shape_cast %5#0 : vector<1x128xf32> to vector<1x1x128xf32>
    tpu.vector_store %arg6[%c0_4, %c0_5, %c0_6], %8 {strides = array<i32>} : memref<1x1x128xf32, #tpu.memory_space<vmem>>, vector<1x1x128xf32>,
    %c0_7 = arith.constant 0 : index
    %c0_8 = arith.constant 0 : index
    %c0_9 = arith.constant 0 : index
    %9 = vector.load %arg7[%c0_7, %c0_8, %c0_9] : memref<1x1x128xf32, #tpu.memory_space<vmem>>, vector<1x1x128xf32>
    %10 = vector.shape_cast %9 : vector<1x1x128xf32> to vector<1x128xf32>
    %11 = vector.shape_cast %5#1 : vector<1x128xf32> to vector<1x1x128xf32>
    tpu.vector_store %arg7[%c0_7, %c0_8, %c0_9], %11 {strides = array<i32>} : memref<1x1x128xf32, #tpu.memory_space<vmem>>, vector<1x1x128xf32>,
    return
  }
  func.func @transform_0(%arg0: i32) -> (i32, i32, i32) {
    %c0_i32 = arith.constant 0 : i32
    %c0_i32_0 = arith.constant 0 : i32
    %c0_i32_1 = arith.constant 0 : i32
    return %arg0, %c0_i32, %c0_i32_0 : i32, i32, i32
  }
  func.func @transform_1(%arg0: i32) -> (i32, i32, i32) {
    %c0_i32 = arith.constant 0 : i32
    %c0_i32_0 = arith.constant 0 : i32
    %c0_i32_1 = arith.constant 0 : i32
    %c0_i32_2 = arith.constant 0 : i32
    return %c0_i32, %c0_i32_0, %c0_i32_1 : i32, i32, i32
  }
  func.func @transform_2(%arg0: i32) -> (i32, i32) {
    %c0_i32 = arith.constant 0 : i32
    %c0_i32_0 = arith.constant 0 : i32
    %c0_i32_1 = arith.constant 0 : i32
    return %c0_i32, %c0_i32_0 : i32, i32
  }
  func.func @transform_3(%arg0: i32) -> (i32, i32) {
    %c0_i32 = arith.constant 0 : i32
    %c0_i32_0 = arith.constant 0 : i32
    %c0_i32_1 = arith.constant 0 : i32
    return %c0_i32, %c0_i32_0 : i32, i32
  }
  func.func @transform_4(%arg0: i32) -> (i32, i32, i32) {
    %c0_i32 = arith.constant 0 : i32
    %c0_i32_0 = arith.constant 0 : i32
    %c0_i32_1 = arith.constant 0 : i32
    return %arg0, %c0_i32, %c0_i32_0 : i32, i32, i32
  }
  func.func @transform_5(%arg0: i32) -> (i32, i32, i32) {
    %c0_i32 = arith.constant 0 : i32
    %c0_i32_0 = arith.constant 0 : i32
    %c0_i32_1 = arith.constant 0 : i32
    return %arg0, %c0_i32, %c0_i32_0 : i32, i32, i32
  }
  func.func @transform_6(%arg0: i32) -> (i32, i32, i32) {
    %c0_i32 = arith.constant 0 : i32
    %c0_i32_0 = arith.constant 0 : i32
    %c0_i32_1 = arith.constant 0 : i32
    return %arg0, %c0_i32, %c0_i32_0 : i32, i32, i32
  }
}

module attributes {stable_mosaic.version = 11 : i64} {
  func.func @kernel(%arg0: i32, %arg1: memref<16x8x128xf32, #tpu.memory_space<vmem>>, %arg2: memref<3x128x128xf32, #tpu.memory_space<vmem>>, %arg3: memref<1x128xf32, #tpu.memory_space<vmem>>, %arg4: memref<1x128xf32, #tpu.memory_space<vmem>>, %arg5: memref<16x8x128xf32, #tpu.memory_space<vmem>>, %arg6: memref<1x1x128xf32, #tpu.memory_space<vmem>>, %arg7: memref<1x1x128xf32, #tpu.memory_space<vmem>>) attributes {dimension_semantics = [#tpu.dimension_semantics<parallel>], iteration_bounds = array<i64: 2>, scalar_prefetch = 0 : i64, scratch_operands = 0 : i64, tpu.core_type = #tpu.core_type<tc>, window_params = [{transform_indices = @transform_0, window_bounds = array<i64: 16, 8, 128>}, {pipeline_mode = #tpu.pipeline_mode<synchronous>, transform_indices = @transform_1, window_bounds = array<i64: 3, 128, 128>}, {pipeline_mode = #tpu.pipeline_mode<synchronous>, transform_indices = @transform_2, window_bounds = array<i64: 1, 128>}, {pipeline_mode = #tpu.pipeline_mode<synchronous>, transform_indices = @transform_3, window_bounds = array<i64: 1, 128>}, {transform_indices = @transform_4, window_bounds = array<i64: 16, 8, 128>}, {transform_indices = @transform_5, window_bounds = array<i64: 1, 1, 128>}, {transform_indices = @transform_6, window_bounds = array<i64: 1, 1, 128>}]} {
    %c0 = arith.constant 0 : index
    %c0_0 = arith.constant 0 : index
    %0 = vector.load %arg3[%c0, %c0_0] : memref<1x128xf32, #tpu.memory_space<vmem>>, vector<1x128xf32>
    %c0_1 = arith.constant 0 : index
    %c0_2 = arith.constant 0 : index
    %1 = vector.load %arg4[%c0_1, %c0_2] : memref<1x128xf32, #tpu.memory_space<vmem>>, vector<1x128xf32>
    %2 = tpu.iota {dimensions = array<i32: 0>} : vector<8x1xi32>
    %cst = arith.constant 0.000000e+00 : f32
    %3 = vector.broadcast %cst : f32 to vector<1x128xf32>
    %c0_i32 = arith.constant 0 : i32
    %c16_i32 = arith.constant 16 : i32
    %4 = arith.addi %c0_i32, %c16_i32 : i32
    %c1_i32 = arith.constant 1 : i32
    %5:2 = scf.for %arg8 = %c0_i32 to %4 step %c1_i32 iter_args(%arg9 = %3, %arg10 = %3) -> (vector<1x128xf32>, vector<1x128xf32>)  : i32 {
      %12 = arith.index_cast %arg8 : i32 to index
      %c0_10 = arith.constant 0 : index
      %c0_11 = arith.constant 0 : index
      %13 = vector.load %arg1[%12, %c0_10, %c0_11] : memref<16x8x128xf32, #tpu.memory_space<vmem>>, vector<1x8x128xf32>
      %14 = vector.shape_cast %13 : vector<1x8x128xf32> to vector<8x128xf32>
      %15 = vector.broadcast %0 : vector<1x128xf32> to vector<8x128xf32>
      %16 = arith.mulf %14, %15 : vector<8x128xf32>
      %17 = vector.broadcast %1 : vector<1x128xf32> to vector<8x128xf32>
      %18 = arith.addf %16, %17 : vector<8x128xf32>
      %c1_i32_12 = arith.constant 1 : i32
      %19 = vector.broadcast %c1_i32_12 : i32 to vector<8x1xi32>
      %20 = arith.cmpi sge, %2, %19 : vector<8x1xi32>
      %c1_i32_13 = arith.constant 1 : i32
      %21 = tpu.dynamic_rotate %18 by %c1_i32_13 dim 0 : vector<8x128xf32>, i32 -> vector<8x128xf32>
      %cst_14 = arith.constant 0.000000e+00 : f32
      %22 = vector.shape_cast %20 : vector<8x1xi1> to vector<8x1xi1>
      %23 = vector.broadcast %22 : vector<8x1xi1> to vector<8x128xi1>
      %24 = vector.broadcast %cst_14 : f32 to vector<8x128xf32>
      %25 = arith.select %23, %21, %24 : vector<8x128xi1>, vector<8x128xf32>
      %c6_i32 = arith.constant 6 : i32
      %26 = vector.broadcast %c6_i32 : i32 to vector<8x1xi32>
      %27 = arith.cmpi sle, %2, %26 : vector<8x1xi32>
      %c7_i32 = arith.constant 7 : i32
      %28 = tpu.dynamic_rotate %18 by %c7_i32 dim 0 : vector<8x128xf32>, i32 -> vector<8x128xf32>
      %cst_15 = arith.constant 0.000000e+00 : f32
      %29 = vector.shape_cast %27 : vector<8x1xi1> to vector<8x1xi1>
      %30 = vector.broadcast %29 : vector<8x1xi1> to vector<8x128xi1>
      %31 = vector.broadcast %cst_15 : f32 to vector<8x128xf32>
      %32 = arith.select %30, %28, %31 : vector<8x128xi1>, vector<8x128xf32>
      %c0_16 = arith.constant 0 : index
      %c0_17 = arith.constant 0 : index
      %c0_18 = arith.constant 0 : index
      %33 = vector.load %arg2[%c0_16, %c0_17, %c0_18] : memref<3x128x128xf32, #tpu.memory_space<vmem>>, vector<1x128x128xf32>
      %34 = vector.shape_cast %33 : vector<1x128x128xf32> to vector<128x128xf32>
      %cst_19 = arith.constant dense<0.000000e+00> : vector<8x128xf32>
      %35 = tpu.matmul %25, %34, %cst_19 {dimension_numbers = #tpu.dot_dimension_numbers<[1], [0], [0], [1], [0, 0, 1, 1], [], []>} : vector<8x128xf32>, vector<128x128xf32>, vector<8x128xf32> -> vector<8x128xf32>
      %c1 = arith.constant 1 : index
      %c0_20 = arith.constant 0 : index
      %c0_21 = arith.constant 0 : index
      %36 = vector.load %arg2[%c1, %c0_20, %c0_21] : memref<3x128x128xf32, #tpu.memory_space<vmem>>, vector<1x128x128xf32>
      %37 = vector.shape_cast %36 : vector<1x128x128xf32> to vector<128x128xf32>
      %cst_22 = arith.constant dense<0.000000e+00> : vector<8x128xf32>
      %38 = tpu.matmul %18, %37, %cst_22 {dimension_numbers = #tpu.dot_dimension_numbers<[1], [0], [0], [1], [0, 0, 1, 1], [], []>} : vector<8x128xf32>, vector<128x128xf32>, vector<8x128xf32> -> vector<8x128xf32>
      %39 = arith.addf %35, %38 : vector<8x128xf32>
      %c2 = arith.constant 2 : index
      %c0_23 = arith.constant 0 : index
      %c0_24 = arith.constant 0 : index
      %40 = vector.load %arg2[%c2, %c0_23, %c0_24] : memref<3x128x128xf32, #tpu.memory_space<vmem>>, vector<1x128x128xf32>
      %41 = vector.shape_cast %40 : vector<1x128x128xf32> to vector<128x128xf32>
      %cst_25 = arith.constant dense<0.000000e+00> : vector<8x128xf32>
      %42 = tpu.matmul %32, %41, %cst_25 {dimension_numbers = #tpu.dot_dimension_numbers<[1], [0], [0], [1], [0, 0, 1, 1], [], []>} : vector<8x128xf32>, vector<128x128xf32>, vector<8x128xf32> -> vector<8x128xf32>
      %43 = arith.addf %39, %42 : vector<8x128xf32>
      %cst_26 = arith.constant 0.000000e+00 : f32
      %44 = vector.broadcast %cst_26 : f32 to vector<8x128xf32>
      %45 = arith.cmpf oge, %43, %44 : vector<8x128xf32>
      %cst_27 = arith.constant 0.00999999977 : f32
      %46 = vector.broadcast %cst_27 : f32 to vector<8x128xf32>
      %47 = arith.mulf %46, %43 : vector<8x128xf32>
      %48 = arith.select %45, %43, %47 : vector<8x128xi1>, vector<8x128xf32>
      %49 = arith.index_cast %arg8 : i32 to index
      %c0_28 = arith.constant 0 : index
      %c0_29 = arith.constant 0 : index
      %50 = vector.load %arg5[%49, %c0_28, %c0_29] : memref<16x8x128xf32, #tpu.memory_space<vmem>>, vector<1x8x128xf32>
      %51 = vector.shape_cast %50 : vector<1x8x128xf32> to vector<8x128xf32>
      %52 = vector.shape_cast %48 : vector<8x128xf32> to vector<1x8x128xf32>
      tpu.vector_store %arg5[%49, %c0_28, %c0_29], %52 {strides = array<i32>} : memref<16x8x128xf32, #tpu.memory_space<vmem>>, vector<1x8x128xf32>,
      %cst_30 = arith.constant dense<0.000000e+00> : vector<128xf32>
      %53 = vector.multi_reduction <add>, %48, %cst_30 [0] : vector<8x128xf32> to vector<128xf32>
      %54 = vector.shape_cast %53 : vector<128xf32> to vector<1x128xf32>
      %55 = arith.addf %arg9, %54 : vector<1x128xf32>
      %56 = arith.mulf %48, %48 : vector<8x128xf32>
      %cst_31 = arith.constant dense<0.000000e+00> : vector<128xf32>
      %57 = vector.multi_reduction <add>, %56, %cst_31 [0] : vector<8x128xf32> to vector<128xf32>
      %58 = vector.shape_cast %57 : vector<128xf32> to vector<1x128xf32>
      %59 = arith.addf %arg10, %58 : vector<1x128xf32>
      scf.yield %55, %59 : vector<1x128xf32>, vector<1x128xf32>
    }
    %c16_i32_3 = arith.constant 16 : i32
    %c0_4 = arith.constant 0 : index
    %c0_5 = arith.constant 0 : index
    %c0_6 = arith.constant 0 : index
    %6 = vector.load %arg6[%c0_4, %c0_5, %c0_6] : memref<1x1x128xf32, #tpu.memory_space<vmem>>, vector<1x1x128xf32>
    %7 = vector.shape_cast %6 : vector<1x1x128xf32> to vector<1x128xf32>
    %8 = vector.shape_cast %5#0 : vector<1x128xf32> to vector<1x1x128xf32>
    tpu.vector_store %arg6[%c0_4, %c0_5, %c0_6], %8 {strides = array<i32>} : memref<1x1x128xf32, #tpu.memory_space<vmem>>, vector<1x1x128xf32>,
    %c0_7 = arith.constant 0 : index
    %c0_8 = arith.constant 0 : index
    %c0_9 = arith.constant 0 : index
    %9 = vector.load %arg7[%c0_7, %c0_8, %c0_9] : memref<1x1x128xf32, #tpu.memory_space<vmem>>, vector<1x1x128xf32>
    %10 = vector.shape_cast %9 : vector<1x1x128xf32> to vector<1x128xf32>
    %11 = vector.shape_cast %5#1 : vector<1x128xf32> to vector<1x1x128xf32>
    tpu.vector_store %arg7[%c0_7, %c0_8, %c0_9], %11 {strides = array<i32>} : memref<1x1x128xf32, #tpu.memory_space<vmem>>, vector<1x1x128xf32>,
    return
  }
  func.func @transform_0(%arg0: i32) -> (i32, i32, i32) {
    %c0_i32 = arith.constant 0 : i32
    %c0_i32_0 = arith.constant 0 : i32
    %c0_i32_1 = arith.constant 0 : i32
    return %arg0, %c0_i32, %c0_i32_0 : i32, i32, i32
  }
  func.func @transform_1(%arg0: i32) -> (i32, i32, i32) {
    %c0_i32 = arith.constant 0 : i32
    %c0_i32_0 = arith.constant 0 : i32
    %c0_i32_1 = arith.constant 0 : i32
    %c0_i32_2 = arith.constant 0 : i32
    return %c0_i32, %c0_i32_0, %c0_i32_1 : i32, i32, i32
  }
  func.func @transform_2(%arg0: i32) -> (i32, i32) {
    %c0_i32 = arith.constant 0 : i32
    %c0_i32_0 = arith.constant 0 : i32
    %c0_i32_1 = arith.constant 0 : i32
    return %c0_i32, %c0_i32_0 : i32, i32
  }
  func.func @transform_3(%arg0: i32) -> (i32, i32) {
    %c0_i32 = arith.constant 0 : i32
    %c0_i32_0 = arith.constant 0 : i32
    %c0_i32_1 = arith.constant 0 : i32
    return %c0_i32, %c0_i32_0 : i32, i32
  }
  func.func @transform_4(%arg0: i32) -> (i32, i32, i32) {
    %c0_i32 = arith.constant 0 : i32
    %c0_i32_0 = arith.constant 0 : i32
    %c0_i32_1 = arith.constant 0 : i32
    return %arg0, %c0_i32, %c0_i32_0 : i32, i32, i32
  }
  func.func @transform_5(%arg0: i32) -> (i32, i32, i32) {
    %c0_i32 = arith.constant 0 : i32
    %c0_i32_0 = arith.constant 0 : i32
    %c0_i32_1 = arith.constant 0 : i32
    return %arg0, %c0_i32, %c0_i32_0 : i32, i32, i32
  }
  func.func @transform_6(%arg0: i32) -> (i32, i32, i32) {
    %c0_i32 = arith.constant 0 : i32
    %c0_i32_0 = arith.constant 0 : i32
    %c0_i32_1 = arith.constant 0 : i32
    return %arg0, %c0_i32, %c0_i32_0 : i32, i32, i32
  }
}

</mosaic_0001>

<llo_original>
// kernel: tile.43
$region0: #{tile.43}
  #allocation0 [shape = 's32[1]{0}', space=sflag, size = 0x4, scoped, tag = 'scoped memory for tile.43']
  %s0 = inlined_call_operand.vmem [shape: f32[8], index: 0, kind: input, shape index: {}]
  %s1 = inlined_call_operand.vmem [shape: f32[16,8], index: 1, kind: output, shape index: {}]
  // Predicated region
  $region2: #{tile.43} parent=0 // pred_check
    _
  $region3: #{tile.43} parent=0 // pred_check_branch
    %3 = sbr.rel (0) target = $region5
  $region4: #{tile.43} parent=0 // pred_region
    _
  $region5: #{tile.43} parent=0 // pred_fallthru
    _
  %v4 = vld [vmem:[%s0] ss:$0 sm:$0xff]
  %5 = vst [vmem:[%s1] sm:$0xff] %v4
  %s6 = scalar_lea.vmem %s1, 8
  %7 = vst [vmem:[%s6] sm:$0xff] %v4

// kernel: tile.44
$region0: #{tile.44}
  %s0 = inlined_call_operand.vmem [shape: f32[16,8], index: 0, kind: input, shape index: {}]
  %s1 = inlined_call_operand.vmem [shape: f32[1,128], index: 1, kind: output, shape index: {}]
  $region1: #{tile.44} parent=0
    #allocation0 [shape = 'u8[4096]{0}', space=vmem, size = 0x1000, scoped, tag = 'scoped mem for output reshape']
    %v2 = vld [vmem:[%s0] sm:$0x1]
    %vm3 = vcmask 64512
    %4 = vst.msk [vmem:[#allocation0] sm:$0x1] %vm3, %v2
    %s5 = scalar_lea.vmem %s0, 15
    %v6 = vld [vmem:[%s5] sm:$0x1]
    %7 = vrot.lane.b32.xlu0 %v6, 120
    %v8 = vpop.permute.xlu0 %7
    %vm9 = vcmask 1048512
    %10 = vst.msk [vmem:[#allocation0] sm:$0x1] %vm9, %v8
    %s11 = scalar_lea.vmem %s0, 14
    %v12 = vld [vmem:[%s11] sm:$0x1]
    %13 = vrot.lane.b32.xlu0 %v12, 112
    %v14 = vpop.permute.xlu0 %13
    %vm15 = vcmask 982912
    %16 = vst.msk [vmem:[#allocation0] sm:$0x1] %vm15, %v14
    %s17 = scalar_lea.vmem %s0, 13
    %v18 = vld [vmem:[%s17] sm:$0x1]
    %19 = vrot.lane.b32.xlu0 %v18, 104
    %v20 = vpop.permute.xlu0 %19
    %vm21 = vcmask 917312
    %22 = vst.msk [vmem:[#allocation0] sm:$0x1] %vm21, %v20
    %s23 = scalar_lea.vmem %s0, 12
    %v24 = vld [vmem:[%s23] sm:$0x1]
    %25 = vrot.lane.b32.xlu0 %v24, 96
    %v26 = vpop.permute.xlu0 %25
    %vm27 = vcmask 851712
    %28 = vst.msk [vmem:[#allocation0] sm:$0x1] %vm27, %v26
    %s29 = scalar_lea.vmem %s0, 11
    %v30 = vld [vmem:[%s29] sm:$0x1]
    %31 = vrot.lane.b32.xlu0 %v30, 88
    %v32 = vpop.permute.xlu0 %31
    %vm33 = vcmask 786112
    %34 = vst.msk [vmem:[#allocation0] sm:$0x1] %vm33, %v32
    %s35 = scalar_lea.vmem %s0, 10
    %v36 = vld [vmem:[%s35] sm:$0x1]
    %37 = vrot.lane.b32.xlu0 %v36, 80
    %v38 = vpop.permute.xlu0 %37
    %vm39 = vcmask 720512
    %40 = vst.msk [vmem:[#allocation0] sm:$0x1] %vm39, %v38
    %s41 = scalar_lea.vmem %s0, 9
    %v42 = vld [vmem:[%s41] sm:$0x1]
    %43 = vrot.lane.b32.xlu0 %v42, 72
    %v44 = vpop.permute.xlu0 %43
    %vm45 = vcmask 654912
    %46 = vst.msk [vmem:[#allocation0] sm:$0x1] %vm45, %v44
    %s47 = scalar_lea.vmem %s0, 8
    %v48 = vld [vmem:[%s47] sm:$0x1]
    %49 = vrot.lane.b32.xlu0 %v48, 64
    %v50 = vpop.permute.xlu0 %49
    %vm51 = vcmask 589312
    %52 = vst.msk [vmem:[#allocation0] sm:$0x1] %vm51, %v50
    %s53 = scalar_lea.vmem %s0, 7
    %v54 = vld [vmem:[%s53] sm:$0x1]
    %55 = vrot.lane.b32.xlu0 %v54, 56
    %v56 = vpop.permute.xlu0 %55
    %vm57 = vcmask 523712
    %58 = vst.msk [vmem:[#allocation0] sm:$0x1] %vm57, %v56
    %s59 = scalar_lea.vmem %s0, 6
    %v60 = vld [vmem:[%s59] sm:$0x1]
    %61 = vrot.lane.b32.xlu0 %v60, 48
    %v62 = vpop.permute.xlu0 %61
    %vm63 = vcmask 458112
    %64 = vst.msk [vmem:[#allocation0] sm:$0x1] %vm63, %v62
    %s65 = scalar_lea.vmem %s0, 5
    %v66 = vld [vmem:[%s65] sm:$0x1]
    %67 = vrot.lane.b32.xlu0 %v66, 40
    %v68 = vpop.permute.xlu0 %67
    %vm69 = vcmask 392512
    %70 = vst.msk [vmem:[#allocation0] sm:$0x1] %vm69, %v68
    %s71 = scalar_lea.vmem %s0, 4
    %v72 = vld [vmem:[%s71] sm:$0x1]
    %73 = vrot.lane.b32.xlu0 %v72, 32
    %v74 = vpop.permute.xlu0 %73
    %vm75 = vcmask 326912
    %76 = vst.msk [vmem:[#allocation0] sm:$0x1] %vm75, %v74
    %s77 = scalar_lea.vmem %s0, 3
    %v78 = vld [vmem:[%s77] sm:$0x1]
    %79 = vrot.lane.b32.xlu0 %v78, 24
    %v80 = vpop.permute.xlu0 %79
    %vm81 = vcmask 261312
    %82 = vst.msk [vmem:[#allocation0] sm:$0x1] %vm81, %v80
    %s83 = scalar_lea.vmem %s0, 2
    %v84 = vld [vmem:[%s83] sm:$0x1]
    %85 = vrot.lane.b32.xlu0 %v84, 16
    %v86 = vpop.permute.xlu0 %85
    %vm87 = vcmask 195712
    %88 = vst.msk [vmem:[#allocation0] sm:$0x1] %vm87, %v86
    %s89 = scalar_lea.vmem %s0, 1
    %v90 = vld [vmem:[%s89] sm:$0x1]
    %91 = vrot.lane.b32.xlu0 %v90, 8
    %v92 = vpop.permute.xlu0 %91
    %vm93 = vcmask 130112
    %94 = vst.msk [vmem:[#allocation0] sm:$0x1] %vm93, %v92
    %s96 = sshll.u32 1, 1
    %s97 = ssub.s32 %s96, 1
    %v99 = vld [vmem:[#allocation0] sm:%s97]
    %s100 = sshll.u32 1, 1
    %s101 = ssub.s32 %s100, 1
    %102 = vst [vmem:[%s1] sm:%s101] %v99

// kernel: res_context_block.4
$region0: #{res_context_block.4}
  #allocation0 [shape = 'u32[]', space=smem, size = 0x4, offset = 0x4, fixed_abs, tag = 'smem constant byte address 0x4 - core index']
  #allocation1 [shape = 'u32[144,128]{1,0:T(1,128)}', space=vmem, size = 0x12000, scoped, tag = 'internal scratch']
  %s0 = inlined_call_operand.vmem [shape: f32[16,16,64], index: 0, kind: input, shape index: {}]
  %s1 = inlined_call_operand.vmem [shape: f32[3,64,128], index: 1, kind: input, shape index: {}]
  %s2 = inlined_call_operand.vmem [shape: f32[1,64], index: 2, kind: input, shape index: {}]
  %s3 = inlined_call_operand.vmem [shape: f32[1,64], index: 3, kind: input, shape index: {}]
  %s4 = inlined_call_operand.vmem [shape: f32[16,16,128], index: 4, kind: output, shape index: {0}]
  %s5 = inlined_call_operand.vmem [shape: f32[2,1,128], index: 5, kind: output, shape index: {1}]
  %s6 = inlined_call_operand.vmem [shape: f32[2,1,128], index: 6, kind: output, shape index: {2}]
  %7 = xla_tuple %s4, %s5, %s6
  %s8 = sld [smem:[#allocation0]]
  $region72: #{res_context_block.4} parent=0
    _
  %s10 = ssub.s32 1, %s8
  %s11 = scalar_select 0, %s10, %s8
  loop: start=0, step=1, limit=4
  $region2: #{res_context_block.4} parent=0 // loop_pre_header
    _
  $region3: #{res_context_block.4} parent=0 // loop_header
    %s13 = sphi 0, %s17
    %p14 = scmp.ge.s32.totalorder %s13, 4
    %s23 = sphi 0, %s25
    %s26 = sphi 0, %s23
    %s27 = sphi 0, %s26
    %s43 = sphi 0, %s27
    %s47 = sphi 0, %s47
    %s49 = sphi 0, %s47
    %s50 = sphi 0, %s49
    %s64 = sphi 0, %s50
    %s68 = sphi 0, %s68
    %s70 = sphi 0, %s68
    %s71 = sphi 0, %s70
    %s85 = sphi 0, %s71
    %s89 = sphi 0, %s89
    %s91 = sphi 0, %s89
    %s92 = sphi 0, %s91
    %s106 = sphi 0, %s92
    %s112 = sphi 0, %s114
    %s115 = sphi 0, %s112
    %s116 = sphi 0, %s115
    %s132 = sphi 0, %s116
    %s138 = sphi 0, %s140
    %s141 = sphi 0, %s138
    %s142 = sphi 0, %s141
    %s158 = sphi 0, %s142
    %s164 = sphi 0, %s166
    %s167 = sphi 0, %s164
    %s168 = sphi 0, %s167
    %s184 = sphi 0, %s168
  $region4: #{res_context_block.4} parent=0 // loop_header_branch
    %16 = sbr.rel (%p14) target = $region8
  $region5: #{res_context_block.4} parent=0 // loop_body
    %s18 = ssub.s32 %s13, 1
    %s19 = ssub.s32 %s13, 2
    %s20 = sadd.s32 %s13, 1
    %s21 = ssub.s32 %s13, %s20
    %p22 = scmp.eq.s32.totalorder %s21, 0
    %s24 = sadd.s32 %s23, 1
    %s25 = scalar_select %p22, %s23, %s24
    %p28 = pneg %p22
    %p29 = scmp.eq.s32.totalorder %s13, 1
    %p30 = por %p28, %p29
    %p31 = scmp.ne.s32.totalorder %s23, %s26
    %p32 = scmp.eq.s32.totalorder %s13, 0
    %p33 = por %p31, %p32
    %p34 = scmp.ne.s32.totalorder %s23, %s26
    %p35 = scmp.eq.s32.totalorder %s18, 1
    %p36 = por %p34, %p35
    %p37 = scmp.ne.s32.totalorder %s26, %s27
    %p38 = scmp.eq.s32.totalorder %s18, 0
    %p39 = por %p37, %p38
    %p40 = scmp.ne.s32.totalorder %s26, %s27
    %p41 = scmp.eq.s32.totalorder %s19, 1
    %p42 = por %p40, %p41
    %p44 = scmp.ne.s32.totalorder %s27, %s43
    %p45 = scmp.eq.s32.totalorder %s19, 0
    %p46 = por %p44, %p45
    %s48 = sadd.s32 %s47, 1
    %p51 = scmp.eq.s32.totalorder %s13, 1
    %p52 = scmp.ne.s32.totalorder %s47, %s49
    %p53 = scmp.eq.s32.totalorder %s13, 0
    %p54 = por %p52, %p53
    %p55 = scmp.ne.s32.totalorder %s47, %s49
    %p56 = scmp.eq.s32.totalorder %s18, 1
    %p57 = por %p55, %p56
    %p58 = scmp.ne.s32.totalorder %s49, %s50
    %p59 = scmp.eq.s32.totalorder %s18, 0
    %p60 = por %p58, %p59
    %p61 = scmp.ne.s32.totalorder %s49, %s50
    %p62 = scmp.eq.s32.totalorder %s19, 1
    %p63 = por %p61, %p62
    %p65 = scmp.ne.s32.totalorder %s50, %s64
    %p66 = scmp.eq.s32.totalorder %s19, 0
    %p67 = por %p65, %p66
    %s69 = sadd.s32 %s68, 1
    %p72 = scmp.eq.s32.totalorder %s13, 1
    %p73 = scmp.ne.s32.totalorder %s68, %s70
    %p74 = scmp.eq.s32.totalorder %s13, 0
    %p75 = por %p73, %p74
    %p76 = scmp.ne.s32.totalorder %s68, %s70
    %p77 = scmp.eq.s32.totalorder %s18, 1
    %p78 = por %p76, %p77
    %p79 = scmp.ne.s32.totalorder %s70, %s71
    %p80 = scmp.eq.s32.totalorder %s18, 0
    %p81 = por %p79, %p80
    %p82 = scmp.ne.s32.totalorder %s70, %s71
    %p83 = scmp.eq.s32.totalorder %s19, 1
    %p84 = por %p82, %p83
    %p86 = scmp.ne.s32.totalorder %s71, %s85
    %p87 = scmp.eq.s32.totalorder %s19, 0
    %p88 = por %p86, %p87
    %s90 = sadd.s32 %s89, 1
    %p93 = scmp.eq.s32.totalorder %s13, 1
    %p94 = scmp.ne.s32.totalorder %s89, %s91
    %p95 = scmp.eq.s32.totalorder %s13, 0
    %p96 = por %p94, %p95
    %p97 = scmp.ne.s32.totalorder %s89, %s91
    %p98 = scmp.eq.s32.totalorder %s18, 1
    %p99 = por %p97, %p98
    %p100 = scmp.ne.s32.totalorder %s91, %s92
    %p101 = scmp.eq.s32.totalorder %s18, 0
    %p102 = por %p100, %p101
    %p103 = scmp.ne.s32.totalorder %s91, %s92
    %p104 = scmp.eq.s32.totalorder %s19, 1
    %p105 = por %p103, %p104
    %p107 = scmp.ne.s32.totalorder %s92, %s106
    %p108 = scmp.eq.s32.totalorder %s19, 0
    %p109 = por %p107, %p108
    %s110 = ssub.s32 %s13, %s20
    %p111 = scmp.eq.s32.totalorder %s110, 0
    %s113 = sadd.s32 %s112, 1
    %s114 = scalar_select %p111, %s112, %s113
    %p117 = pneg %p111
    %p118 = scmp.eq.s32.totalorder %s13, 1
    %p119 = por %p117, %p118
    %p120 = scmp.ne.s32.totalorder %s112, %s115
    %p121 = scmp.eq.s32.totalorder %s13, 0
    %p122 = por %p120, %p121
    %p123 = scmp.ne.s32.totalorder %s112, %s115
    %p124 = scmp.eq.s32.totalorder %s18, 1
    %p125 = por %p123, %p124
    %p126 = scmp.ne.s32.totalorder %s115, %s116
    %p127 = scmp.eq.s32.totalorder %s18, 0
    %p128 = por %p126, %p127
    %p129 = scmp.ne.s32.totalorder %s115, %s116
    %p130 = scmp.eq.s32.totalorder %s19, 1
    %p131 = por %p129, %p130
    %p133 = scmp.ne.s32.totalorder %s116, %s132
    %p134 = scmp.eq.s32.totalorder %s19, 0
    %p135 = por %p133, %p134
    %s136 = ssub.s32 %s13, %s20
    %p137 = scmp.eq.s32.totalorder %s136, 0
    %s139 = sadd.s32 %s138, 1
    %s140 = scalar_select %p137, %s138, %s139
    %p143 = pneg %p137
    %p144 = scmp.eq.s32.totalorder %s13, 1
    %p145 = por %p143, %p144
    %p146 = scmp.ne.s32.totalorder %s138, %s141
    %p147 = scmp.eq.s32.totalorder %s13, 0
    %p148 = por %p146, %p147
    %p149 = scmp.ne.s32.totalorder %s138, %s141
    %p150 = scmp.eq.s32.totalorder %s18, 1
    %p151 = por %p149, %p150
    %p152 = scmp.ne.s32.totalorder %s141, %s142
    %p153 = scmp.eq.s32.totalorder %s18, 0
    %p154 = por %p152, %p153
    %p155 = scmp.ne.s32.totalorder %s141, %s142
    %p156 = scmp.eq.s32.totalorder %s19, 1
    %p157 = por %p155, %p156
    %p159 = scmp.ne.s32.totalorder %s142, %s158
    %p160 = scmp.eq.s32.totalorder %s19, 0
    %p161 = por %p159, %p160
    %s162 = ssub.s32 %s13, %s20
    %p163 = scmp.eq.s32.totalorder %s162, 0
    %s165 = sadd.s32 %s164, 1
    %s166 = scalar_select %p163, %s164, %s165
    %p169 = pneg %p163
    %p170 = scmp.eq.s32.totalorder %s13, 1
    %p171 = por %p169, %p170
    %p172 = scmp.ne.s32.totalorder %s164, %s167
    %p173 = scmp.eq.s32.totalorder %s13, 0
    %p174 = por %p172, %p173
    %p175 = scmp.ne.s32.totalorder %s164, %s167
    %p176 = scmp.eq.s32.totalorder %s18, 1
    %p177 = por %p175, %p176
    %p178 = scmp.ne.s32.totalorder %s167, %s168
    %p179 = scmp.eq.s32.totalorder %s18, 0
    %p180 = por %p178, %p179
    %p181 = scmp.ne.s32.totalorder %s167, %s168
    %p182 = scmp.eq.s32.totalorder %s19, 1
    %p183 = por %p181, %p182
    %p185 = scmp.ne.s32.totalorder %s168, %s184
    %p186 = scmp.eq.s32.totalorder %s19, 0
    %p187 = por %p185, %p186
    %p188 = scmp.le.s32.totalorder 1, %s13
    %p189 = scmp.lt.s32.totalorder %s13, 3
    %p190 = pnand %p188, %p189
    %p191 = pneg %p190
    // Predicated region
    $region9: #{res_context_block.4} parent=5 // pred_check
      _
    $region10: #{res_context_block.4} parent=5 // pred_check_branch
      %193 = sbr.rel (%p190) target = $region12
    $region11: #{res_context_block.4} parent=5 // pred_region
      %s194 = ssub.s32 %s13, 1
      // Predicated region
      $region13: #{res_context_block.4} parent=11 // pred_check
        %p195 = pneg %p60
      $region14: #{res_context_block.4} parent=11 // pred_check_branch
        %197 = sbr.rel (%p195) target = $region16
      $region15: #{res_context_block.4} parent=11 // pred_region
        _
      $region16: #{res_context_block.4} parent=11 // pred_fallthru
        _
      // Predicated region
      $region17: #{res_context_block.4} parent=11 // pred_check
        %p198 = pneg %p81
      $region18: #{res_context_block.4} parent=11 // pred_check_branch
        %200 = sbr.rel (%p198) target = $region20
      $region19: #{res_context_block.4} parent=11 // pred_region
        _
      $region20: #{res_context_block.4} parent=11 // pred_fallthru
        _
      // Predicated region
      $region21: #{res_context_block.4} parent=11 // pred_check
        %p201 = pneg %p102
      $region22: #{res_context_block.4} parent=11 // pred_check_branch
        %203 = sbr.rel (%p201) target = $region24
      $region23: #{res_context_block.4} parent=11 // pred_region
        _
      $region24: #{res_context_block.4} parent=11 // pred_fallthru
        _
    $region12: #{res_context_block.4} parent=5 // pred_fallthru
      _
    %p204 = scmp.lt.s32.totalorder %s13, 2
    // Predicated region
    $region25: #{res_context_block.4} parent=5 // pred_check
      %p205 = pneg %p204
    $region26: #{res_context_block.4} parent=5 // pred_check_branch
      %207 = sbr.rel (%p205) target = $region28
    $region27: #{res_context_block.4} parent=5 // pred_region
      // Predicated region
      $region29: #{res_context_block.4} parent=27 // pred_check
        %p208 = pneg %p33
      $region30: #{res_context_block.4} parent=27 // pred_check_branch
        %210 = sbr.rel (%p208) target = $region32
      $region31: #{res_context_block.4} parent=27 // pred_region
        %s211 = smul.u32 8, %s13
        %p212 = scmp.lt.s32.totalorder %s211, 15
        %s213 = scalar_select %p212, %s211, 15
        %s214 = smul.addr %s213, 2
        %s215 = smul.addr %s214, 8
        %s216 = scalar_lea.vmem %s0, %s215
        %s217 = smul.u32 8, %s13
      $region32: #{res_context_block.4} parent=27 // pred_fallthru
        _
    $region28: #{res_context_block.4} parent=5 // pred_fallthru
      _
    %p218 = scmp.le.s32.totalorder 1, %s13
    %p219 = scmp.lt.s32.totalorder %s13, 3
    %p220 = pnand %p218, %p219
    %p221 = pneg %p220
    // Predicated region
    $region33: #{res_context_block.4} parent=5 // pred_check
      _
    $region34: #{res_context_block.4} parent=5 // pred_check_branch
      %223 = sbr.rel (%p220) target = $region36
    $region35: #{res_context_block.4} parent=5 // pred_region
      %s224 = ssub.s32 %s13, 1
      %s225 = smul.u32 8, %s18
      %p226 = scmp.lt.s32.totalorder %s225, 15
      %s227 = scalar_select %p226, %s225, 15
      %s228 = smul.addr %s227, 2
      %s229 = smul.addr %s228, 8
      %s230 = scalar_lea.vmem %s0, %s229
      %p231 = pneg %p39
      %p232 = pneg %p36
      %p233 = pneg %p60
      %p234 = pneg %p57
      %p235 = pneg %p81
      %p236 = pneg %p78
      %p237 = pneg %p102
      %p238 = pneg %p99
      %p239 = pneg %p128
      %p240 = pneg %p125
      %s241 = smul.u32 8, %s18
      %p242 = scmp.lt.s32.totalorder %s241, 15
      %s243 = scalar_select %p242, %s241, 15
      %s244 = smul.addr %s243, 2
      %s245 = smul.addr %s244, 8
      %s246 = scalar_lea.vmem %s4, %s245
      %p247 = pneg %p154
      %p248 = pneg %p151
      %p249 = scmp.lt.s32.totalorder %s18, 1
      %s250 = scalar_select %p249, %s18, 1
      %s251 = scalar_lea.vmem %s5, %s250
      %p252 = pneg %p180
      %p253 = pneg %p177
      %p254 = scmp.lt.s32.totalorder %s18, 1
      %s255 = scalar_select %p254, %s18, 1
      %s256 = scalar_lea.vmem %s6, %s255
      %s257 = smul.u32 8, %s18
      %p258 = scmp.lt.s32.totalorder %s257, 15
      %s259 = scalar_select %p258, %s257, 15
      %s260 = smul.addr %s259, 2
      %s261 = smul.addr %s260, 8
      %s262 = scalar_lea.vmem %s0, %s261
      %s263 = smul.u32 8, %s18
      %s264 = smul.u32 8, %s18
      %p265 = scmp.lt.s32.totalorder %s264, 15
      %s266 = scalar_select %p265, %s264, 15
      %s267 = smul.addr %s266, 2
      %s268 = smul.addr %s267, 8
      %s269 = scalar_lea.vmem %s4, %s268
      %s270 = smul.u32 8, %s18
      %p271 = scmp.lt.s32.totalorder %s18, 1
      %s272 = scalar_select %p271, %s18, 1
      %s273 = scalar_lea.vmem %s5, %s272
      %p274 = scmp.lt.s32.totalorder %s18, 1
      %s275 = scalar_select %p274, %s18, 1
      %s276 = scalar_lea.vmem %s6, %s275
      %v277 = vld [vmem:[%s2] sm:$0x1]
      %v278 = vld [vmem:[%s3] sm:$0x1]
      %v279 = vlaneseq
      %v280 = vshrl.u32 %v279, 7
      %v281 = vadd.s32 %v280, 8
      loop: start=0, step=1, limit=8
      $region37: #{res_context_block.4} parent=35 // loop_pre_header
        _
      $region38: #{res_context_block.4} parent=35 // loop_header
        %s283 = sphi 0, %s287
        %p284 = scmp.ge.s32.totalorder %s283, 8
        %v288 = vphi 0.0, %v624
        %v289 = vphi 0.0, %v634
      $region39: #{res_context_block.4} parent=35 // loop_header_branch
        %286 = sbr.rel (%p284) target = $region43
      $region40: #{res_context_block.4} parent=35 // loop_body
        %s290 = smul.u32 %s283, 16
        %s291 = scalar_lea.vmem %s262, %s290
        %v292 = vld [vmem:[%s291] sm:$0xff]
        %v293 = vld [vmem:[%s291 + $0x8] sm:$0xff]
        %v295 = vlaneseq
        %v296 = vshrl.u32 %v295, 7
        %v297 = vsub.s32 0, %v296
        %v298 = vrot.slane %v277, %v297
        %v300 = vmul.f32 %v292, %v298
        %v301 = vmul.f32 %v293, %v298
        %v303 = vlaneseq
        %v304 = vshrl.u32 %v303, 7
        %v305 = vsub.s32 0, %v304
        %v306 = vrot.slane %v278, %v305
        %v308 = vadd.f32 %v300, %v306
        %v309 = vadd.f32 %v301, %v306
        %vm310 = vcmp.ge.s32.totalorder %v280, 1
        %vm311 = vcmp.ge.s32.totalorder %v281, 1
        %v312 = vrot.slane %v308, 7
        %v313 = vrot.slane %v309, 7
        %vm314 = vcmp.lt.s32.totalorder %v280, 1
        %v315 = vsel %vm314, %v312, %v313
        %v316 = vsel %vm314, %v313, %v312
        %v317 = vsel %vm310, 1, 0
        %v318 = vsel %vm311, 1, 0
        %vm319 = vcmp.eq.s32.totalorder %v317, 1
        %vm320 = vcmp.eq.s32.totalorder %v318, 1
        %v321 = vsel %vm319, %v316, 0.0
        %v322 = vsel %vm320, %v315, 0.0
        %vm323 = vcmp.le.s32.totalorder %v280, 14
        %vm324 = vcmp.le.s32.totalorder %v281, 14
        %v325 = vrot.slane %v308, 1
        %v326 = vrot.slane %v309, 1
        %vm327 = vcmp.lt.s32.totalorder %v280, 7
        %v328 = vsel %vm327, %v325, %v326
        %v329 = vsel %vm327, %v326, %v325
        %v330 = vsel %vm323, 1, 0
        %v331 = vsel %vm324, 1, 0
        %vm332 = vcmp.eq.s32.totalorder %v330, 1
        %vm333 = vcmp.eq.s32.totalorder %v331, 1
        %v334 = vsel %vm332, %v328, 0.0
        %v335 = vsel %vm333, %v329, 0.0
        %v336 = vld [vmem:[%s1] sm:$0xff]
        %v337 = vld [vmem:[%s1 + $0x8] sm:$0xff]
        %v338 = vld [vmem:[%s1 + $0x10] sm:$0xff]
        %v339 = vld [vmem:[%s1 + $0x18] sm:$0xff]
        %v340 = vld [vmem:[%s1 + $0x20] sm:$0xff]
        %v341 = vld [vmem:[%s1 + $0x28] sm:$0xff]
        %v342 = vld [vmem:[%s1 + $0x30] sm:$0xff]
        %v343 = vld [vmem:[%s1 + $0x38] sm:$0xff]
        %s344 = scalar_lea.vmem %s1, 64
        %v345 = vld [vmem:[%s344] sm:$0xff]
        %v346 = vld [vmem:[%s344 + $0x8] sm:$0xff]
        %v347 = vld [vmem:[%s344 + $0x10] sm:$0xff]
        %v348 = vld [vmem:[%s344 + $0x18] sm:$0xff]
        %v349 = vld [vmem:[%s344 + $0x20] sm:$0xff]
        %v350 = vld [vmem:[%s344 + $0x28] sm:$0xff]
        %v351 = vld [vmem:[%s344 + $0x30] sm:$0xff]
        %v352 = vld [vmem:[%s344 + $0x38] sm:$0xff]
        %vm353 = vcmask 523264
        %v355 = vsel %vm353, %v308, 0
        %v358 = vsel %vm353, %v309, 0
        %360 = vmatprep.subr.mxu0 0.0
        %361 = vmatpush1.msra.mxu0 0.0
        %362 = vmatprep.subr.mxu0 0.0
        %363 = vmatpush1.msra.mxu0 0.0
        %364 = vmatprep.subr.mxu0 0.0
        %365 = vmatpush1.msra.mxu0 0.0
        %366 = vmatprep.subr.mxu0 0.0
        %367 = vmatpush1.msra.mxu0 0.0
        %368 = vmatprep.subr.mxu0 0.0
        %369 = vmatpush1.msra.mxu0 0.0
        %370 = vmatprep.subr.mxu0 0.0
        %371 = vmatpush1.msra.mxu0 0.0
        %372 = vmatprep.subr.mxu0 0.0
        %373 = vmatpush1.msra.mxu0 0.0
        %374 = vmatprep.subr.mxu0 0.0
        %375 = vmatpush1.msra.mxu0 0.0
        %376 = vmatprep.subr.mxu0 0.0
        %377 = vmatpush1.msra.mxu0 %v352
        %378 = vmatprep.subr.mxu0 0.0
        %379 = vmatpush1.msra.mxu0 %v351
        %380 = vmatprep.subr.mxu0 0.0
        %381 = vmatpush1.msra.mxu0 %v350
        %382 = vmatprep.subr.mxu0 0.0
        %383 = vmatpush1.msra.mxu0 %v349
        %384 = vmatprep.subr.mxu0 0.0
        %385 = vmatpush1.msra.mxu0 %v348
        %386 = vmatprep.subr.mxu0 0.0
        %387 = vmatpush1.msra.mxu0 %v347
        %388 = vmatprep.subr.mxu0 0.0
        %389 = vmatpush1.msra.mxu0 %v346
        %390 = vmatprep.subr.mxu0 0.0
        %391 = vmatpush1.msra.mxu0 %v345
        %392 = vmatprep.subr.mxu0 0.0
        %393 = vmatpush2.msra.mxu0 0.0
        %394 = vmatprep.subr.mxu0 0.0
        %395 = vmatpush2.msra.mxu0 0.0
        %396 = vmatprep.subr.mxu0 0.0
        %397 = vmatpush2.msra.mxu0 0.0
        %398 = vmatprep.subr.mxu0 0.0
        %399 = vmatpush2.msra.mxu0 0.0
        %400 = vmatprep.subr.mxu0 0.0
        %401 = vmatpush2.msra.mxu0 0.0
        %402 = vmatprep.subr.mxu0 0.0
        %403 = vmatpush2.msra.mxu0 0.0
        %404 = vmatprep.subr.mxu0 0.0
        %405 = vmatpush2.msra.mxu0 0.0
        %406 = vmatprep.subr.mxu0 0.0
        %407 = vmatpush2.msra.mxu0 0.0
        %408 = vmatprep.subr.mxu0 0.0
        %409 = vmatpush2.msra.mxu0 0.0
        %410 = vmatprep.subr.mxu0 0.0
        %411 = vmatpush2.msra.mxu0 0.0
        %412 = vmatprep.subr.mxu0 0.0
        %413 = vmatpush2.msra.mxu0 0.0
        %414 = vmatprep.subr.mxu0 0.0
        %415 = vmatpush2.msra.mxu0 0.0
        %416 = vmatprep.subr.mxu0 0.0
        %417 = vmatpush2.msra.mxu0 0.0
        %418 = vmatprep.subr.mxu0 0.0
        %419 = vmatpush2.msra.mxu0 0.0
        %420 = vmatprep.subr.mxu0 0.0
        %421 = vmatpush2.msra.mxu0 0.0
        %422 = vmatprep.subr.mxu0 0.0
        %423 = vmatpush2.msra.mxu0 0.0
        %424 = vmatprep.mubr.f32.mxu0 0.0
        %425 = vmatmul.mubr.f32.gmra.mxu0 %v355
        %v426 = vpop.f32.mrf.mxu0
        %v427 = vadd.f32 0.0, %v426
        %v428 = vpop.f32.mrf.mxu0
        %429 = vmatprep.mubr.f32.mxu0 0.0
        %430 = vmatmul.mubr.f32.gmra.mxu0 %v358
        %v431 = vpop.f32.mrf.mxu0
        %v432 = vadd.f32 0.0, %v431
        %v433 = vpop.f32.mrf.mxu0
        %434 = vdwg.mxu0
        %v436 = vsel %vm353, %v321, 0
        %v439 = vsel %vm353, %v322, 0
        %441 = vmatprep.subr.mxu0 0.0
        %442 = vmatpush1.msra.mxu0 0.0
        %443 = vmatprep.subr.mxu0 0.0
        %444 = vmatpush1.msra.mxu0 0.0
        %445 = vmatprep.subr.mxu0 0.0
        %446 = vmatpush1.msra.mxu0 0.0
        %447 = vmatprep.subr.mxu0 0.0
        %448 = vmatpush1.msra.mxu0 0.0
        %449 = vmatprep.subr.mxu0 0.0
        %450 = vmatpush1.msra.mxu0 0.0
        %451 = vmatprep.subr.mxu0 0.0
        %452 = vmatpush1.msra.mxu0 0.0
        %453 = vmatprep.subr.mxu0 0.0
        %454 = vmatpush1.msra.mxu0 0.0
        %455 = vmatprep.subr.mxu0 0.0
        %456 = vmatpush1.msra.mxu0 0.0
        %457 = vmatprep.subr.mxu0 0.0
        %458 = vmatpush1.msra.mxu0 %v343
        %459 = vmatprep.subr.mxu0 0.0
        %460 = vmatpush1.msra.mxu0 %v342
        %461 = vmatprep.subr.mxu0 0.0
        %462 = vmatpush1.msra.mxu0 %v341
        %463 = vmatprep.subr.mxu0 0.0
        %464 = vmatpush1.msra.mxu0 %v340
        %465 = vmatprep.subr.mxu0 0.0
        %466 = vmatpush1.msra.mxu0 %v339
        %467 = vmatprep.subr.mxu0 0.0
        %468 = vmatpush1.msra.mxu0 %v338
        %469 = vmatprep.subr.mxu0 0.0
        %470 = vmatpush1.msra.mxu0 %v337
        %471 = vmatprep.subr.mxu0 0.0
        %472 = vmatpush1.msra.mxu0 %v336
        %473 = vmatprep.subr.mxu0 0.0
        %474 = vmatpush2.msra.mxu0 0.0
        %475 = vmatprep.subr.mxu0 0.0
        %476 = vmatpush2.msra.mxu0 0.0
        %477 = vmatprep.subr.mxu0 0.0
        %478 = vmatpush2.msra.mxu0 0.0
        %479 = vmatprep.subr.mxu0 0.0
        %480 = vmatpush2.msra.mxu0 0.0
        %481 = vmatprep.subr.mxu0 0.0
        %482 = vmatpush2.msra.mxu0 0.0
        %483 = vmatprep.subr.mxu0 0.0
        %484 = vmatpush2.msra.mxu0 0.0
        %485 = vmatprep.subr.mxu0 0.0
        %486 = vmatpush2.msra.mxu0 0.0
        %487 = vmatprep.subr.mxu0 0.0
        %488 = vmatpush2.msra.mxu0 0.0
        %489 = vmatprep.subr.mxu0 0.0
        %490 = vmatpush2.msra.mxu0 0.0
        %491 = vmatprep.subr.mxu0 0.0
        %492 = vmatpush2.msra.mxu0 0.0
        %493 = vmatprep.subr.mxu0 0.0
        %494 = vmatpush2.msra.mxu0 0.0
        %495 = vmatprep.subr.mxu0 0.0
        %496 = vmatpush2.msra.mxu0 0.0
        %497 = vmatprep.subr.mxu0 0.0
        %498 = vmatpush2.msra.mxu0 0.0
        %499 = vmatprep.subr.mxu0 0.0
        %500 = vmatpush2.msra.mxu0 0.0
        %501 = vmatprep.subr.mxu0 0.0
        %502 = vmatpush2.msra.mxu0 0.0
        %503 = vmatprep.subr.mxu0 0.0
        %504 = vmatpush2.msra.mxu0 0.0
        %505 = vmatprep.mubr.f32.mxu0 0.0
        %506 = vmatmul.mubr.f32.gmra.mxu0 %v436
        %v507 = vpop.f32.mrf.mxu0
        %v508 = vadd.f32 %v427, %v507
        %v509 = vpop.f32.mrf.mxu0
        %510 = vmatprep.mubr.f32.mxu0 0.0
        %511 = vmatmul.mubr.f32.gmra.mxu0 %v439
        %v512 = vpop.f32.mrf.mxu0
        %v513 = vadd.f32 %v432, %v512
        %v514 = vpop.f32.mrf.mxu0
        %515 = vdwg.mxu0
        %s516 = scalar_lea.vmem %s1, 128
        %v517 = vld [vmem:[%s516] sm:$0xff]
        %v518 = vld [vmem:[%s516 + $0x8] sm:$0xff]
        %v519 = vld [vmem:[%s516 + $0x10] sm:$0xff]
        %v520 = vld [vmem:[%s516 + $0x18] sm:$0xff]
        %v521 = vld [vmem:[%s516 + $0x20] sm:$0xff]
        %v522 = vld [vmem:[%s516 + $0x28] sm:$0xff]
        %v523 = vld [vmem:[%s516 + $0x30] sm:$0xff]
        %v524 = vld [vmem:[%s516 + $0x38] sm:$0xff]
        %v526 = vsel %vm353, %v334, 0
        %v529 = vsel %vm353, %v335, 0
        %531 = vmatprep.subr.mxu0 0.0
        %532 = vmatpush1.msra.mxu0 0.0
        %533 = vmatprep.subr.mxu0 0.0
        %534 = vmatpush1.msra.mxu0 0.0
        %535 = vmatprep.subr.mxu0 0.0
        %536 = vmatpush1.msra.mxu0 0.0
        %537 = vmatprep.subr.mxu0 0.0
        %538 = vmatpush1.msra.mxu0 0.0
        %539 = vmatprep.subr.mxu0 0.0
        %540 = vmatpush1.msra.mxu0 0.0
        %541 = vmatprep.subr.mxu0 0.0
        %542 = vmatpush1.msra.mxu0 0.0
        %543 = vmatprep.subr.mxu0 0.0
        %544 = vmatpush1.msra.mxu0 0.0
        %545 = vmatprep.subr.mxu0 0.0
        %546 = vmatpush1.msra.mxu0 0.0
        %547 = vmatprep.subr.mxu0 0.0
        %548 = vmatpush1.msra.mxu0 %v524
        %549 = vmatprep.subr.mxu0 0.0
        %550 = vmatpush1.msra.mxu0 %v523
        %551 = vmatprep.subr.mxu0 0.0
        %552 = vmatpush1.msra.mxu0 %v522
        %553 = vmatprep.subr.mxu0 0.0
        %554 = vmatpush1.msra.mxu0 %v521
        %555 = vmatprep.subr.mxu0 0.0
        %556 = vmatpush1.msra.mxu0 %v520
        %557 = vmatprep.subr.mxu0 0.0
        %558 = vmatpush1.msra.mxu0 %v519
        %559 = vmatprep.subr.mxu0 0.0
        %560 = vmatpush1.msra.mxu0 %v518
        %561 = vmatprep.subr.mxu0 0.0
        %562 = vmatpush1.msra.mxu0 %v517
        %563 = vmatprep.subr.mxu0 0.0
        %564 = vmatpush2.msra.mxu0 0.0
        %565 = vmatprep.subr.mxu0 0.0
        %566 = vmatpush2.msra.mxu0 0.0
        %567 = vmatprep.subr.mxu0 0.0
        %568 = vmatpush2.msra.mxu0 0.0
        %569 = vmatprep.subr.mxu0 0.0
        %570 = vmatpush2.msra.mxu0 0.0
        %571 = vmatprep.subr.mxu0 0.0
        %572 = vmatpush2.msra.mxu0 0.0
        %573 = vmatprep.subr.mxu0 0.0
        %574 = vmatpush2.msra.mxu0 0.0
        %575 = vmatprep.subr.mxu0 0.0
        %576 = vmatpush2.msra.mxu0 0.0
        %577 = vmatprep.subr.mxu0 0.0
        %578 = vmatpush2.msra.mxu0 0.0
        %579 = vmatprep.subr.mxu0 0.0
        %580 = vmatpush2.msra.mxu0 0.0
        %581 = vmatprep.subr.mxu0 0.0
        %582 = vmatpush2.msra.mxu0 0.0
        %583 = vmatprep.subr.mxu0 0.0
        %584 = vmatpush2.msra.mxu0 0.0
        %585 = vmatprep.subr.mxu0 0.0
        %586 = vmatpush2.msra.mxu0 0.0
        %587 = vmatprep.subr.mxu0 0.0
        %588 = vmatpush2.msra.mxu0 0.0
        %589 = vmatprep.subr.mxu0 0.0
        %590 = vmatpush2.msra.mxu0 0.0
        %591 = vmatprep.subr.mxu0 0.0
        %592 = vmatpush2.msra.mxu0 0.0
        %593 = vmatprep.subr.mxu0 0.0
        %594 = vmatpush2.msra.mxu0 0.0
        %595 = vmatprep.mubr.f32.mxu0 0.0
        %596 = vmatmul.mubr.f32.gmra.mxu0 %v526
        %v597 = vpop.f32.mrf.mxu0
        %v598 = vadd.f32 0.0, %v597
        %v599 = vpop.f32.mrf.mxu0
        %600 = vmatprep.mubr.f32.mxu0 0.0
        %601 = vmatmul.mubr.f32.gmra.mxu0 %v529
        %v602 = vpop.f32.mrf.mxu0
        %v603 = vadd.f32 0.0, %v602
        %v604 = vpop.f32.mrf.mxu0
        %605 = vdwg.mxu0
        %v606 = vadd.f32 %v508, %v598
        %v607 = vadd.f32 %v513, %v603
        %vm608 = vcmp.ge.f32.partialorder %v606, 0.0
        %vm609 = vcmp.ge.f32.partialorder %v607, 0.0
        %v610 = vmul.f32 %v606, 0.01
        %v611 = vmul.f32 %v607, 0.01
        %v612 = vsel %vm608, %v606, %v610
        %v613 = vsel %vm609, %v607, %v611
        %s614 = scalar_lea.vmem %s269, %s290
        %615 = vst [vmem:[%s614] sm:$0xff] %v612
        %616 = vst [vmem:[%s614 + $0x8] sm:$0xff] %v613
        %v617 = vadd.f32 %v612, %v613
        %v618 = vrot.slane %v617, 4
        %v619 = vadd.f32 %v617, %v618
        %v620 = vrot.slane %v619, 2
        %v621 = vadd.f32 %v619, %v620
        %v622 = vrot.slane %v621, 1
        %v623 = vadd.f32 %v621, %v622
        %v624 = vadd.f32 %v288, %v623
        %v625 = vmul.f32 %v612, %v612
        %v626 = vmul.f32 %v613, %v613
        %v627 = vadd.f32 %v625, %v626
        %v628 = vrot.slane %v627, 4
        %v629 = vadd.f32 %v627, %v628
        %v630 = vrot.slane %v629, 2
        %v631 = vadd.f32 %v629, %v630
        %v632 = vrot.slane %v631, 1
        %v633 = vadd.f32 %v631, %v632
        %v634 = vadd.f32 %v289, %v633
      $region41: #{res_context_block.4} parent=35 // loop_footer
        %s287 = sadd.s32 1, %s283
      $region42: #{res_context_block.4} parent=35 // loop_footer_branch
        %282 = sbr.rel target = $region38
      $region43: #{res_context_block.4} parent=35 // loop_exit
        _
      %635 = vst [vmem:[%s273] sm:$0x1] %v288
      %636 = vst [vmem:[%s276] sm:$0x1] %v289
      %s637 = smul.u32 8, %s18
      %p638 = scmp.lt.s32.totalorder %s637, 15
      %s639 = scalar_select %p638, %s637, 15
      %s640 = smul.addr %s639, 2
      %s641 = smul.addr %s640, 8
      %s642 = scalar_lea.vmem %s4, %s641
      %p643 = scmp.lt.s32.totalorder %s18, 1
      %s644 = scalar_select %p643, %s18, 1
      %s645 = scalar_lea.vmem %s5, %s644
      %p646 = scmp.lt.s32.totalorder %s18, 1
      %s647 = scalar_select %p646, %s18, 1
      %s648 = scalar_lea.vmem %s6, %s647
      // Predicated region
      $region44: #{res_context_block.4} parent=35 // pred_check
        %p649 = pneg %p125
      $region45: #{res_context_block.4} parent=35 // pred_check_branch
        %651 = sbr.rel (%p649) target = $region47
      $region46: #{res_context_block.4} parent=35 // pred_region
        %s652 = smul.u32 8, %s18
      $region47: #{res_context_block.4} parent=35 // pred_fallthru
        _
      // Predicated region
      $region48: #{res_context_block.4} parent=35 // pred_check
        %p653 = pneg %p151
      $region49: #{res_context_block.4} parent=35 // pred_check_branch
        %655 = sbr.rel (%p653) target = $region51
      $region50: #{res_context_block.4} parent=35 // pred_region
        _
      $region51: #{res_context_block.4} parent=35 // pred_fallthru
        _
      // Predicated region
      $region52: #{res_context_block.4} parent=35 // pred_check
        %p656 = pneg %p177
      $region53: #{res_context_block.4} parent=35 // pred_check_branch
        %658 = sbr.rel (%p656) target = $region55
      $region54: #{res_context_block.4} parent=35 // pred_region
        _
      $region55: #{res_context_block.4} parent=35 // pred_fallthru
        _
    $region36: #{res_context_block.4} parent=5 // pred_fallthru
      _
    %p659 = scmp.le.s32.totalorder 2, %s13
    // Predicated region
    $region56: #{res_context_block.4} parent=5 // pred_check
      %p660 = pneg %p659
    $region57: #{res_context_block.4} parent=5 // pred_check_branch
      %662 = sbr.rel (%p660) target = $region59
    $region58: #{res_context_block.4} parent=5 // pred_region
      %s663 = ssub.s32 %s13, 2
      // Predicated region
      $region60: #{res_context_block.4} parent=58 // pred_check
        %p664 = pneg %p131
      $region61: #{res_context_block.4} parent=58 // pred_check_branch
        %666 = sbr.rel (%p664) target = $region63
      $region62: #{res_context_block.4} parent=58 // pred_region
        %s667 = smul.u32 8, %s19
        %p668 = scmp.lt.s32.totalorder %s667, 15
        %s669 = scalar_select %p668, %s667, 15
        %s670 = smul.addr %s669, 2
        %s671 = smul.addr %s670, 8
        %s672 = scalar_lea.vmem %s4, %s671
      $region63: #{res_context_block.4} parent=58 // pred_fallthru
        _
      // Predicated region
      $region64: #{res_context_block.4} parent=58 // pred_check
        %p673 = pneg %p157
      $region65: #{res_context_block.4} parent=58 // pred_check_branch
        %675 = sbr.rel (%p673) target = $region67
      $region66: #{res_context_block.4} parent=58 // pred_region
        %p676 = scmp.lt.s32.totalorder %s19, 1
        %s677 = scalar_select %p676, %s19, 1
        %s678 = scalar_lea.vmem %s5, %s677
      $region67: #{res_context_block.4} parent=58 // pred_fallthru
        _
      // Predicated region
      $region68: #{res_context_block.4} parent=58 // pred_check
        %p679 = pneg %p183
      $region69: #{res_context_block.4} parent=58 // pred_check_branch
        %681 = sbr.rel (%p679) target = $region71
      $region70: #{res_context_block.4} parent=58 // pred_region
        %p682 = scmp.lt.s32.totalorder %s19, 1
        %s683 = scalar_select %p682, %s19, 1
        %s684 = scalar_lea.vmem %s6, %s683
      $region71: #{res_context_block.4} parent=58 // pred_fallthru
        _
    $region59: #{res_context_block.4} parent=5 // pred_fallthru
      _
  $region6: #{res_context_block.4} parent=0 // loop_footer
    %s17 = sadd.s32 1, %s13
  $region7: #{res_context_block.4} parent=0 // loop_footer_branch
    %12 = sbr.rel target = $region3
  $region8: #{res_context_block.4} parent=0 // loop_exit
    _

// kernel: res_context_block.6
$region0: #{res_context_block.6}
  #allocation0 [shape = 'u32[]', space=smem, size = 0x4, offset = 0x4, fixed_abs, tag = 'smem constant byte address 0x4 - core index']
  #allocation1 [shape = 'u32[144,128]{1,0:T(1,128)}', space=vmem, size = 0x12000, scoped, tag = 'internal scratch']
  %s0 = inlined_call_operand.vmem [shape: f32[32,8,64], index: 0, kind: input, shape index: {}]
  %s1 = inlined_call_operand.vmem [shape: f32[3,64,128], index: 1, kind: input, shape index: {}]
  %s2 = inlined_call_operand.vmem [shape: f32[1,64], index: 2, kind: input, shape index: {}]
  %s3 = inlined_call_operand.vmem [shape: f32[1,64], index: 3, kind: input, shape index: {}]
  %s4 = inlined_call_operand.vmem [shape: f32[32,8,128], index: 4, kind: output, shape index: {0}]
  %s5 = inlined_call_operand.vmem [shape: f32[2,1,128], index: 5, kind: output, shape index: {1}]
  %s6 = inlined_call_operand.vmem [shape: f32[2,1,128], index: 6, kind: output, shape index: {2}]
  %7 = xla_tuple %s4, %s5, %s6
  %s8 = sld [smem:[#allocation0]]
  $region72: #{res_context_block.6} parent=0
    _
  %s10 = ssub.s32 1, %s8
  %s11 = scalar_select 0, %s10, %s8
  loop: start=0, step=1, limit=4
  $region2: #{res_context_block.6} parent=0 // loop_pre_header
    _
  $region3: #{res_context_block.6} parent=0 // loop_header
    %s13 = sphi 0, %s17
    %p14 = scmp.ge.s32.totalorder %s13, 4
    %s23 = sphi 0, %s25
    %s26 = sphi 0, %s23
    %s27 = sphi 0, %s26
    %s43 = sphi 0, %s27
    %s47 = sphi 0, %s47
    %s49 = sphi 0, %s47
    %s50 = sphi 0, %s49
    %s64 = sphi 0, %s50
    %s68 = sphi 0, %s68
    %s70 = sphi 0, %s68
    %s71 = sphi 0, %s70
    %s85 = sphi 0, %s71
    %s89 = sphi 0, %s89
    %s91 = sphi 0, %s89
    %s92 = sphi 0, %s91
    %s106 = sphi 0, %s92
    %s112 = sphi 0, %s114
    %s115 = sphi 0, %s112
    %s116 = sphi 0, %s115
    %s132 = sphi 0, %s116
    %s138 = sphi 0, %s140
    %s141 = sphi 0, %s138
    %s142 = sphi 0, %s141
    %s158 = sphi 0, %s142
    %s164 = sphi 0, %s166
    %s167 = sphi 0, %s164
    %s168 = sphi 0, %s167
    %s184 = sphi 0, %s168
  $region4: #{res_context_block.6} parent=0 // loop_header_branch
    %16 = sbr.rel (%p14) target = $region8
  $region5: #{res_context_block.6} parent=0 // loop_body
    %s18 = ssub.s32 %s13, 1
    %s19 = ssub.s32 %s13, 2
    %s20 = sadd.s32 %s13, 1
    %s21 = ssub.s32 %s13, %s20
    %p22 = scmp.eq.s32.totalorder %s21, 0
    %s24 = sadd.s32 %s23, 1
    %s25 = scalar_select %p22, %s23, %s24
    %p28 = pneg %p22
    %p29 = scmp.eq.s32.totalorder %s13, 1
    %p30 = por %p28, %p29
    %p31 = scmp.ne.s32.totalorder %s23, %s26
    %p32 = scmp.eq.s32.totalorder %s13, 0
    %p33 = por %p31, %p32
    %p34 = scmp.ne.s32.totalorder %s23, %s26
    %p35 = scmp.eq.s32.totalorder %s18, 1
    %p36 = por %p34, %p35
    %p37 = scmp.ne.s32.totalorder %s26, %s27
    %p38 = scmp.eq.s32.totalorder %s18, 0
    %p39 = por %p37, %p38
    %p40 = scmp.ne.s32.totalorder %s26, %s27
    %p41 = scmp.eq.s32.totalorder %s19, 1
    %p42 = por %p40, %p41
    %p44 = scmp.ne.s32.totalorder %s27, %s43
    %p45 = scmp.eq.s32.totalorder %s19, 0
    %p46 = por %p44, %p45
    %s48 = sadd.s32 %s47, 1
    %p51 = scmp.eq.s32.totalorder %s13, 1
    %p52 = scmp.ne.s32.totalorder %s47, %s49
    %p53 = scmp.eq.s32.totalorder %s13, 0
    %p54 = por %p52, %p53
    %p55 = scmp.ne.s32.totalorder %s47, %s49
    %p56 = scmp.eq.s32.totalorder %s18, 1
    %p57 = por %p55, %p56
    %p58 = scmp.ne.s32.totalorder %s49, %s50
    %p59 = scmp.eq.s32.totalorder %s18, 0
    %p60 = por %p58, %p59
    %p61 = scmp.ne.s32.totalorder %s49, %s50
    %p62 = scmp.eq.s32.totalorder %s19, 1
    %p63 = por %p61, %p62
    %p65 = scmp.ne.s32.totalorder %s50, %s64
    %p66 = scmp.eq.s32.totalorder %s19, 0
    %p67 = por %p65, %p66
    %s69 = sadd.s32 %s68, 1
    %p72 = scmp.eq.s32.totalorder %s13, 1
    %p73 = scmp.ne.s32.totalorder %s68, %s70
    %p74 = scmp.eq.s32.totalorder %s13, 0
    %p75 = por %p73, %p74
    %p76 = scmp.ne.s32.totalorder %s68, %s70
    %p77 = scmp.eq.s32.totalorder %s18, 1
    %p78 = por %p76, %p77
    %p79 = scmp.ne.s32.totalorder %s70, %s71
    %p80 = scmp.eq.s32.totalorder %s18, 0
    %p81 = por %p79, %p80
    %p82 = scmp.ne.s32.totalorder %s70, %s71
    %p83 = scmp.eq.s32.totalorder %s19, 1
    %p84 = por %p82, %p83
    %p86 = scmp.ne.s32.totalorder %s71, %s85
    %p87 = scmp.eq.s32.totalorder %s19, 0
    %p88 = por %p86, %p87
    %s90 = sadd.s32 %s89, 1
    %p93 = scmp.eq.s32.totalorder %s13, 1
    %p94 = scmp.ne.s32.totalorder %s89, %s91
    %p95 = scmp.eq.s32.totalorder %s13, 0
    %p96 = por %p94, %p95
    %p97 = scmp.ne.s32.totalorder %s89, %s91
    %p98 = scmp.eq.s32.totalorder %s18, 1
    %p99 = por %p97, %p98
    %p100 = scmp.ne.s32.totalorder %s91, %s92
    %p101 = scmp.eq.s32.totalorder %s18, 0
    %p102 = por %p100, %p101
    %p103 = scmp.ne.s32.totalorder %s91, %s92
    %p104 = scmp.eq.s32.totalorder %s19, 1
    %p105 = por %p103, %p104
    %p107 = scmp.ne.s32.totalorder %s92, %s106
    %p108 = scmp.eq.s32.totalorder %s19, 0
    %p109 = por %p107, %p108
    %s110 = ssub.s32 %s13, %s20
    %p111 = scmp.eq.s32.totalorder %s110, 0
    %s113 = sadd.s32 %s112, 1
    %s114 = scalar_select %p111, %s112, %s113
    %p117 = pneg %p111
    %p118 = scmp.eq.s32.totalorder %s13, 1
    %p119 = por %p117, %p118
    %p120 = scmp.ne.s32.totalorder %s112, %s115
    %p121 = scmp.eq.s32.totalorder %s13, 0
    %p122 = por %p120, %p121
    %p123 = scmp.ne.s32.totalorder %s112, %s115
    %p124 = scmp.eq.s32.totalorder %s18, 1
    %p125 = por %p123, %p124
    %p126 = scmp.ne.s32.totalorder %s115, %s116
    %p127 = scmp.eq.s32.totalorder %s18, 0
    %p128 = por %p126, %p127
    %p129 = scmp.ne.s32.totalorder %s115, %s116
    %p130 = scmp.eq.s32.totalorder %s19, 1
    %p131 = por %p129, %p130
    %p133 = scmp.ne.s32.totalorder %s116, %s132
    %p134 = scmp.eq.s32.totalorder %s19, 0
    %p135 = por %p133, %p134
    %s136 = ssub.s32 %s13, %s20
    %p137 = scmp.eq.s32.totalorder %s136, 0
    %s139 = sadd.s32 %s138, 1
    %s140 = scalar_select %p137, %s138, %s139
    %p143 = pneg %p137
    %p144 = scmp.eq.s32.totalorder %s13, 1
    %p145 = por %p143, %p144
    %p146 = scmp.ne.s32.totalorder %s138, %s141
    %p147 = scmp.eq.s32.totalorder %s13, 0
    %p148 = por %p146, %p147
    %p149 = scmp.ne.s32.totalorder %s138, %s141
    %p150 = scmp.eq.s32.totalorder %s18, 1
    %p151 = por %p149, %p150
    %p152 = scmp.ne.s32.totalorder %s141, %s142
    %p153 = scmp.eq.s32.totalorder %s18, 0
    %p154 = por %p152, %p153
    %p155 = scmp.ne.s32.totalorder %s141, %s142
    %p156 = scmp.eq.s32.totalorder %s19, 1
    %p157 = por %p155, %p156
    %p159 = scmp.ne.s32.totalorder %s142, %s158
    %p160 = scmp.eq.s32.totalorder %s19, 0
    %p161 = por %p159, %p160
    %s162 = ssub.s32 %s13, %s20
    %p163 = scmp.eq.s32.totalorder %s162, 0
    %s165 = sadd.s32 %s164, 1
    %s166 = scalar_select %p163, %s164, %s165
    %p169 = pneg %p163
    %p170 = scmp.eq.s32.totalorder %s13, 1
    %p171 = por %p169, %p170
    %p172 = scmp.ne.s32.totalorder %s164, %s167
    %p173 = scmp.eq.s32.totalorder %s13, 0
    %p174 = por %p172, %p173
    %p175 = scmp.ne.s32.totalorder %s164, %s167
    %p176 = scmp.eq.s32.totalorder %s18, 1
    %p177 = por %p175, %p176
    %p178 = scmp.ne.s32.totalorder %s167, %s168
    %p179 = scmp.eq.s32.totalorder %s18, 0
    %p180 = por %p178, %p179
    %p181 = scmp.ne.s32.totalorder %s167, %s168
    %p182 = scmp.eq.s32.totalorder %s19, 1
    %p183 = por %p181, %p182
    %p185 = scmp.ne.s32.totalorder %s168, %s184
    %p186 = scmp.eq.s32.totalorder %s19, 0
    %p187 = por %p185, %p186
    %p188 = scmp.le.s32.totalorder 1, %s13
    %p189 = scmp.lt.s32.totalorder %s13, 3
    %p190 = pnand %p188, %p189
    %p191 = pneg %p190
    // Predicated region
    $region9: #{res_context_block.6} parent=5 // pred_check
      _
    $region10: #{res_context_block.6} parent=5 // pred_check_branch
      %193 = sbr.rel (%p190) target = $region12
    $region11: #{res_context_block.6} parent=5 // pred_region
      %s194 = ssub.s32 %s13, 1
      // Predicated region
      $region13: #{res_context_block.6} parent=11 // pred_check
        %p195 = pneg %p60
      $region14: #{res_context_block.6} parent=11 // pred_check_branch
        %197 = sbr.rel (%p195) target = $region16
      $region15: #{res_context_block.6} parent=11 // pred_region
        _
      $region16: #{res_context_block.6} parent=11 // pred_fallthru
        _
      // Predicated region
      $region17: #{res_context_block.6} parent=11 // pred_check
        %p198 = pneg %p81
      $region18: #{res_context_block.6} parent=11 // pred_check_branch
        %200 = sbr.rel (%p198) target = $region20
      $region19: #{res_context_block.6} parent=11 // pred_region
        _
      $region20: #{res_context_block.6} parent=11 // pred_fallthru
        _
      // Predicated region
      $region21: #{res_context_block.6} parent=11 // pred_check
        %p201 = pneg %p102
      $region22: #{res_context_block.6} parent=11 // pred_check_branch
        %203 = sbr.rel (%p201) target = $region24
      $region23: #{res_context_block.6} parent=11 // pred_region
        _
      $region24: #{res_context_block.6} parent=11 // pred_fallthru
        _
    $region12: #{res_context_block.6} parent=5 // pred_fallthru
      _
    %p204 = scmp.lt.s32.totalorder %s13, 2
    // Predicated region
    $region25: #{res_context_block.6} parent=5 // pred_check
      %p205 = pneg %p204
    $region26: #{res_context_block.6} parent=5 // pred_check_branch
      %207 = sbr.rel (%p205) target = $region28
    $region27: #{res_context_block.6} parent=5 // pred_region
      // Predicated region
      $region29: #{res_context_block.6} parent=27 // pred_check
        %p208 = pneg %p33
      $region30: #{res_context_block.6} parent=27 // pred_check_branch
        %210 = sbr.rel (%p208) target = $region32
      $region31: #{res_context_block.6} parent=27 // pred_region
        %s211 = smul.u32 16, %s13
        %p212 = scmp.lt.s32.totalorder %s211, 31
        %s213 = scalar_select %p212, %s211, 31
        %s214 = smul.addr %s213, 8
        %s215 = scalar_lea.vmem %s0, %s214
        %s216 = smul.u32 16, %s13
      $region32: #{res_context_block.6} parent=27 // pred_fallthru
        _
    $region28: #{res_context_block.6} parent=5 // pred_fallthru
      _
    %p217 = scmp.le.s32.totalorder 1, %s13
    %p218 = scmp.lt.s32.totalorder %s13, 3
    %p219 = pnand %p217, %p218
    %p220 = pneg %p219
    // Predicated region
    $region33: #{res_context_block.6} parent=5 // pred_check
      _
    $region34: #{res_context_block.6} parent=5 // pred_check_branch
      %222 = sbr.rel (%p219) target = $region36
    $region35: #{res_context_block.6} parent=5 // pred_region
      %s223 = ssub.s32 %s13, 1
      %s224 = smul.u32 16, %s18
      %p225 = scmp.lt.s32.totalorder %s224, 31
      %s226 = scalar_select %p225, %s224, 31
      %s227 = smul.addr %s226, 8
      %s228 = scalar_lea.vmem %s0, %s227
      %p229 = pneg %p39
      %p230 = pneg %p36
      %p231 = pneg %p60
      %p232 = pneg %p57
      %p233 = pneg %p81
      %p234 = pneg %p78
      %p235 = pneg %p102
      %p236 = pneg %p99
      %p237 = pneg %p128
      %p238 = pneg %p125
      %s239 = smul.u32 16, %s18
      %p240 = scmp.lt.s32.totalorder %s239, 31
      %s241 = scalar_select %p240, %s239, 31
      %s242 = smul.addr %s241, 8
      %s243 = scalar_lea.vmem %s4, %s242
      %p244 = pneg %p154
      %p245 = pneg %p151
      %p246 = scmp.lt.s32.totalorder %s18, 1
      %s247 = scalar_select %p246, %s18, 1
      %s248 = scalar_lea.vmem %s5, %s247
      %p249 = pneg %p180
      %p250 = pneg %p177
      %p251 = scmp.lt.s32.totalorder %s18, 1
      %s252 = scalar_select %p251, %s18, 1
      %s253 = scalar_lea.vmem %s6, %s252
      %s254 = smul.u32 16, %s18
      %p255 = scmp.lt.s32.totalorder %s254, 31
      %s256 = scalar_select %p255, %s254, 31
      %s257 = smul.addr %s256, 8
      %s258 = scalar_lea.vmem %s0, %s257
      %s259 = smul.u32 16, %s18
      %s260 = smul.u32 16, %s18
      %p261 = scmp.lt.s32.totalorder %s260, 31
      %s262 = scalar_select %p261, %s260, 31
      %s263 = smul.addr %s262, 8
      %s264 = scalar_lea.vmem %s4, %s263
      %s265 = smul.u32 16, %s18
      %p266 = scmp.lt.s32.totalorder %s18, 1
      %s267 = scalar_select %p266, %s18, 1
      %s268 = scalar_lea.vmem %s5, %s267
      %p269 = scmp.lt.s32.totalorder %s18, 1
      %s270 = scalar_select %p269, %s18, 1
      %s271 = scalar_lea.vmem %s6, %s270
      %v272 = vld [vmem:[%s2] sm:$0x1]
      %v273 = vld [vmem:[%s3] sm:$0x1]
      %v274 = vlaneseq
      %v275 = vshrl.u32 %v274, 7
      loop: start=0, step=1, limit=16
      $region37: #{res_context_block.6} parent=35 // loop_pre_header
        _
      $region38: #{res_context_block.6} parent=35 // loop_header
        %s277 = sphi 0, %s281
        %p278 = scmp.ge.s32.totalorder %s277, 16
        %v282 = vphi 0.0, %v569
        %v283 = vphi 0.0, %v577
      $region39: #{res_context_block.6} parent=35 // loop_header_branch
        %280 = sbr.rel (%p278) target = $region43
      $region40: #{res_context_block.6} parent=35 // loop_body
        %s284 = smul.u32 %s277, 8
        %s285 = scalar_lea.vmem %s258, %s284
        %v286 = vld [vmem:[%s285] sm:$0xff]
        %v288 = vlaneseq
        %v289 = vshrl.u32 %v288, 7
        %v290 = vsub.s32 0, %v289
        %v291 = vrot.slane %v272, %v290
        %v293 = vmul.f32 %v286, %v291
        %v295 = vlaneseq
        %v296 = vshrl.u32 %v295, 7
        %v297 = vsub.s32 0, %v296
        %v298 = vrot.slane %v273, %v297
        %v300 = vadd.f32 %v293, %v298
        %vm301 = vcmp.ge.s32.totalorder %v275, 1
        %v302 = vrot.slane %v300, 7
        %v303 = vsel %vm301, 1, 0
        %vm304 = vcmp.eq.s32.totalorder %v303, 1
        %v305 = vsel %vm304, %v302, 0.0
        %vm306 = vcmp.le.s32.totalorder %v275, 6
        %v307 = vrot.slane %v300, 1
        %v308 = vsel %vm306, 1, 0
        %vm309 = vcmp.eq.s32.totalorder %v308, 1
        %v310 = vsel %vm309, %v307, 0.0
        %v311 = vld [vmem:[%s1] sm:$0xff]
        %v312 = vld [vmem:[%s1 + $0x8] sm:$0xff]
        %v313 = vld [vmem:[%s1 + $0x10] sm:$0xff]
        %v314 = vld [vmem:[%s1 + $0x18] sm:$0xff]
        %v315 = vld [vmem:[%s1 + $0x20] sm:$0xff]
        %v316 = vld [vmem:[%s1 + $0x28] sm:$0xff]
        %v317 = vld [vmem:[%s1 + $0x30] sm:$0xff]
        %v318 = vld [vmem:[%s1 + $0x38] sm:$0xff]
        %s319 = scalar_lea.vmem %s1, 64
        %v320 = vld [vmem:[%s319] sm:$0xff]
        %v321 = vld [vmem:[%s319 + $0x8] sm:$0xff]
        %v322 = vld [vmem:[%s319 + $0x10] sm:$0xff]
        %v323 = vld [vmem:[%s319 + $0x18] sm:$0xff]
        %v324 = vld [vmem:[%s319 + $0x20] sm:$0xff]
        %v325 = vld [vmem:[%s319 + $0x28] sm:$0xff]
        %v326 = vld [vmem:[%s319 + $0x30] sm:$0xff]
        %v327 = vld [vmem:[%s319 + $0x38] sm:$0xff]
        %vm328 = vcmask 523264
        %v330 = vsel %vm328, %v300, 0
        %332 = vmatprep.subr.mxu0 0.0
        %333 = vmatpush1.msra.mxu0 0.0
        %334 = vmatprep.subr.mxu0 0.0
        %335 = vmatpush1.msra.mxu0 0.0
        %336 = vmatprep.subr.mxu0 0.0
        %337 = vmatpush1.msra.mxu0 0.0
        %338 = vmatprep.subr.mxu0 0.0
        %339 = vmatpush1.msra.mxu0 0.0
        %340 = vmatprep.subr.mxu0 0.0
        %341 = vmatpush1.msra.mxu0 0.0
        %342 = vmatprep.subr.mxu0 0.0
        %343 = vmatpush1.msra.mxu0 0.0
        %344 = vmatprep.subr.mxu0 0.0
        %345 = vmatpush1.msra.mxu0 0.0
        %346 = vmatprep.subr.mxu0 0.0
        %347 = vmatpush1.msra.mxu0 0.0
        %348 = vmatprep.subr.mxu0 0.0
        %349 = vmatpush1.msra.mxu0 %v327
        %350 = vmatprep.subr.mxu0 0.0
        %351 = vmatpush1.msra.mxu0 %v326
        %352 = vmatprep.subr.mxu0 0.0
        %353 = vmatpush1.msra.mxu0 %v325
        %354 = vmatprep.subr.mxu0 0.0
        %355 = vmatpush1.msra.mxu0 %v324
        %356 = vmatprep.subr.mxu0 0.0
        %357 = vmatpush1.msra.mxu0 %v323
        %358 = vmatprep.subr.mxu0 0.0
        %359 = vmatpush1.msra.mxu0 %v322
        %360 = vmatprep.subr.mxu0 0.0
        %361 = vmatpush1.msra.mxu0 %v321
        %362 = vmatprep.subr.mxu0 0.0
        %363 = vmatpush1.msra.mxu0 %v320
        %364 = vmatprep.subr.mxu0 0.0
        %365 = vmatpush2.msra.mxu0 0.0
        %366 = vmatprep.subr.mxu0 0.0
        %367 = vmatpush2.msra.mxu0 0.0
        %368 = vmatprep.subr.mxu0 0.0
        %369 = vmatpush2.msra.mxu0 0.0
        %370 = vmatprep.subr.mxu0 0.0
        %371 = vmatpush2.msra.mxu0 0.0
        %372 = vmatprep.subr.mxu0 0.0
        %373 = vmatpush2.msra.mxu0 0.0
        %374 = vmatprep.subr.mxu0 0.0
        %375 = vmatpush2.msra.mxu0 0.0
        %376 = vmatprep.subr.mxu0 0.0
        %377 = vmatpush2.msra.mxu0 0.0
        %378 = vmatprep.subr.mxu0 0.0
        %379 = vmatpush2.msra.mxu0 0.0
        %380 = vmatprep.subr.mxu0 0.0
        %381 = vmatpush2.msra.mxu0 0.0
        %382 = vmatprep.subr.mxu0 0.0
        %383 = vmatpush2.msra.mxu0 0.0
        %384 = vmatprep.subr.mxu0 0.0
        %385 = vmatpush2.msra.mxu0 0.0
        %386 = vmatprep.subr.mxu0 0.0
        %387 = vmatpush2.msra.mxu0 0.0
        %388 = vmatprep.subr.mxu0 0.0
        %389 = vmatpush2.msra.mxu0 0.0
        %390 = vmatprep.subr.mxu0 0.0
        %391 = vmatpush2.msra.mxu0 0.0
        %392 = vmatprep.subr.mxu0 0.0
        %393 = vmatpush2.msra.mxu0 0.0
        %394 = vmatprep.subr.mxu0 0.0
        %395 = vmatpush2.msra.mxu0 0.0
        %396 = vmatprep.mubr.f32.mxu0 0.0
        %397 = vmatmul.mubr.f32.gmra.mxu0 %v330
        %v398 = vpop.f32.mrf.mxu0
        %v399 = vadd.f32 0.0, %v398
        %v400 = vpop.f32.mrf.mxu0
        %401 = vdwg.mxu0
        %v403 = vsel %vm328, %v305, 0
        %405 = vmatprep.subr.mxu0 0.0
        %406 = vmatpush1.msra.mxu0 0.0
        %407 = vmatprep.subr.mxu0 0.0
        %408 = vmatpush1.msra.mxu0 0.0
        %409 = vmatprep.subr.mxu0 0.0
        %410 = vmatpush1.msra.mxu0 0.0
        %411 = vmatprep.subr.mxu0 0.0
        %412 = vmatpush1.msra.mxu0 0.0
        %413 = vmatprep.subr.mxu0 0.0
        %414 = vmatpush1.msra.mxu0 0.0
        %415 = vmatprep.subr.mxu0 0.0
        %416 = vmatpush1.msra.mxu0 0.0
        %417 = vmatprep.subr.mxu0 0.0
        %418 = vmatpush1.msra.mxu0 0.0
        %419 = vmatprep.subr.mxu0 0.0
        %420 = vmatpush1.msra.mxu0 0.0
        %421 = vmatprep.subr.mxu0 0.0
        %422 = vmatpush1.msra.mxu0 %v318
        %423 = vmatprep.subr.mxu0 0.0
        %424 = vmatpush1.msra.mxu0 %v317
        %425 = vmatprep.subr.mxu0 0.0
        %426 = vmatpush1.msra.mxu0 %v316
        %427 = vmatprep.subr.mxu0 0.0
        %428 = vmatpush1.msra.mxu0 %v315
        %429 = vmatprep.subr.mxu0 0.0
        %430 = vmatpush1.msra.mxu0 %v314
        %431 = vmatprep.subr.mxu0 0.0
        %432 = vmatpush1.msra.mxu0 %v313
        %433 = vmatprep.subr.mxu0 0.0
        %434 = vmatpush1.msra.mxu0 %v312
        %435 = vmatprep.subr.mxu0 0.0
        %436 = vmatpush1.msra.mxu0 %v311
        %437 = vmatprep.subr.mxu0 0.0
        %438 = vmatpush2.msra.mxu0 0.0
        %439 = vmatprep.subr.mxu0 0.0
        %440 = vmatpush2.msra.mxu0 0.0
        %441 = vmatprep.subr.mxu0 0.0
        %442 = vmatpush2.msra.mxu0 0.0
        %443 = vmatprep.subr.mxu0 0.0
        %444 = vmatpush2.msra.mxu0 0.0
        %445 = vmatprep.subr.mxu0 0.0
        %446 = vmatpush2.msra.mxu0 0.0
        %447 = vmatprep.subr.mxu0 0.0
        %448 = vmatpush2.msra.mxu0 0.0
        %449 = vmatprep.subr.mxu0 0.0
        %450 = vmatpush2.msra.mxu0 0.0
        %451 = vmatprep.subr.mxu0 0.0
        %452 = vmatpush2.msra.mxu0 0.0
        %453 = vmatprep.subr.mxu0 0.0
        %454 = vmatpush2.msra.mxu0 0.0
        %455 = vmatprep.subr.mxu0 0.0
        %456 = vmatpush2.msra.mxu0 0.0
        %457 = vmatprep.subr.mxu0 0.0
        %458 = vmatpush2.msra.mxu0 0.0
        %459 = vmatprep.subr.mxu0 0.0
        %460 = vmatpush2.msra.mxu0 0.0
        %461 = vmatprep.subr.mxu0 0.0
        %462 = vmatpush2.msra.mxu0 0.0
        %463 = vmatprep.subr.mxu0 0.0
        %464 = vmatpush2.msra.mxu0 0.0
        %465 = vmatprep.subr.mxu0 0.0
        %466 = vmatpush2.msra.mxu0 0.0
        %467 = vmatprep.subr.mxu0 0.0
        %468 = vmatpush2.msra.mxu0 0.0
        %469 = vmatprep.mubr.f32.mxu0 0.0
        %470 = vmatmul.mubr.f32.gmra.mxu0 %v403
        %v471 = vpop.f32.mrf.mxu0
        %v472 = vadd.f32 %v399, %v471
        %v473 = vpop.f32.mrf.mxu0
        %474 = vdwg.mxu0
        %s475 = scalar_lea.vmem %s1, 128
        %v476 = vld [vmem:[%s475] sm:$0xff]
        %v477 = vld [vmem:[%s475 + $0x8] sm:$0xff]
        %v478 = vld [vmem:[%s475 + $0x10] sm:$0xff]
        %v479 = vld [vmem:[%s475 + $0x18] sm:$0xff]
        %v480 = vld [vmem:[%s475 + $0x20] sm:$0xff]
        %v481 = vld [vmem:[%s475 + $0x28] sm:$0xff]
        %v482 = vld [vmem:[%s475 + $0x30] sm:$0xff]
        %v483 = vld [vmem:[%s475 + $0x38] sm:$0xff]
        %v485 = vsel %vm328, %v310, 0
        %487 = vmatprep.subr.mxu0 0.0
        %488 = vmatpush1.msra.mxu0 0.0
        %489 = vmatprep.subr.mxu0 0.0
        %490 = vmatpush1.msra.mxu0 0.0
        %491 = vmatprep.subr.mxu0 0.0
        %492 = vmatpush1.msra.mxu0 0.0
        %493 = vmatprep.subr.mxu0 0.0
        %494 = vmatpush1.msra.mxu0 0.0
        %495 = vmatprep.subr.mxu0 0.0
        %496 = vmatpush1.msra.mxu0 0.0
        %497 = vmatprep.subr.mxu0 0.0
        %498 = vmatpush1.msra.mxu0 0.0
        %499 = vmatprep.subr.mxu0 0.0
        %500 = vmatpush1.msra.mxu0 0.0
        %501 = vmatprep.subr.mxu0 0.0
        %502 = vmatpush1.msra.mxu0 0.0
        %503 = vmatprep.subr.mxu0 0.0
        %504 = vmatpush1.msra.mxu0 %v483
        %505 = vmatprep.subr.mxu0 0.0
        %506 = vmatpush1.msra.mxu0 %v482
        %507 = vmatprep.subr.mxu0 0.0
        %508 = vmatpush1.msra.mxu0 %v481
        %509 = vmatprep.subr.mxu0 0.0
        %510 = vmatpush1.msra.mxu0 %v480
        %511 = vmatprep.subr.mxu0 0.0
        %512 = vmatpush1.msra.mxu0 %v479
        %513 = vmatprep.subr.mxu0 0.0
        %514 = vmatpush1.msra.mxu0 %v478
        %515 = vmatprep.subr.mxu0 0.0
        %516 = vmatpush1.msra.mxu0 %v477
        %517 = vmatprep.subr.mxu0 0.0
        %518 = vmatpush1.msra.mxu0 %v476
        %519 = vmatprep.subr.mxu0 0.0
        %520 = vmatpush2.msra.mxu0 0.0
        %521 = vmatprep.subr.mxu0 0.0
        %522 = vmatpush2.msra.mxu0 0.0
        %523 = vmatprep.subr.mxu0 0.0
        %524 = vmatpush2.msra.mxu0 0.0
        %525 = vmatprep.subr.mxu0 0.0
        %526 = vmatpush2.msra.mxu0 0.0
        %527 = vmatprep.subr.mxu0 0.0
        %528 = vmatpush2.msra.mxu0 0.0
        %529 = vmatprep.subr.mxu0 0.0
        %530 = vmatpush2.msra.mxu0 0.0
        %531 = vmatprep.subr.mxu0 0.0
        %532 = vmatpush2.msra.mxu0 0.0
        %533 = vmatprep.subr.mxu0 0.0
        %534 = vmatpush2.msra.mxu0 0.0
        %535 = vmatprep.subr.mxu0 0.0
        %536 = vmatpush2.msra.mxu0 0.0
        %537 = vmatprep.subr.mxu0 0.0
        %538 = vmatpush2.msra.mxu0 0.0
        %539 = vmatprep.subr.mxu0 0.0
        %540 = vmatpush2.msra.mxu0 0.0
        %541 = vmatprep.subr.mxu0 0.0
        %542 = vmatpush2.msra.mxu0 0.0
        %543 = vmatprep.subr.mxu0 0.0
        %544 = vmatpush2.msra.mxu0 0.0
        %545 = vmatprep.subr.mxu0 0.0
        %546 = vmatpush2.msra.mxu0 0.0
        %547 = vmatprep.subr.mxu0 0.0
        %548 = vmatpush2.msra.mxu0 0.0
        %549 = vmatprep.subr.mxu0 0.0
        %550 = vmatpush2.msra.mxu0 0.0
        %551 = vmatprep.mubr.f32.mxu0 0.0
        %552 = vmatmul.mubr.f32.gmra.mxu0 %v485
        %v553 = vpop.f32.mrf.mxu0
        %v554 = vadd.f32 0.0, %v553
        %v555 = vpop.f32.mrf.mxu0
        %556 = vdwg.mxu0
        %v557 = vadd.f32 %v472, %v554
        %vm558 = vcmp.ge.f32.partialorder %v557, 0.0
        %v559 = vmul.f32 %v557, 0.01
        %v560 = vsel %vm558, %v557, %v559
        %s561 = scalar_lea.vmem %s264, %s284
        %562 = vst [vmem:[%s561] sm:$0xff] %v560
        %v563 = vrot.slane %v560, 4
        %v564 = vadd.f32 %v560, %v563
        %v565 = vrot.slane %v564, 2
        %v566 = vadd.f32 %v564, %v565
        %v567 = vrot.slane %v566, 1
        %v568 = vadd.f32 %v566, %v567
        %v569 = vadd.f32 %v282, %v568
        %v570 = vmul.f32 %v560, %v560
        %v571 = vrot.slane %v570, 4
        %v572 = vadd.f32 %v570, %v571
        %v573 = vrot.slane %v572, 2
        %v574 = vadd.f32 %v572, %v573
        %v575 = vrot.slane %v574, 1
        %v576 = vadd.f32 %v574, %v575
        %v577 = vadd.f32 %v283, %v576
      $region41: #{res_context_block.6} parent=35 // loop_footer
        %s281 = sadd.s32 1, %s277
      $region42: #{res_context_block.6} parent=35 // loop_footer_branch
        %276 = sbr.rel target = $region38
      $region43: #{res_context_block.6} parent=35 // loop_exit
        _
      %578 = vst [vmem:[%s268] sm:$0x1] %v282
      %579 = vst [vmem:[%s271] sm:$0x1] %v283
      %s580 = smul.u32 16, %s18
      %p581 = scmp.lt.s32.totalorder %s580, 31
      %s582 = scalar_select %p581, %s580, 31
      %s583 = smul.addr %s582, 8
      %s584 = scalar_lea.vmem %s4, %s583
      %p585 = scmp.lt.s32.totalorder %s18, 1
      %s586 = scalar_select %p585, %s18, 1
      %s587 = scalar_lea.vmem %s5, %s586
      %p588 = scmp.lt.s32.totalorder %s18, 1
      %s589 = scalar_select %p588, %s18, 1
      %s590 = scalar_lea.vmem %s6, %s589
      // Predicated region
      $region44: #{res_context_block.6} parent=35 // pred_check
        %p591 = pneg %p125
      $region45: #{res_context_block.6} parent=35 // pred_check_branch
        %593 = sbr.rel (%p591) target = $region47
      $region46: #{res_context_block.6} parent=35 // pred_region
        %s594 = smul.u32 16, %s18
      $region47: #{res_context_block.6} parent=35 // pred_fallthru
        _
      // Predicated region
      $region48: #{res_context_block.6} parent=35 // pred_check
        %p595 = pneg %p151
      $region49: #{res_context_block.6} parent=35 // pred_check_branch
        %597 = sbr.rel (%p595) target = $region51
      $region50: #{res_context_block.6} parent=35 // pred_region
        _
      $region51: #{res_context_block.6} parent=35 // pred_fallthru
        _
      // Predicated region
      $region52: #{res_context_block.6} parent=35 // pred_check
        %p598 = pneg %p177
      $region53: #{res_context_block.6} parent=35 // pred_check_branch
        %600 = sbr.rel (%p598) target = $region55
      $region54: #{res_context_block.6} parent=35 // pred_region
        _
      $region55: #{res_context_block.6} parent=35 // pred_fallthru
        _
    $region36: #{res_context_block.6} parent=5 // pred_fallthru
      _
    %p601 = scmp.le.s32.totalorder 2, %s13
    // Predicated region
    $region56: #{res_context_block.6} parent=5 // pred_check
      %p602 = pneg %p601
    $region57: #{res_context_block.6} parent=5 // pred_check_branch
      %604 = sbr.rel (%p602) target = $region59
    $region58: #{res_context_block.6} parent=5 // pred_region
      %s605 = ssub.s32 %s13, 2
      // Predicated region
      $region60: #{res_context_block.6} parent=58 // pred_check
        %p606 = pneg %p131
      $region61: #{res_context_block.6} parent=58 // pred_check_branch
        %608 = sbr.rel (%p606) target = $region63
      $region62: #{res_context_block.6} parent=58 // pred_region
        %s609 = smul.u32 16, %s19
        %p610 = scmp.lt.s32.totalorder %s609, 31
        %s611 = scalar_select %p610, %s609, 31
        %s612 = smul.addr %s611, 8
        %s613 = scalar_lea.vmem %s4, %s612
      $region63: #{res_context_block.6} parent=58 // pred_fallthru
        _
      // Predicated region
      $region64: #{res_context_block.6} parent=58 // pred_check
        %p614 = pneg %p157
      $region65: #{res_context_block.6} parent=58 // pred_check_branch
        %616 = sbr.rel (%p614) target = $region67
      $region66: #{res_context_block.6} parent=58 // pred_region
        %p617 = scmp.lt.s32.totalorder %s19, 1
        %s618 = scalar_select %p617, %s19, 1
        %s619 = scalar_lea.vmem %s5, %s618
      $region67: #{res_context_block.6} parent=58 // pred_fallthru
        _
      // Predicated region
      $region68: #{res_context_block.6} parent=58 // pred_check
        %p620 = pneg %p183
      $region69: #{res_context_block.6} parent=58 // pred_check_branch
        %622 = sbr.rel (%p620) target = $region71
      $region70: #{res_context_block.6} parent=58 // pred_region
        %p623 = scmp.lt.s32.totalorder %s19, 1
        %s624 = scalar_select %p623, %s19, 1
        %s625 = scalar_lea.vmem %s6, %s624
      $region71: #{res_context_block.6} parent=58 // pred_fallthru
        _
    $region59: #{res_context_block.6} parent=5 // pred_fallthru
      _
  $region6: #{res_context_block.6} parent=0 // loop_footer
    %s17 = sadd.s32 1, %s13
  $region7: #{res_context_block.6} parent=0 // loop_footer_branch
    %12 = sbr.rel target = $region3
  $region8: #{res_context_block.6} parent=0 // loop_exit
    _

// kernel: mul.27
$region0: #{mul.27}
  %s0 = inlined_call_operand.vmem [shape: f32[16,8], index: 0, kind: input, shape index: {}]
  %s1 = inlined_call_operand.vmem [shape: f32[128], index: 1, kind: output, shape index: {}]
  $region1: #{mul.27} parent=0
    #allocation0 [shape = 'u8[4096]{0}', space=vmem, size = 0x1000, scoped, tag = 'scoped mem for output reshape']
    %v2 = vld [vmem:[%s0] sm:$0x1]
    %vm3 = vcmask 64512
    %4 = vst.msk [vmem:[#allocation0] sm:$0x1] %vm3, %v2
    %s5 = scalar_lea.vmem %s0, 15
    %v6 = vld [vmem:[%s5] sm:$0x1]
    %7 = vrot.lane.b32.xlu0 %v6, 120
    %v8 = vpop.permute.xlu0 %7
    %vm9 = vcmask 1048512
    %10 = vst.msk [vmem:[#allocation0] sm:$0x1] %vm9, %v8
    %s11 = scalar_lea.vmem %s0, 14
    %v12 = vld [vmem:[%s11] sm:$0x1]
    %13 = vrot.lane.b32.xlu0 %v12, 112
    %v14 = vpop.permute.xlu0 %13
    %vm15 = vcmask 982912
    %16 = vst.msk [vmem:[#allocation0] sm:$0x1] %vm15, %v14
    %s17 = scalar_lea.vmem %s0, 13
    %v18 = vld [vmem:[%s17] sm:$0x1]
    %19 = vrot.lane.b32.xlu0 %v18, 104
    %v20 = vpop.permute.xlu0 %19
    %vm21 = vcmask 917312
    %22 = vst.msk [vmem:[#allocation0] sm:$0x1] %vm21, %v20
    %s23 = scalar_lea.vmem %s0, 12
    %v24 = vld [vmem:[%s23] sm:$0x1]
    %25 = vrot.lane.b32.xlu0 %v24, 96
    %v26 = vpop.permute.xlu0 %25
    %vm27 = vcmask 851712
    %28 = vst.msk [vmem:[#allocation0] sm:$0x1] %vm27, %v26
    %s29 = scalar_lea.vmem %s0, 11
    %v30 = vld [vmem:[%s29] sm:$0x1]
    %31 = vrot.lane.b32.xlu0 %v30, 88
    %v32 = vpop.permute.xlu0 %31
    %vm33 = vcmask 786112
    %34 = vst.msk [vmem:[#allocation0] sm:$0x1] %vm33, %v32
    %s35 = scalar_lea.vmem %s0, 10
    %v36 = vld [vmem:[%s35] sm:$0x1]
    %37 = vrot.lane.b32.xlu0 %v36, 80
    %v38 = vpop.permute.xlu0 %37
    %vm39 = vcmask 720512
    %40 = vst.msk [vmem:[#allocation0] sm:$0x1] %vm39, %v38
    %s41 = scalar_lea.vmem %s0, 9
    %v42 = vld [vmem:[%s41] sm:$0x1]
    %43 = vrot.lane.b32.xlu0 %v42, 72
    %v44 = vpop.permute.xlu0 %43
    %vm45 = vcmask 654912
    %46 = vst.msk [vmem:[#allocation0] sm:$0x1] %vm45, %v44
    %s47 = scalar_lea.vmem %s0, 8
    %v48 = vld [vmem:[%s47] sm:$0x1]
    %49 = vrot.lane.b32.xlu0 %v48, 64
    %v50 = vpop.permute.xlu0 %49
    %vm51 = vcmask 589312
    %52 = vst.msk [vmem:[#allocation0] sm:$0x1] %vm51, %v50
    %s53 = scalar_lea.vmem %s0, 7
    %v54 = vld [vmem:[%s53] sm:$0x1]
    %55 = vrot.lane.b32.xlu0 %v54, 56
    %v56 = vpop.permute.xlu0 %55
    %vm57 = vcmask 523712
    %58 = vst.msk [vmem:[#allocation0] sm:$0x1] %vm57, %v56
    %s59 = scalar_lea.vmem %s0, 6
    %v60 = vld [vmem:[%s59] sm:$0x1]
    %61 = vrot.lane.b32.xlu0 %v60, 48
    %v62 = vpop.permute.xlu0 %61
    %vm63 = vcmask 458112
    %64 = vst.msk [vmem:[#allocation0] sm:$0x1] %vm63, %v62
    %s65 = scalar_lea.vmem %s0, 5
    %v66 = vld [vmem:[%s65] sm:$0x1]
    %67 = vrot.lane.b32.xlu0 %v66, 40
    %v68 = vpop.permute.xlu0 %67
    %vm69 = vcmask 392512
    %70 = vst.msk [vmem:[#allocation0] sm:$0x1] %vm69, %v68
    %s71 = scalar_lea.vmem %s0, 4
    %v72 = vld [vmem:[%s71] sm:$0x1]
    %73 = vrot.lane.b32.xlu0 %v72, 32
    %v74 = vpop.permute.xlu0 %73
    %vm75 = vcmask 326912
    %76 = vst.msk [vmem:[#allocation0] sm:$0x1] %vm75, %v74
    %s77 = scalar_lea.vmem %s0, 3
    %v78 = vld [vmem:[%s77] sm:$0x1]
    %79 = vrot.lane.b32.xlu0 %v78, 24
    %v80 = vpop.permute.xlu0 %79
    %vm81 = vcmask 261312
    %82 = vst.msk [vmem:[#allocation0] sm:$0x1] %vm81, %v80
    %s83 = scalar_lea.vmem %s0, 2
    %v84 = vld [vmem:[%s83] sm:$0x1]
    %85 = vrot.lane.b32.xlu0 %v84, 16
    %v86 = vpop.permute.xlu0 %85
    %vm87 = vcmask 195712
    %88 = vst.msk [vmem:[#allocation0] sm:$0x1] %vm87, %v86
    %s89 = scalar_lea.vmem %s0, 1
    %v90 = vld [vmem:[%s89] sm:$0x1]
    %91 = vrot.lane.b32.xlu0 %v90, 8
    %v92 = vpop.permute.xlu0 %91
    %vm93 = vcmask 130112
    %94 = vst.msk [vmem:[#allocation0] sm:$0x1] %vm93, %v92
    %s96 = sshll.u32 1, 1
    %s97 = ssub.s32 %s96, 1
    %v99 = vld [vmem:[#allocation0] sm:%s97]
    %s100 = sshll.u32 1, 1
    %s101 = ssub.s32 %s100, 1
    %102 = vst [vmem:[%s1] sm:%s101] %v99

// kernel: res_context_block.5
$region0: #{res_context_block.5}
  #allocation0 [shape = 'u32[]', space=smem, size = 0x4, offset = 0x4, fixed_abs, tag = 'smem constant byte address 0x4 - core index']
  #allocation1 [shape = 'u32[144,128]{1,0:T(1,128)}', space=vmem, size = 0x12000, scoped, tag = 'internal scratch']
  %s0 = inlined_call_operand.vmem [shape: f32[16,16,128], index: 0, kind: input, shape index: {}]
  %s1 = inlined_call_operand.vmem [shape: f32[3,128,128], index: 1, kind: input, shape index: {}]
  %s2 = inlined_call_operand.vmem [shape: f32[1,128], index: 2, kind: input, shape index: {}]
  %s3 = inlined_call_operand.vmem [shape: f32[1,128], index: 3, kind: input, shape index: {}]
  %s4 = inlined_call_operand.vmem [shape: f32[16,16,128], index: 4, kind: output, shape index: {0}]
  %s5 = inlined_call_operand.vmem [shape: f32[2,1,128], index: 5, kind: output, shape index: {1}]
  %s6 = inlined_call_operand.vmem [shape: f32[2,1,128], index: 6, kind: output, shape index: {2}]
  %7 = xla_tuple %s4, %s5, %s6
  %s8 = sld [smem:[#allocation0]]
  $region72: #{res_context_block.5} parent=0
    _
  %s10 = ssub.s32 1, %s8
  %s11 = scalar_select 0, %s10, %s8
  loop: start=0, step=1, limit=4
  $region2: #{res_context_block.5} parent=0 // loop_pre_header
    _
  $region3: #{res_context_block.5} parent=0 // loop_header
    %s13 = sphi 0, %s17
    %p14 = scmp.ge.s32.totalorder %s13, 4
    %s23 = sphi 0, %s25
    %s26 = sphi 0, %s23
    %s27 = sphi 0, %s26
    %s43 = sphi 0, %s27
    %s47 = sphi 0, %s47
    %s49 = sphi 0, %s47
    %s50 = sphi 0, %s49
    %s64 = sphi 0, %s50
    %s68 = sphi 0, %s68
    %s70 = sphi 0, %s68
    %s71 = sphi 0, %s70
    %s85 = sphi 0, %s71
    %s89 = sphi 0, %s89
    %s91 = sphi 0, %s89
    %s92 = sphi 0, %s91
    %s106 = sphi 0, %s92
    %s112 = sphi 0, %s114
    %s115 = sphi 0, %s112
    %s116 = sphi 0, %s115
    %s132 = sphi 0, %s116
    %s138 = sphi 0, %s140
    %s141 = sphi 0, %s138
    %s142 = sphi 0, %s141
    %s158 = sphi 0, %s142
    %s164 = sphi 0, %s166
    %s167 = sphi 0, %s164
    %s168 = sphi 0, %s167
    %s184 = sphi 0, %s168
  $region4: #{res_context_block.5} parent=0 // loop_header_branch
    %16 = sbr.rel (%p14) target = $region8
  $region5: #{res_context_block.5} parent=0 // loop_body
    %s18 = ssub.s32 %s13, 1
    %s19 = ssub.s32 %s13, 2
    %s20 = sadd.s32 %s13, 1
    %s21 = ssub.s32 %s13, %s20
    %p22 = scmp.eq.s32.totalorder %s21, 0
    %s24 = sadd.s32 %s23, 1
    %s25 = scalar_select %p22, %s23, %s24
    %p28 = pneg %p22
    %p29 = scmp.eq.s32.totalorder %s13, 1
    %p30 = por %p28, %p29
    %p31 = scmp.ne.s32.totalorder %s23, %s26
    %p32 = scmp.eq.s32.totalorder %s13, 0
    %p33 = por %p31, %p32
    %p34 = scmp.ne.s32.totalorder %s23, %s26
    %p35 = scmp.eq.s32.totalorder %s18, 1
    %p36 = por %p34, %p35
    %p37 = scmp.ne.s32.totalorder %s26, %s27
    %p38 = scmp.eq.s32.totalorder %s18, 0
    %p39 = por %p37, %p38
    %p40 = scmp.ne.s32.totalorder %s26, %s27
    %p41 = scmp.eq.s32.totalorder %s19, 1
    %p42 = por %p40, %p41
    %p44 = scmp.ne.s32.totalorder %s27, %s43
    %p45 = scmp.eq.s32.totalorder %s19, 0
    %p46 = por %p44, %p45
    %s48 = sadd.s32 %s47, 1
    %p51 = scmp.eq.s32.totalorder %s13, 1
    %p52 = scmp.ne.s32.totalorder %s47, %s49
    %p53 = scmp.eq.s32.totalorder %s13, 0
    %p54 = por %p52, %p53
    %p55 = scmp.ne.s32.totalorder %s47, %s49
    %p56 = scmp.eq.s32.totalorder %s18, 1
    %p57 = por %p55, %p56
    %p58 = scmp.ne.s32.totalorder %s49, %s50
    %p59 = scmp.eq.s32.totalorder %s18, 0
    %p60 = por %p58, %p59
    %p61 = scmp.ne.s32.totalorder %s49, %s50
    %p62 = scmp.eq.s32.totalorder %s19, 1
    %p63 = por %p61, %p62
    %p65 = scmp.ne.s32.totalorder %s50, %s64
    %p66 = scmp.eq.s32.totalorder %s19, 0
    %p67 = por %p65, %p66
    %s69 = sadd.s32 %s68, 1
    %p72 = scmp.eq.s32.totalorder %s13, 1
    %p73 = scmp.ne.s32.totalorder %s68, %s70
    %p74 = scmp.eq.s32.totalorder %s13, 0
    %p75 = por %p73, %p74
    %p76 = scmp.ne.s32.totalorder %s68, %s70
    %p77 = scmp.eq.s32.totalorder %s18, 1
    %p78 = por %p76, %p77
    %p79 = scmp.ne.s32.totalorder %s70, %s71
    %p80 = scmp.eq.s32.totalorder %s18, 0
    %p81 = por %p79, %p80
    %p82 = scmp.ne.s32.totalorder %s70, %s71
    %p83 = scmp.eq.s32.totalorder %s19, 1
    %p84 = por %p82, %p83
    %p86 = scmp.ne.s32.totalorder %s71, %s85
    %p87 = scmp.eq.s32.totalorder %s19, 0
    %p88 = por %p86, %p87
    %s90 = sadd.s32 %s89, 1
    %p93 = scmp.eq.s32.totalorder %s13, 1
    %p94 = scmp.ne.s32.totalorder %s89, %s91
    %p95 = scmp.eq.s32.totalorder %s13, 0
    %p96 = por %p94, %p95
    %p97 = scmp.ne.s32.totalorder %s89, %s91
    %p98 = scmp.eq.s32.totalorder %s18, 1
    %p99 = por %p97, %p98
    %p100 = scmp.ne.s32.totalorder %s91, %s92
    %p101 = scmp.eq.s32.totalorder %s18, 0
    %p102 = por %p100, %p101
    %p103 = scmp.ne.s32.totalorder %s91, %s92
    %p104 = scmp.eq.s32.totalorder %s19, 1
    %p105 = por %p103, %p104
    %p107 = scmp.ne.s32.totalorder %s92, %s106
    %p108 = scmp.eq.s32.totalorder %s19, 0
    %p109 = por %p107, %p108
    %s110 = ssub.s32 %s13, %s20
    %p111 = scmp.eq.s32.totalorder %s110, 0
    %s113 = sadd.s32 %s112, 1
    %s114 = scalar_select %p111, %s112, %s113
    %p117 = pneg %p111
    %p118 = scmp.eq.s32.totalorder %s13, 1
    %p119 = por %p117, %p118
    %p120 = scmp.ne.s32.totalorder %s112, %s115
    %p121 = scmp.eq.s32.totalorder %s13, 0
    %p122 = por %p120, %p121
    %p123 = scmp.ne.s32.totalorder %s112, %s115
    %p124 = scmp.eq.s32.totalorder %s18, 1
    %p125 = por %p123, %p124
    %p126 = scmp.ne.s32.totalorder %s115, %s116
    %p127 = scmp.eq.s32.totalorder %s18, 0
    %p128 = por %p126, %p127
    %p129 = scmp.ne.s32.totalorder %s115, %s116
    %p130 = scmp.eq.s32.totalorder %s19, 1
    %p131 = por %p129, %p130
    %p133 = scmp.ne.s32.totalorder %s116, %s132
    %p134 = scmp.eq.s32.totalorder %s19, 0
    %p135 = por %p133, %p134
    %s136 = ssub.s32 %s13, %s20
    %p137 = scmp.eq.s32.totalorder %s136, 0
    %s139 = sadd.s32 %s138, 1
    %s140 = scalar_select %p137, %s138, %s139
    %p143 = pneg %p137
    %p144 = scmp.eq.s32.totalorder %s13, 1
    %p145 = por %p143, %p144
    %p146 = scmp.ne.s32.totalorder %s138, %s141
    %p147 = scmp.eq.s32.totalorder %s13, 0
    %p148 = por %p146, %p147
    %p149 = scmp.ne.s32.totalorder %s138, %s141
    %p150 = scmp.eq.s32.totalorder %s18, 1
    %p151 = por %p149, %p150
    %p152 = scmp.ne.s32.totalorder %s141, %s142
    %p153 = scmp.eq.s32.totalorder %s18, 0
    %p154 = por %p152, %p153
    %p155 = scmp.ne.s32.totalorder %s141, %s142
    %p156 = scmp.eq.s32.totalorder %s19, 1
    %p157 = por %p155, %p156
    %p159 = scmp.ne.s32.totalorder %s142, %s158
    %p160 = scmp.eq.s32.totalorder %s19, 0
    %p161 = por %p159, %p160
    %s162 = ssub.s32 %s13, %s20
    %p163 = scmp.eq.s32.totalorder %s162, 0
    %s165 = sadd.s32 %s164, 1
    %s166 = scalar_select %p163, %s164, %s165
    %p169 = pneg %p163
    %p170 = scmp.eq.s32.totalorder %s13, 1
    %p171 = por %p169, %p170
    %p172 = scmp.ne.s32.totalorder %s164, %s167
    %p173 = scmp.eq.s32.totalorder %s13, 0
    %p174 = por %p172, %p173
    %p175 = scmp.ne.s32.totalorder %s164, %s167
    %p176 = scmp.eq.s32.totalorder %s18, 1
    %p177 = por %p175, %p176
    %p178 = scmp.ne.s32.totalorder %s167, %s168
    %p179 = scmp.eq.s32.totalorder %s18, 0
    %p180 = por %p178, %p179
    %p181 = scmp.ne.s32.totalorder %s167, %s168
    %p182 = scmp.eq.s32.totalorder %s19, 1
    %p183 = por %p181, %p182
    %p185 = scmp.ne.s32.totalorder %s168, %s184
    %p186 = scmp.eq.s32.totalorder %s19, 0
    %p187 = por %p185, %p186
    %p188 = scmp.le.s32.totalorder 1, %s13
    %p189 = scmp.lt.s32.totalorder %s13, 3
    %p190 = pnand %p188, %p189
    %p191 = pneg %p190
    // Predicated region
    $region9: #{res_context_block.5} parent=5 // pred_check
      _
    $region10: #{res_context_block.5} parent=5 // pred_check_branch
      %193 = sbr.rel (%p190) target = $region12
    $region11: #{res_context_block.5} parent=5 // pred_region
      %s194 = ssub.s32 %s13, 1
      // Predicated region
      $region13: #{res_context_block.5} parent=11 // pred_check
        %p195 = pneg %p60
      $region14: #{res_context_block.5} parent=11 // pred_check_branch
        %197 = sbr.rel (%p195) target = $region16
      $region15: #{res_context_block.5} parent=11 // pred_region
        _
      $region16: #{res_context_block.5} parent=11 // pred_fallthru
        _
      // Predicated region
      $region17: #{res_context_block.5} parent=11 // pred_check
        %p198 = pneg %p81
      $region18: #{res_context_block.5} parent=11 // pred_check_branch
        %200 = sbr.rel (%p198) target = $region20
      $region19: #{res_context_block.5} parent=11 // pred_region
        _
      $region20: #{res_context_block.5} parent=11 // pred_fallthru
        _
      // Predicated region
      $region21: #{res_context_block.5} parent=11 // pred_check
        %p201 = pneg %p102
      $region22: #{res_context_block.5} parent=11 // pred_check_branch
        %203 = sbr.rel (%p201) target = $region24
      $region23: #{res_context_block.5} parent=11 // pred_region
        _
      $region24: #{res_context_block.5} parent=11 // pred_fallthru
        _
    $region12: #{res_context_block.5} parent=5 // pred_fallthru
      _
    %p204 = scmp.lt.s32.totalorder %s13, 2
    // Predicated region
    $region25: #{res_context_block.5} parent=5 // pred_check
      %p205 = pneg %p204
    $region26: #{res_context_block.5} parent=5 // pred_check_branch
      %207 = sbr.rel (%p205) target = $region28
    $region27: #{res_context_block.5} parent=5 // pred_region
      // Predicated region
      $region29: #{res_context_block.5} parent=27 // pred_check
        %p208 = pneg %p33
      $region30: #{res_context_block.5} parent=27 // pred_check_branch
        %210 = sbr.rel (%p208) target = $region32
      $region31: #{res_context_block.5} parent=27 // pred_region
        %s211 = smul.u32 8, %s13
        %p212 = scmp.lt.s32.totalorder %s211, 15
        %s213 = scalar_select %p212, %s211, 15
        %s214 = smul.addr %s213, 2
        %s215 = smul.addr %s214, 8
        %s216 = scalar_lea.vmem %s0, %s215
        %s217 = smul.u32 8, %s13
      $region32: #{res_context_block.5} parent=27 // pred_fallthru
        _
    $region28: #{res_context_block.5} parent=5 // pred_fallthru
      _
    %p218 = scmp.le.s32.totalorder 1, %s13
    %p219 = scmp.lt.s32.totalorder %s13, 3
    %p220 = pnand %p218, %p219
    %p221 = pneg %p220
    // Predicated region
    $region33: #{res_context_block.5} parent=5 // pred_check
      _
    $region34: #{res_context_block.5} parent=5 // pred_check_branch
      %223 = sbr.rel (%p220) target = $region36
    $region35: #{res_context_block.5} parent=5 // pred_region
      %s224 = ssub.s32 %s13, 1
      %s225 = smul.u32 8, %s18
      %p226 = scmp.lt.s32.totalorder %s225, 15
      %s227 = scalar_select %p226, %s225, 15
      %s228 = smul.addr %s227, 2
      %s229 = smul.addr %s228, 8
      %s230 = scalar_lea.vmem %s0, %s229
      %p231 = pneg %p39
      %p232 = pneg %p36
      %p233 = pneg %p60
      %p234 = pneg %p57
      %p235 = pneg %p81
      %p236 = pneg %p78
      %p237 = pneg %p102
      %p238 = pneg %p99
      %p239 = pneg %p128
      %p240 = pneg %p125
      %s241 = smul.u32 8, %s18
      %p242 = scmp.lt.s32.totalorder %s241, 15
      %s243 = scalar_select %p242, %s241, 15
      %s244 = smul.addr %s243, 2
      %s245 = smul.addr %s244, 8
      %s246 = scalar_lea.vmem %s4, %s245
      %p247 = pneg %p154
      %p248 = pneg %p151
      %p249 = scmp.lt.s32.totalorder %s18, 1
      %s250 = scalar_select %p249, %s18, 1
      %s251 = scalar_lea.vmem %s5, %s250
      %p252 = pneg %p180
      %p253 = pneg %p177
      %p254 = scmp.lt.s32.totalorder %s18, 1
      %s255 = scalar_select %p254, %s18, 1
      %s256 = scalar_lea.vmem %s6, %s255
      %s257 = smul.u32 8, %s18
      %p258 = scmp.lt.s32.totalorder %s257, 15
      %s259 = scalar_select %p258, %s257, 15
      %s260 = smul.addr %s259, 2
      %s261 = smul.addr %s260, 8
      %s262 = scalar_lea.vmem %s0, %s261
      %s263 = smul.u32 8, %s18
      %s264 = smul.u32 8, %s18
      %p265 = scmp.lt.s32.totalorder %s264, 15
      %s266 = scalar_select %p265, %s264, 15
      %s267 = smul.addr %s266, 2
      %s268 = smul.addr %s267, 8
      %s269 = scalar_lea.vmem %s4, %s268
      %s270 = smul.u32 8, %s18
      %p271 = scmp.lt.s32.totalorder %s18, 1
      %s272 = scalar_select %p271, %s18, 1
      %s273 = scalar_lea.vmem %s5, %s272
      %p274 = scmp.lt.s32.totalorder %s18, 1
      %s275 = scalar_select %p274, %s18, 1
      %s276 = scalar_lea.vmem %s6, %s275
      %v277 = vld [vmem:[%s2] sm:$0x1]
      %v278 = vld [vmem:[%s3] sm:$0x1]
      %v279 = vlaneseq
      %v280 = vshrl.u32 %v279, 7
      %v281 = vadd.s32 %v280, 8
      loop: start=0, step=1, limit=8
      $region37: #{res_context_block.5} parent=35 // loop_pre_header
        _
      $region38: #{res_context_block.5} parent=35 // loop_header
        %s283 = sphi 0, %s287
        %p284 = scmp.ge.s32.totalorder %s283, 8
        %v288 = vphi 0.0, %v629
        %v289 = vphi 0.0, %v639
      $region39: #{res_context_block.5} parent=35 // loop_header_branch
        %286 = sbr.rel (%p284) target = $region43
      $region40: #{res_context_block.5} parent=35 // loop_body
        %s290 = smul.u32 %s283, 16
        %s291 = scalar_lea.vmem %s262, %s290
        %v292 = vld [vmem:[%s291] sm:$0xff]
        %v293 = vld [vmem:[%s291 + $0x8] sm:$0xff]
        %v295 = vlaneseq
        %v296 = vshrl.u32 %v295, 7
        %v297 = vsub.s32 0, %v296
        %v298 = vrot.slane %v277, %v297
        %v300 = vmul.f32 %v292, %v298
        %v301 = vmul.f32 %v293, %v298
        %v303 = vlaneseq
        %v304 = vshrl.u32 %v303, 7
        %v305 = vsub.s32 0, %v304
        %v306 = vrot.slane %v278, %v305
        %v308 = vadd.f32 %v300, %v306
        %v309 = vadd.f32 %v301, %v306
        %vm310 = vcmp.ge.s32.totalorder %v280, 1
        %vm311 = vcmp.ge.s32.totalorder %v281, 1
        %v312 = vrot.slane %v308, 7
        %v313 = vrot.slane %v309, 7
        %vm314 = vcmp.lt.s32.totalorder %v280, 1
        %v315 = vsel %vm314, %v312, %v313
        %v316 = vsel %vm314, %v313, %v312
        %v317 = vsel %vm310, 1, 0
        %v318 = vsel %vm311, 1, 0
        %vm319 = vcmp.eq.s32.totalorder %v317, 1
        %vm320 = vcmp.eq.s32.totalorder %v318, 1
        %v321 = vsel %vm319, %v316, 0.0
        %v322 = vsel %vm320, %v315, 0.0
        %vm323 = vcmp.le.s32.totalorder %v280, 14
        %vm324 = vcmp.le.s32.totalorder %v281, 14
        %v325 = vrot.slane %v308, 1
        %v326 = vrot.slane %v309, 1
        %vm327 = vcmp.lt.s32.totalorder %v280, 7
        %v328 = vsel %vm327, %v325, %v326
        %v329 = vsel %vm327, %v326, %v325
        %v330 = vsel %vm323, 1, 0
        %v331 = vsel %vm324, 1, 0
        %vm332 = vcmp.eq.s32.totalorder %v330, 1
        %vm333 = vcmp.eq.s32.totalorder %v331, 1
        %v334 = vsel %vm332, %v328, 0.0
        %v335 = vsel %vm333, %v329, 0.0
        %v336 = vld [vmem:[%s1] sm:$0xff]
        %v337 = vld [vmem:[%s1 + $0x8] sm:$0xff]
        %v338 = vld [vmem:[%s1 + $0x10] sm:$0xff]
        %v339 = vld [vmem:[%s1 + $0x18] sm:$0xff]
        %v340 = vld [vmem:[%s1 + $0x20] sm:$0xff]
        %v341 = vld [vmem:[%s1 + $0x28] sm:$0xff]
        %v342 = vld [vmem:[%s1 + $0x30] sm:$0xff]
        %v343 = vld [vmem:[%s1 + $0x38] sm:$0xff]
        %v344 = vld [vmem:[%s1 + $0x40] sm:$0xff]
        %v345 = vld [vmem:[%s1 + $0x48] sm:$0xff]
        %v346 = vld [vmem:[%s1 + $0x50] sm:$0xff]
        %v347 = vld [vmem:[%s1 + $0x58] sm:$0xff]
        %v348 = vld [vmem:[%s1 + $0x60] sm:$0xff]
        %v349 = vld [vmem:[%s1 + $0x68] sm:$0xff]
        %v350 = vld [vmem:[%s1 + $0x70] sm:$0xff]
        %v351 = vld [vmem:[%s1 + $0x78] sm:$0xff]
        %s352 = scalar_lea.vmem %s1, 128
        %v353 = vld [vmem:[%s352] sm:$0xff]
        %v354 = vld [vmem:[%s352 + $0x8] sm:$0xff]
        %v355 = vld [vmem:[%s352 + $0x10] sm:$0xff]
        %v356 = vld [vmem:[%s352 + $0x18] sm:$0xff]
        %v357 = vld [vmem:[%s352 + $0x20] sm:$0xff]
        %v358 = vld [vmem:[%s352 + $0x28] sm:$0xff]
        %v359 = vld [vmem:[%s352 + $0x30] sm:$0xff]
        %v360 = vld [vmem:[%s352 + $0x38] sm:$0xff]
        %v361 = vld [vmem:[%s352 + $0x40] sm:$0xff]
        %v362 = vld [vmem:[%s352 + $0x48] sm:$0xff]
        %v363 = vld [vmem:[%s352 + $0x50] sm:$0xff]
        %v364 = vld [vmem:[%s352 + $0x58] sm:$0xff]
        %v365 = vld [vmem:[%s352 + $0x60] sm:$0xff]
        %v366 = vld [vmem:[%s352 + $0x68] sm:$0xff]
        %v367 = vld [vmem:[%s352 + $0x70] sm:$0xff]
        %v368 = vld [vmem:[%s352 + $0x78] sm:$0xff]
        %369 = vmatprep.subr.mxu0 0.0
        %370 = vmatpush1.msra.mxu0 %v368
        %371 = vmatprep.subr.mxu0 0.0
        %372 = vmatpush1.msra.mxu0 %v367
        %373 = vmatprep.subr.mxu0 0.0
        %374 = vmatpush1.msra.mxu0 %v366
        %375 = vmatprep.subr.mxu0 0.0
        %376 = vmatpush1.msra.mxu0 %v365
        %377 = vmatprep.subr.mxu0 0.0
        %378 = vmatpush1.msra.mxu0 %v364
        %379 = vmatprep.subr.mxu0 0.0
        %380 = vmatpush1.msra.mxu0 %v363
        %381 = vmatprep.subr.mxu0 0.0
        %382 = vmatpush1.msra.mxu0 %v362
        %383 = vmatprep.subr.mxu0 0.0
        %384 = vmatpush1.msra.mxu0 %v361
        %385 = vmatprep.subr.mxu0 0.0
        %386 = vmatpush1.msra.mxu0 %v360
        %387 = vmatprep.subr.mxu0 0.0
        %388 = vmatpush1.msra.mxu0 %v359
        %389 = vmatprep.subr.mxu0 0.0
        %390 = vmatpush1.msra.mxu0 %v358
        %391 = vmatprep.subr.mxu0 0.0
        %392 = vmatpush1.msra.mxu0 %v357
        %393 = vmatprep.subr.mxu0 0.0
        %394 = vmatpush1.msra.mxu0 %v356
        %395 = vmatprep.subr.mxu0 0.0
        %396 = vmatpush1.msra.mxu0 %v355
        %397 = vmatprep.subr.mxu0 0.0
        %398 = vmatpush1.msra.mxu0 %v354
        %399 = vmatprep.subr.mxu0 0.0
        %400 = vmatpush1.msra.mxu0 %v353
        %401 = vmatprep.subr.mxu0 0.0
        %402 = vmatpush2.msra.mxu0 0.0
        %403 = vmatprep.subr.mxu0 0.0
        %404 = vmatpush2.msra.mxu0 0.0
        %405 = vmatprep.subr.mxu0 0.0
        %406 = vmatpush2.msra.mxu0 0.0
        %407 = vmatprep.subr.mxu0 0.0
        %408 = vmatpush2.msra.mxu0 0.0
        %409 = vmatprep.subr.mxu0 0.0
        %410 = vmatpush2.msra.mxu0 0.0
        %411 = vmatprep.subr.mxu0 0.0
        %412 = vmatpush2.msra.mxu0 0.0
        %413 = vmatprep.subr.mxu0 0.0
        %414 = vmatpush2.msra.mxu0 0.0
        %415 = vmatprep.subr.mxu0 0.0
        %416 = vmatpush2.msra.mxu0 0.0
        %417 = vmatprep.subr.mxu0 0.0
        %418 = vmatpush2.msra.mxu0 0.0
        %419 = vmatprep.subr.mxu0 0.0
        %420 = vmatpush2.msra.mxu0 0.0
        %421 = vmatprep.subr.mxu0 0.0
        %422 = vmatpush2.msra.mxu0 0.0
        %423 = vmatprep.subr.mxu0 0.0
        %424 = vmatpush2.msra.mxu0 0.0
        %425 = vmatprep.subr.mxu0 0.0
        %426 = vmatpush2.msra.mxu0 0.0
        %427 = vmatprep.subr.mxu0 0.0
        %428 = vmatpush2.msra.mxu0 0.0
        %429 = vmatprep.subr.mxu0 0.0
        %430 = vmatpush2.msra.mxu0 0.0
        %431 = vmatprep.subr.mxu0 0.0
        %432 = vmatpush2.msra.mxu0 0.0
        %433 = vmatprep.mubr.f32.mxu0 0.0
        %434 = vmatmul.mubr.f32.gmra.mxu0 %v308
        %v435 = vpop.f32.mrf.mxu0
        %v436 = vadd.f32 0.0, %v435
        %v437 = vpop.f32.mrf.mxu0
        %438 = vmatprep.mubr.f32.mxu0 0.0
        %439 = vmatmul.mubr.f32.gmra.mxu0 %v309
        %v440 = vpop.f32.mrf.mxu0
        %v441 = vadd.f32 0.0, %v440
        %v442 = vpop.f32.mrf.mxu0
        %443 = vdwg.mxu0
        %444 = vmatprep.subr.mxu0 0.0
        %445 = vmatpush1.msra.mxu0 %v351
        %446 = vmatprep.subr.mxu0 0.0
        %447 = vmatpush1.msra.mxu0 %v350
        %448 = vmatprep.subr.mxu0 0.0
        %449 = vmatpush1.msra.mxu0 %v349
        %450 = vmatprep.subr.mxu0 0.0
        %451 = vmatpush1.msra.mxu0 %v348
        %452 = vmatprep.subr.mxu0 0.0
        %453 = vmatpush1.msra.mxu0 %v347
        %454 = vmatprep.subr.mxu0 0.0
        %455 = vmatpush1.msra.mxu0 %v346
        %456 = vmatprep.subr.mxu0 0.0
        %457 = vmatpush1.msra.mxu0 %v345
        %458 = vmatprep.subr.mxu0 0.0
        %459 = vmatpush1.msra.mxu0 %v344
        %460 = vmatprep.subr.mxu0 0.0
        %461 = vmatpush1.msra.mxu0 %v343
        %462 = vmatprep.subr.mxu0 0.0
        %463 = vmatpush1.msra.mxu0 %v342
        %464 = vmatprep.subr.mxu0 0.0
        %465 = vmatpush1.msra.mxu0 %v341
        %466 = vmatprep.subr.mxu0 0.0
        %467 = vmatpush1.msra.mxu0 %v340
        %468 = vmatprep.subr.mxu0 0.0
        %469 = vmatpush1.msra.mxu0 %v339
        %470 = vmatprep.subr.mxu0 0.0
        %471 = vmatpush1.msra.mxu0 %v338
        %472 = vmatprep.subr.mxu0 0.0
        %473 = vmatpush1.msra.mxu0 %v337
        %474 = vmatprep.subr.mxu0 0.0
        %475 = vmatpush1.msra.mxu0 %v336
        %476 = vmatprep.subr.mxu0 0.0
        %477 = vmatpush2.msra.mxu0 0.0
        %478 = vmatprep.subr.mxu0 0.0
        %479 = vmatpush2.msra.mxu0 0.0
        %480 = vmatprep.subr.mxu0 0.0
        %481 = vmatpush2.msra.mxu0 0.0
        %482 = vmatprep.subr.mxu0 0.0
        %483 = vmatpush2.msra.mxu0 0.0
        %484 = vmatprep.subr.mxu0 0.0
        %485 = vmatpush2.msra.mxu0 0.0
        %486 = vmatprep.subr.mxu0 0.0
        %487 = vmatpush2.msra.mxu0 0.0
        %488 = vmatprep.subr.mxu0 0.0
        %489 = vmatpush2.msra.mxu0 0.0
        %490 = vmatprep.subr.mxu0 0.0
        %491 = vmatpush2.msra.mxu0 0.0
        %492 = vmatprep.subr.mxu0 0.0
        %493 = vmatpush2.msra.mxu0 0.0
        %494 = vmatprep.subr.mxu0 0.0
        %495 = vmatpush2.msra.mxu0 0.0
        %496 = vmatprep.subr.mxu0 0.0
        %497 = vmatpush2.msra.mxu0 0.0
        %498 = vmatprep.subr.mxu0 0.0
        %499 = vmatpush2.msra.mxu0 0.0
        %500 = vmatprep.subr.mxu0 0.0
        %501 = vmatpush2.msra.mxu0 0.0
        %502 = vmatprep.subr.mxu0 0.0
        %503 = vmatpush2.msra.mxu0 0.0
        %504 = vmatprep.subr.mxu0 0.0
        %505 = vmatpush2.msra.mxu0 0.0
        %506 = vmatprep.subr.mxu0 0.0
        %507 = vmatpush2.msra.mxu0 0.0
        %508 = vmatprep.mubr.f32.mxu0 0.0
        %509 = vmatmul.mubr.f32.gmra.mxu0 %v321
        %v510 = vpop.f32.mrf.mxu0
        %v511 = vadd.f32 %v436, %v510
        %v512 = vpop.f32.mrf.mxu0
        %513 = vmatprep.mubr.f32.mxu0 0.0
        %514 = vmatmul.mubr.f32.gmra.mxu0 %v322
        %v515 = vpop.f32.mrf.mxu0
        %v516 = vadd.f32 %v441, %v515
        %v517 = vpop.f32.mrf.mxu0
        %518 = vdwg.mxu0
        %s519 = scalar_lea.vmem %s1, 256
        %v520 = vld [vmem:[%s519] sm:$0xff]
        %v521 = vld [vmem:[%s519 + $0x8] sm:$0xff]
        %v522 = vld [vmem:[%s519 + $0x10] sm:$0xff]
        %v523 = vld [vmem:[%s519 + $0x18] sm:$0xff]
        %v524 = vld [vmem:[%s519 + $0x20] sm:$0xff]
        %v525 = vld [vmem:[%s519 + $0x28] sm:$0xff]
        %v526 = vld [vmem:[%s519 + $0x30] sm:$0xff]
        %v527 = vld [vmem:[%s519 + $0x38] sm:$0xff]
        %v528 = vld [vmem:[%s519 + $0x40] sm:$0xff]
        %v529 = vld [vmem:[%s519 + $0x48] sm:$0xff]
        %v530 = vld [vmem:[%s519 + $0x50] sm:$0xff]
        %v531 = vld [vmem:[%s519 + $0x58] sm:$0xff]
        %v532 = vld [vmem:[%s519 + $0x60] sm:$0xff]
        %v533 = vld [vmem:[%s519 + $0x68] sm:$0xff]
        %v534 = vld [vmem:[%s519 + $0x70] sm:$0xff]
        %v535 = vld [vmem:[%s519 + $0x78] sm:$0xff]
        %536 = vmatprep.subr.mxu0 0.0
        %537 = vmatpush1.msra.mxu0 %v535
        %538 = vmatprep.subr.mxu0 0.0
        %539 = vmatpush1.msra.mxu0 %v534
        %540 = vmatprep.subr.mxu0 0.0
        %541 = vmatpush1.msra.mxu0 %v533
        %542 = vmatprep.subr.mxu0 0.0
        %543 = vmatpush1.msra.mxu0 %v532
        %544 = vmatprep.subr.mxu0 0.0
        %545 = vmatpush1.msra.mxu0 %v531
        %546 = vmatprep.subr.mxu0 0.0
        %547 = vmatpush1.msra.mxu0 %v530
        %548 = vmatprep.subr.mxu0 0.0
        %549 = vmatpush1.msra.mxu0 %v529
        %550 = vmatprep.subr.mxu0 0.0
        %551 = vmatpush1.msra.mxu0 %v528
        %552 = vmatprep.subr.mxu0 0.0
        %553 = vmatpush1.msra.mxu0 %v527
        %554 = vmatprep.subr.mxu0 0.0
        %555 = vmatpush1.msra.mxu0 %v526
        %556 = vmatprep.subr.mxu0 0.0
        %557 = vmatpush1.msra.mxu0 %v525
        %558 = vmatprep.subr.mxu0 0.0
        %559 = vmatpush1.msra.mxu0 %v524
        %560 = vmatprep.subr.mxu0 0.0
        %561 = vmatpush1.msra.mxu0 %v523
        %562 = vmatprep.subr.mxu0 0.0
        %563 = vmatpush1.msra.mxu0 %v522
        %564 = vmatprep.subr.mxu0 0.0
        %565 = vmatpush1.msra.mxu0 %v521
        %566 = vmatprep.subr.mxu0 0.0
        %567 = vmatpush1.msra.mxu0 %v520
        %568 = vmatprep.subr.mxu0 0.0
        %569 = vmatpush2.msra.mxu0 0.0
        %570 = vmatprep.subr.mxu0 0.0
        %571 = vmatpush2.msra.mxu0 0.0
        %572 = vmatprep.subr.mxu0 0.0
        %573 = vmatpush2.msra.mxu0 0.0
        %574 = vmatprep.subr.mxu0 0.0
        %575 = vmatpush2.msra.mxu0 0.0
        %576 = vmatprep.subr.mxu0 0.0
        %577 = vmatpush2.msra.mxu0 0.0
        %578 = vmatprep.subr.mxu0 0.0
        %579 = vmatpush2.msra.mxu0 0.0
        %580 = vmatprep.subr.mxu0 0.0
        %581 = vmatpush2.msra.mxu0 0.0
        %582 = vmatprep.subr.mxu0 0.0
        %583 = vmatpush2.msra.mxu0 0.0
        %584 = vmatprep.subr.mxu0 0.0
        %585 = vmatpush2.msra.mxu0 0.0
        %586 = vmatprep.subr.mxu0 0.0
        %587 = vmatpush2.msra.mxu0 0.0
        %588 = vmatprep.subr.mxu0 0.0
        %589 = vmatpush2.msra.mxu0 0.0
        %590 = vmatprep.subr.mxu0 0.0
        %591 = vmatpush2.msra.mxu0 0.0
        %592 = vmatprep.subr.mxu0 0.0
        %593 = vmatpush2.msra.mxu0 0.0
        %594 = vmatprep.subr.mxu0 0.0
        %595 = vmatpush2.msra.mxu0 0.0
        %596 = vmatprep.subr.mxu0 0.0
        %597 = vmatpush2.msra.mxu0 0.0
        %598 = vmatprep.subr.mxu0 0.0
        %599 = vmatpush2.msra.mxu0 0.0
        %600 = vmatprep.mubr.f32.mxu0 0.0
        %601 = vmatmul.mubr.f32.gmra.mxu0 %v334
        %v602 = vpop.f32.mrf.mxu0
        %v603 = vadd.f32 0.0, %v602
        %v604 = vpop.f32.mrf.mxu0
        %605 = vmatprep.mubr.f32.mxu0 0.0
        %606 = vmatmul.mubr.f32.gmra.mxu0 %v335
        %v607 = vpop.f32.mrf.mxu0
        %v608 = vadd.f32 0.0, %v607
        %v609 = vpop.f32.mrf.mxu0
        %610 = vdwg.mxu0
        %v611 = vadd.f32 %v511, %v603
        %v612 = vadd.f32 %v516, %v608
        %vm613 = vcmp.ge.f32.partialorder %v611, 0.0
        %vm614 = vcmp.ge.f32.partialorder %v612, 0.0
        %v615 = vmul.f32 %v611, 0.01
        %v616 = vmul.f32 %v612, 0.01
        %v617 = vsel %vm613, %v611, %v615
        %v618 = vsel %vm614, %v612, %v616
        %s619 = scalar_lea.vmem %s269, %s290
        %620 = vst [vmem:[%s619] sm:$0xff] %v617
        %621 = vst [vmem:[%s619 + $0x8] sm:$0xff] %v618
        %v622 = vadd.f32 %v617, %v618
        %v623 = vrot.slane %v622, 4
        %v624 = vadd.f32 %v622, %v623
        %v625 = vrot.slane %v624, 2
        %v626 = vadd.f32 %v624, %v625
        %v627 = vrot.slane %v626, 1
        %v628 = vadd.f32 %v626, %v627
        %v629 = vadd.f32 %v288, %v628
        %v630 = vmul.f32 %v617, %v617
        %v631 = vmul.f32 %v618, %v618
        %v632 = vadd.f32 %v630, %v631
        %v633 = vrot.slane %v632, 4
        %v634 = vadd.f32 %v632, %v633
        %v635 = vrot.slane %v634, 2
        %v636 = vadd.f32 %v634, %v635
        %v637 = vrot.slane %v636, 1
        %v638 = vadd.f32 %v636, %v637
        %v639 = vadd.f32 %v289, %v638
      $region41: #{res_context_block.5} parent=35 // loop_footer
        %s287 = sadd.s32 1, %s283
      $region42: #{res_context_block.5} parent=35 // loop_footer_branch
        %282 = sbr.rel target = $region38
      $region43: #{res_context_block.5} parent=35 // loop_exit
        _
      %640 = vst [vmem:[%s273] sm:$0x1] %v288
      %641 = vst [vmem:[%s276] sm:$0x1] %v289
      %s642 = smul.u32 8, %s18
      %p643 = scmp.lt.s32.totalorder %s642, 15
      %s644 = scalar_select %p643, %s642, 15
      %s645 = smul.addr %s644, 2
      %s646 = smul.addr %s645, 8
      %s647 = scalar_lea.vmem %s4, %s646
      %p648 = scmp.lt.s32.totalorder %s18, 1
      %s649 = scalar_select %p648, %s18, 1
      %s650 = scalar_lea.vmem %s5, %s649
      %p651 = scmp.lt.s32.totalorder %s18, 1
      %s652 = scalar_select %p651, %s18, 1
      %s653 = scalar_lea.vmem %s6, %s652
      // Predicated region
      $region44: #{res_context_block.5} parent=35 // pred_check
        %p654 = pneg %p125
      $region45: #{res_context_block.5} parent=35 // pred_check_branch
        %656 = sbr.rel (%p654) target = $region47
      $region46: #{res_context_block.5} parent=35 // pred_region
        %s657 = smul.u32 8, %s18
      $region47: #{res_context_block.5} parent=35 // pred_fallthru
        _
      // Predicated region
      $region48: #{res_context_block.5} parent=35 // pred_check
        %p658 = pneg %p151
      $region49: #{res_context_block.5} parent=35 // pred_check_branch
        %660 = sbr.rel (%p658) target = $region51
      $region50: #{res_context_block.5} parent=35 // pred_region
        _
      $region51: #{res_context_block.5} parent=35 // pred_fallthru
        _
      // Predicated region
      $region52: #{res_context_block.5} parent=35 // pred_check
        %p661 = pneg %p177
      $region53: #{res_context_block.5} parent=35 // pred_check_branch
        %663 = sbr.rel (%p661) target = $region55
      $region54: #{res_context_block.5} parent=35 // pred_region
        _
      $region55: #{res_context_block.5} parent=35 // pred_fallthru
        _
    $region36: #{res_context_block.5} parent=5 // pred_fallthru
      _
    %p664 = scmp.le.s32.totalorder 2, %s13
    // Predicated region
    $region56: #{res_context_block.5} parent=5 // pred_check
      %p665 = pneg %p664
    $region57: #{res_context_block.5} parent=5 // pred_check_branch
      %667 = sbr.rel (%p665) target = $region59
    $region58: #{res_context_block.5} parent=5 // pred_region
      %s668 = ssub.s32 %s13, 2
      // Predicated region
      $region60: #{res_context_block.5} parent=58 // pred_check
        %p669 = pneg %p131
      $region61: #{res_context_block.5} parent=58 // pred_check_branch
        %671 = sbr.rel (%p669) target = $region63
      $region62: #{res_context_block.5} parent=58 // pred_region
        %s672 = smul.u32 8, %s19
        %p673 = scmp.lt.s32.totalorder %s672, 15
        %s674 = scalar_select %p673, %s672, 15
        %s675 = smul.addr %s674, 2
        %s676 = smul.addr %s675, 8
        %s677 = scalar_lea.vmem %s4, %s676
      $region63: #{res_context_block.5} parent=58 // pred_fallthru
        _
      // Predicated region
      $region64: #{res_context_block.5} parent=58 // pred_check
        %p678 = pneg %p157
      $region65: #{res_context_block.5} parent=58 // pred_check_branch
        %680 = sbr.rel (%p678) target = $region67
      $region66: #{res_context_block.5} parent=58 // pred_region
        %p681 = scmp.lt.s32.totalorder %s19, 1
        %s682 = scalar_select %p681, %s19, 1
        %s683 = scalar_lea.vmem %s5, %s682
      $region67: #{res_context_block.5} parent=58 // pred_fallthru
        _
      // Predicated region
      $region68: #{res_context_block.5} parent=58 // pred_check
        %p684 = pneg %p183
      $region69: #{res_context_block.5} parent=58 // pred_check_branch
        %686 = sbr.rel (%p684) target = $region71
      $region70: #{res_context_block.5} parent=58 // pred_region
        %p687 = scmp.lt.s32.totalorder %s19, 1
        %s688 = scalar_select %p687, %s19, 1
        %s689 = scalar_lea.vmem %s6, %s688
      $region71: #{res_context_block.5} parent=58 // pred_fallthru
        _
    $region59: #{res_context_block.5} parent=5 // pred_fallthru
      _
  $region6: #{res_context_block.5} parent=0 // loop_footer
    %s17 = sadd.s32 1, %s13
  $region7: #{res_context_block.5} parent=0 // loop_footer_branch
    %12 = sbr.rel target = $region3
  $region8: #{res_context_block.5} parent=0 // loop_exit
    _

// kernel: res_context_block.7
$region0: #{res_context_block.7}
  #allocation0 [shape = 'u32[]', space=smem, size = 0x4, offset = 0x4, fixed_abs, tag = 'smem constant byte address 0x4 - core index']
  #allocation1 [shape = 'u32[144,128]{1,0:T(1,128)}', space=vmem, size = 0x12000, scoped, tag = 'internal scratch']
  %s0 = inlined_call_operand.vmem [shape: f32[32,8,128], index: 0, kind: input, shape index: {}]
  %s1 = inlined_call_operand.vmem [shape: f32[3,128,128], index: 1, kind: input, shape index: {}]
  %s2 = inlined_call_operand.vmem [shape: f32[1,128], index: 2, kind: input, shape index: {}]
  %s3 = inlined_call_operand.vmem [shape: f32[1,128], index: 3, kind: input, shape index: {}]
  %s4 = inlined_call_operand.vmem [shape: f32[32,8,128], index: 4, kind: output, shape index: {0}]
  %s5 = inlined_call_operand.vmem [shape: f32[2,1,128], index: 5, kind: output, shape index: {1}]
  %s6 = inlined_call_operand.vmem [shape: f32[2,1,128], index: 6, kind: output, shape index: {2}]
  %7 = xla_tuple %s4, %s5, %s6
  %s8 = sld [smem:[#allocation0]]
  $region72: #{res_context_block.7} parent=0
    _
  %s10 = ssub.s32 1, %s8
  %s11 = scalar_select 0, %s10, %s8
  loop: start=0, step=1, limit=4
  $region2: #{res_context_block.7} parent=0 // loop_pre_header
    _
  $region3: #{res_context_block.7} parent=0 // loop_header
    %s13 = sphi 0, %s17
    %p14 = scmp.ge.s32.totalorder %s13, 4
    %s23 = sphi 0, %s25
    %s26 = sphi 0, %s23
    %s27 = sphi 0, %s26
    %s43 = sphi 0, %s27
    %s47 = sphi 0, %s47
    %s49 = sphi 0, %s47
    %s50 = sphi 0, %s49
    %s64 = sphi 0, %s50
    %s68 = sphi 0, %s68
    %s70 = sphi 0, %s68
    %s71 = sphi 0, %s70
    %s85 = sphi 0, %s71
    %s89 = sphi 0, %s89
    %s91 = sphi 0, %s89
    %s92 = sphi 0, %s91
    %s106 = sphi 0, %s92
    %s112 = sphi 0, %s114
    %s115 = sphi 0, %s112
    %s116 = sphi 0, %s115
    %s132 = sphi 0, %s116
    %s138 = sphi 0, %s140
    %s141 = sphi 0, %s138
    %s142 = sphi 0, %s141
    %s158 = sphi 0, %s142
    %s164 = sphi 0, %s166
    %s167 = sphi 0, %s164
    %s168 = sphi 0, %s167
    %s184 = sphi 0, %s168
  $region4: #{res_context_block.7} parent=0 // loop_header_branch
    %16 = sbr.rel (%p14) target = $region8
  $region5: #{res_context_block.7} parent=0 // loop_body
    %s18 = ssub.s32 %s13, 1
    %s19 = ssub.s32 %s13, 2
    %s20 = sadd.s32 %s13, 1
    %s21 = ssub.s32 %s13, %s20
    %p22 = scmp.eq.s32.totalorder %s21, 0
    %s24 = sadd.s32 %s23, 1
    %s25 = scalar_select %p22, %s23, %s24
    %p28 = pneg %p22
    %p29 = scmp.eq.s32.totalorder %s13, 1
    %p30 = por %p28, %p29
    %p31 = scmp.ne.s32.totalorder %s23, %s26
    %p32 = scmp.eq.s32.totalorder %s13, 0
    %p33 = por %p31, %p32
    %p34 = scmp.ne.s32.totalorder %s23, %s26
    %p35 = scmp.eq.s32.totalorder %s18, 1
    %p36 = por %p34, %p35
    %p37 = scmp.ne.s32.totalorder %s26, %s27
    %p38 = scmp.eq.s32.totalorder %s18, 0
    %p39 = por %p37, %p38
    %p40 = scmp.ne.s32.totalorder %s26, %s27
    %p41 = scmp.eq.s32.totalorder %s19, 1
    %p42 = por %p40, %p41
    %p44 = scmp.ne.s32.totalorder %s27, %s43
    %p45 = scmp.eq.s32.totalorder %s19, 0
    %p46 = por %p44, %p45
    %s48 = sadd.s32 %s47, 1
    %p51 = scmp.eq.s32.totalorder %s13, 1
    %p52 = scmp.ne.s32.totalorder %s47, %s49
    %p53 = scmp.eq.s32.totalorder %s13, 0
    %p54 = por %p52, %p53
    %p55 = scmp.ne.s32.totalorder %s47, %s49
    %p56 = scmp.eq.s32.totalorder %s18, 1
    %p57 = por %p55, %p56
    %p58 = scmp.ne.s32.totalorder %s49, %s50
    %p59 = scmp.eq.s32.totalorder %s18, 0
    %p60 = por %p58, %p59
    %p61 = scmp.ne.s32.totalorder %s49, %s50
    %p62 = scmp.eq.s32.totalorder %s19, 1
    %p63 = por %p61, %p62
    %p65 = scmp.ne.s32.totalorder %s50, %s64
    %p66 = scmp.eq.s32.totalorder %s19, 0
    %p67 = por %p65, %p66
    %s69 = sadd.s32 %s68, 1
    %p72 = scmp.eq.s32.totalorder %s13, 1
    %p73 = scmp.ne.s32.totalorder %s68, %s70
    %p74 = scmp.eq.s32.totalorder %s13, 0
    %p75 = por %p73, %p74
    %p76 = scmp.ne.s32.totalorder %s68, %s70
    %p77 = scmp.eq.s32.totalorder %s18, 1
    %p78 = por %p76, %p77
    %p79 = scmp.ne.s32.totalorder %s70, %s71
    %p80 = scmp.eq.s32.totalorder %s18, 0
    %p81 = por %p79, %p80
    %p82 = scmp.ne.s32.totalorder %s70, %s71
    %p83 = scmp.eq.s32.totalorder %s19, 1
    %p84 = por %p82, %p83
    %p86 = scmp.ne.s32.totalorder %s71, %s85
    %p87 = scmp.eq.s32.totalorder %s19, 0
    %p88 = por %p86, %p87
    %s90 = sadd.s32 %s89, 1
    %p93 = scmp.eq.s32.totalorder %s13, 1
    %p94 = scmp.ne.s32.totalorder %s89, %s91
    %p95 = scmp.eq.s32.totalorder %s13, 0
    %p96 = por %p94, %p95
    %p97 = scmp.ne.s32.totalorder %s89, %s91
    %p98 = scmp.eq.s32.totalorder %s18, 1
    %p99 = por %p97, %p98
    %p100 = scmp.ne.s32.totalorder %s91, %s92
    %p101 = scmp.eq.s32.totalorder %s18, 0
    %p102 = por %p100, %p101
    %p103 = scmp.ne.s32.totalorder %s91, %s92
    %p104 = scmp.eq.s32.totalorder %s19, 1
    %p105 = por %p103, %p104
    %p107 = scmp.ne.s32.totalorder %s92, %s106
    %p108 = scmp.eq.s32.totalorder %s19, 0
    %p109 = por %p107, %p108
    %s110 = ssub.s32 %s13, %s20
    %p111 = scmp.eq.s32.totalorder %s110, 0
    %s113 = sadd.s32 %s112, 1
    %s114 = scalar_select %p111, %s112, %s113
    %p117 = pneg %p111
    %p118 = scmp.eq.s32.totalorder %s13, 1
    %p119 = por %p117, %p118
    %p120 = scmp.ne.s32.totalorder %s112, %s115
    %p121 = scmp.eq.s32.totalorder %s13, 0
    %p122 = por %p120, %p121
    %p123 = scmp.ne.s32.totalorder %s112, %s115
    %p124 = scmp.eq.s32.totalorder %s18, 1
    %p125 = por %p123, %p124
    %p126 = scmp.ne.s32.totalorder %s115, %s116
    %p127 = scmp.eq.s32.totalorder %s18, 0
    %p128 = por %p126, %p127
    %p129 = scmp.ne.s32.totalorder %s115, %s116
    %p130 = scmp.eq.s32.totalorder %s19, 1
    %p131 = por %p129, %p130
    %p133 = scmp.ne.s32.totalorder %s116, %s132
    %p134 = scmp.eq.s32.totalorder %s19, 0
    %p135 = por %p133, %p134
    %s136 = ssub.s32 %s13, %s20
    %p137 = scmp.eq.s32.totalorder %s136, 0
    %s139 = sadd.s32 %s138, 1
    %s140 = scalar_select %p137, %s138, %s139
    %p143 = pneg %p137
    %p144 = scmp.eq.s32.totalorder %s13, 1
    %p145 = por %p143, %p144
    %p146 = scmp.ne.s32.totalorder %s138, %s141
    %p147 = scmp.eq.s32.totalorder %s13, 0
    %p148 = por %p146, %p147
    %p149 = scmp.ne.s32.totalorder %s138, %s141
    %p150 = scmp.eq.s32.totalorder %s18, 1
    %p151 = por %p149, %p150
    %p152 = scmp.ne.s32.totalorder %s141, %s142
    %p153 = scmp.eq.s32.totalorder %s18, 0
    %p154 = por %p152, %p153
    %p155 = scmp.ne.s32.totalorder %s141, %s142
    %p156 = scmp.eq.s32.totalorder %s19, 1
    %p157 = por %p155, %p156
    %p159 = scmp.ne.s32.totalorder %s142, %s158
    %p160 = scmp.eq.s32.totalorder %s19, 0
    %p161 = por %p159, %p160
    %s162 = ssub.s32 %s13, %s20
    %p163 = scmp.eq.s32.totalorder %s162, 0
    %s165 = sadd.s32 %s164, 1
    %s166 = scalar_select %p163, %s164, %s165
    %p169 = pneg %p163
    %p170 = scmp.eq.s32.totalorder %s13, 1
    %p171 = por %p169, %p170
    %p172 = scmp.ne.s32.totalorder %s164, %s167
    %p173 = scmp.eq.s32.totalorder %s13, 0
    %p174 = por %p172, %p173
    %p175 = scmp.ne.s32.totalorder %s164, %s167
    %p176 = scmp.eq.s32.totalorder %s18, 1
    %p177 = por %p175, %p176
    %p178 = scmp.ne.s32.totalorder %s167, %s168
    %p179 = scmp.eq.s32.totalorder %s18, 0
    %p180 = por %p178, %p179
    %p181 = scmp.ne.s32.totalorder %s167, %s168
    %p182 = scmp.eq.s32.totalorder %s19, 1
    %p183 = por %p181, %p182
    %p185 = scmp.ne.s32.totalorder %s168, %s184
    %p186 = scmp.eq.s32.totalorder %s19, 0
    %p187 = por %p185, %p186
    %p188 = scmp.le.s32.totalorder 1, %s13
    %p189 = scmp.lt.s32.totalorder %s13, 3
    %p190 = pnand %p188, %p189
    %p191 = pneg %p190
    // Predicated region
    $region9: #{res_context_block.7} parent=5 // pred_check
      _
    $region10: #{res_context_block.7} parent=5 // pred_check_branch
      %193 = sbr.rel (%p190) target = $region12
    $region11: #{res_context_block.7} parent=5 // pred_region
      %s194 = ssub.s32 %s13, 1
      // Predicated region
      $region13: #{res_context_block.7} parent=11 // pred_check
        %p195 = pneg %p60
      $region14: #{res_context_block.7} parent=11 // pred_check_branch
        %197 = sbr.rel (%p195) target = $region16
      $region15: #{res_context_block.7} parent=11 // pred_region
        _
      $region16: #{res_context_block.7} parent=11 // pred_fallthru
        _
      // Predicated region
      $region17: #{res_context_block.7} parent=11 // pred_check
        %p198 = pneg %p81
      $region18: #{res_context_block.7} parent=11 // pred_check_branch
        %200 = sbr.rel (%p198) target = $region20
      $region19: #{res_context_block.7} parent=11 // pred_region
        _
      $region20: #{res_context_block.7} parent=11 // pred_fallthru
        _
      // Predicated region
      $region21: #{res_context_block.7} parent=11 // pred_check
        %p201 = pneg %p102
      $region22: #{res_context_block.7} parent=11 // pred_check_branch
        %203 = sbr.rel (%p201) target = $region24
      $region23: #{res_context_block.7} parent=11 // pred_region
        _
      $region24: #{res_context_block.7} parent=11 // pred_fallthru
        _
    $region12: #{res_context_block.7} parent=5 // pred_fallthru
      _
    %p204 = scmp.lt.s32.totalorder %s13, 2
    // Predicated region
    $region25: #{res_context_block.7} parent=5 // pred_check
      %p205 = pneg %p204
    $region26: #{res_context_block.7} parent=5 // pred_check_branch
      %207 = sbr.rel (%p205) target = $region28
    $region27: #{res_context_block.7} parent=5 // pred_region
      // Predicated region
      $region29: #{res_context_block.7} parent=27 // pred_check
        %p208 = pneg %p33
      $region30: #{res_context_block.7} parent=27 // pred_check_branch
        %210 = sbr.rel (%p208) target = $region32
      $region31: #{res_context_block.7} parent=27 // pred_region
        %s211 = smul.u32 16, %s13
        %p212 = scmp.lt.s32.totalorder %s211, 31
        %s213 = scalar_select %p212, %s211, 31
        %s214 = smul.addr %s213, 8
        %s215 = scalar_lea.vmem %s0, %s214
        %s216 = smul.u32 16, %s13
      $region32: #{res_context_block.7} parent=27 // pred_fallthru
        _
    $region28: #{res_context_block.7} parent=5 // pred_fallthru
      _
    %p217 = scmp.le.s32.totalorder 1, %s13
    %p218 = scmp.lt.s32.totalorder %s13, 3
    %p219 = pnand %p217, %p218
    %p220 = pneg %p219
    // Predicated region
    $region33: #{res_context_block.7} parent=5 // pred_check
      _
    $region34: #{res_context_block.7} parent=5 // pred_check_branch
      %222 = sbr.rel (%p219) target = $region36
    $region35: #{res_context_block.7} parent=5 // pred_region
      %s223 = ssub.s32 %s13, 1
      %s224 = smul.u32 16, %s18
      %p225 = scmp.lt.s32.totalorder %s224, 31
      %s226 = scalar_select %p225, %s224, 31
      %s227 = smul.addr %s226, 8
      %s228 = scalar_lea.vmem %s0, %s227
      %p229 = pneg %p39
      %p230 = pneg %p36
      %p231 = pneg %p60
      %p232 = pneg %p57
      %p233 = pneg %p81
      %p234 = pneg %p78
      %p235 = pneg %p102
      %p236 = pneg %p99
      %p237 = pneg %p128
      %p238 = pneg %p125
      %s239 = smul.u32 16, %s18
      %p240 = scmp.lt.s32.totalorder %s239, 31
      %s241 = scalar_select %p240, %s239, 31
      %s242 = smul.addr %s241, 8
      %s243 = scalar_lea.vmem %s4, %s242
      %p244 = pneg %p154
      %p245 = pneg %p151
      %p246 = scmp.lt.s32.totalorder %s18, 1
      %s247 = scalar_select %p246, %s18, 1
      %s248 = scalar_lea.vmem %s5, %s247
      %p249 = pneg %p180
      %p250 = pneg %p177
      %p251 = scmp.lt.s32.totalorder %s18, 1
      %s252 = scalar_select %p251, %s18, 1
      %s253 = scalar_lea.vmem %s6, %s252
      %s254 = smul.u32 16, %s18
      %p255 = scmp.lt.s32.totalorder %s254, 31
      %s256 = scalar_select %p255, %s254, 31
      %s257 = smul.addr %s256, 8
      %s258 = scalar_lea.vmem %s0, %s257
      %s259 = smul.u32 16, %s18
      %s260 = smul.u32 16, %s18
      %p261 = scmp.lt.s32.totalorder %s260, 31
      %s262 = scalar_select %p261, %s260, 31
      %s263 = smul.addr %s262, 8
      %s264 = scalar_lea.vmem %s4, %s263
      %s265 = smul.u32 16, %s18
      %p266 = scmp.lt.s32.totalorder %s18, 1
      %s267 = scalar_select %p266, %s18, 1
      %s268 = scalar_lea.vmem %s5, %s267
      %p269 = scmp.lt.s32.totalorder %s18, 1
      %s270 = scalar_select %p269, %s18, 1
      %s271 = scalar_lea.vmem %s6, %s270
      %v272 = vld [vmem:[%s2] sm:$0x1]
      %v273 = vld [vmem:[%s3] sm:$0x1]
      %v274 = vlaneseq
      %v275 = vshrl.u32 %v274, 7
      loop: start=0, step=1, limit=16
      $region37: #{res_context_block.7} parent=35 // loop_pre_header
        _
      $region38: #{res_context_block.7} parent=35 // loop_header
        %s277 = sphi 0, %s281
        %p278 = scmp.ge.s32.totalorder %s277, 16
        %v282 = vphi 0.0, %v583
        %v283 = vphi 0.0, %v591
      $region39: #{res_context_block.7} parent=35 // loop_header_branch
        %280 = sbr.rel (%p278) target = $region43
      $region40: #{res_context_block.7} parent=35 // loop_body
        %s284 = smul.u32 %s277, 8
        %s285 = scalar_lea.vmem %s258, %s284
        %v286 = vld [vmem:[%s285] sm:$0xff]
        %v288 = vlaneseq
        %v289 = vshrl.u32 %v288, 7
        %v290 = vsub.s32 0, %v289
        %v291 = vrot.slane %v272, %v290
        %v293 = vmul.f32 %v286, %v291
        %v295 = vlaneseq
        %v296 = vshrl.u32 %v295, 7
        %v297 = vsub.s32 0, %v296
        %v298 = vrot.slane %v273, %v297
        %v300 = vadd.f32 %v293, %v298
        %vm301 = vcmp.ge.s32.totalorder %v275, 1
        %v302 = vrot.slane %v300, 7
        %v303 = vsel %vm301, 1, 0
        %vm304 = vcmp.eq.s32.totalorder %v303, 1
        %v305 = vsel %vm304, %v302, 0.0
        %vm306 = vcmp.le.s32.totalorder %v275, 6
        %v307 = vrot.slane %v300, 1
        %v308 = vsel %vm306, 1, 0
        %vm309 = vcmp.eq.s32.totalorder %v308, 1
        %v310 = vsel %vm309, %v307, 0.0
        %v311 = vld [vmem:[%s1] sm:$0xff]
        %v312 = vld [vmem:[%s1 + $0x8] sm:$0xff]
        %v313 = vld [vmem:[%s1 + $0x10] sm:$0xff]
        %v314 = vld [vmem:[%s1 + $0x18] sm:$0xff]
        %v315 = vld [vmem:[%s1 + $0x20] sm:$0xff]
        %v316 = vld [vmem:[%s1 + $0x28] sm:$0xff]
        %v317 = vld [vmem:[%s1 + $0x30] sm:$0xff]
        %v318 = vld [vmem:[%s1 + $0x38] sm:$0xff]
        %v319 = vld [vmem:[%s1 + $0x40] sm:$0xff]
        %v320 = vld [vmem:[%s1 + $0x48] sm:$0xff]
        %v321 = vld [vmem:[%s1 + $0x50] sm:$0xff]
        %v322 = vld [vmem:[%s1 + $0x58] sm:$0xff]
        %v323 = vld [vmem:[%s1 + $0x60] sm:$0xff]
        %v324 = vld [vmem:[%s1 + $0x68] sm:$0xff]
        %v325 = vld [vmem:[%s1 + $0x70] sm:$0xff]
        %v326 = vld [vmem:[%s1 + $0x78] sm:$0xff]
        %s327 = scalar_lea.vmem %s1, 128
        %v328 = vld [vmem:[%s327] sm:$0xff]
        %v329 = vld [vmem:[%s327 + $0x8] sm:$0xff]
        %v330 = vld [vmem:[%s327 + $0x10] sm:$0xff]
        %v331 = vld [vmem:[%s327 + $0x18] sm:$0xff]
        %v332 = vld [vmem:[%s327 + $0x20] sm:$0xff]
        %v333 = vld [vmem:[%s327 + $0x28] sm:$0xff]
        %v334 = vld [vmem:[%s327 + $0x30] sm:$0xff]
        %v335 = vld [vmem:[%s327 + $0x38] sm:$0xff]
        %v336 = vld [vmem:[%s327 + $0x40] sm:$0xff]
        %v337 = vld [vmem:[%s327 + $0x48] sm:$0xff]
        %v338 = vld [vmem:[%s327 + $0x50] sm:$0xff]
        %v339 = vld [vmem:[%s327 + $0x58] sm:$0xff]
        %v340 = vld [vmem:[%s327 + $0x60] sm:$0xff]
        %v341 = vld [vmem:[%s327 + $0x68] sm:$0xff]
        %v342 = vld [vmem:[%s327 + $0x70] sm:$0xff]
        %v343 = vld [vmem:[%s327 + $0x78] sm:$0xff]
        %344 = vmatprep.subr.mxu0 0.0
        %345 = vmatpush1.msra.mxu0 %v343
        %346 = vmatprep.subr.mxu0 0.0
        %347 = vmatpush1.msra.mxu0 %v342
        %348 = vmatprep.subr.mxu0 0.0
        %349 = vmatpush1.msra.mxu0 %v341
        %350 = vmatprep.subr.mxu0 0.0
        %351 = vmatpush1.msra.mxu0 %v340
        %352 = vmatprep.subr.mxu0 0.0
        %353 = vmatpush1.msra.mxu0 %v339
        %354 = vmatprep.subr.mxu0 0.0
        %355 = vmatpush1.msra.mxu0 %v338
        %356 = vmatprep.subr.mxu0 0.0
        %357 = vmatpush1.msra.mxu0 %v337
        %358 = vmatprep.subr.mxu0 0.0
        %359 = vmatpush1.msra.mxu0 %v336
        %360 = vmatprep.subr.mxu0 0.0
        %361 = vmatpush1.msra.mxu0 %v335
        %362 = vmatprep.subr.mxu0 0.0
        %363 = vmatpush1.msra.mxu0 %v334
        %364 = vmatprep.subr.mxu0 0.0
        %365 = vmatpush1.msra.mxu0 %v333
        %366 = vmatprep.subr.mxu0 0.0
        %367 = vmatpush1.msra.mxu0 %v332
        %368 = vmatprep.subr.mxu0 0.0
        %369 = vmatpush1.msra.mxu0 %v331
        %370 = vmatprep.subr.mxu0 0.0
        %371 = vmatpush1.msra.mxu0 %v330
        %372 = vmatprep.subr.mxu0 0.0
        %373 = vmatpush1.msra.mxu0 %v329
        %374 = vmatprep.subr.mxu0 0.0
        %375 = vmatpush1.msra.mxu0 %v328
        %376 = vmatprep.subr.mxu0 0.0
        %377 = vmatpush2.msra.mxu0 0.0
        %378 = vmatprep.subr.mxu0 0.0
        %379 = vmatpush2.msra.mxu0 0.0
        %380 = vmatprep.subr.mxu0 0.0
        %381 = vmatpush2.msra.mxu0 0.0
        %382 = vmatprep.subr.mxu0 0.0
        %383 = vmatpush2.msra.mxu0 0.0
        %384 = vmatprep.subr.mxu0 0.0
        %385 = vmatpush2.msra.mxu0 0.0
        %386 = vmatprep.subr.mxu0 0.0
        %387 = vmatpush2.msra.mxu0 0.0
        %388 = vmatprep.subr.mxu0 0.0
        %389 = vmatpush2.msra.mxu0 0.0
        %390 = vmatprep.subr.mxu0 0.0
        %391 = vmatpush2.msra.mxu0 0.0
        %392 = vmatprep.subr.mxu0 0.0
        %393 = vmatpush2.msra.mxu0 0.0
        %394 = vmatprep.subr.mxu0 0.0
        %395 = vmatpush2.msra.mxu0 0.0
        %396 = vmatprep.subr.mxu0 0.0
        %397 = vmatpush2.msra.mxu0 0.0
        %398 = vmatprep.subr.mxu0 0.0
        %399 = vmatpush2.msra.mxu0 0.0
        %400 = vmatprep.subr.mxu0 0.0
        %401 = vmatpush2.msra.mxu0 0.0
        %402 = vmatprep.subr.mxu0 0.0
        %403 = vmatpush2.msra.mxu0 0.0
        %404 = vmatprep.subr.mxu0 0.0
        %405 = vmatpush2.msra.mxu0 0.0
        %406 = vmatprep.subr.mxu0 0.0
        %407 = vmatpush2.msra.mxu0 0.0
        %408 = vmatprep.mubr.f32.mxu0 0.0
        %409 = vmatmul.mubr.f32.gmra.mxu0 %v300
        %v410 = vpop.f32.mrf.mxu0
        %v411 = vadd.f32 0.0, %v410
        %v412 = vpop.f32.mrf.mxu0
        %413 = vdwg.mxu0
        %414 = vmatprep.subr.mxu0 0.0
        %415 = vmatpush1.msra.mxu0 %v326
        %416 = vmatprep.subr.mxu0 0.0
        %417 = vmatpush1.msra.mxu0 %v325
        %418 = vmatprep.subr.mxu0 0.0
        %419 = vmatpush1.msra.mxu0 %v324
        %420 = vmatprep.subr.mxu0 0.0
        %421 = vmatpush1.msra.mxu0 %v323
        %422 = vmatprep.subr.mxu0 0.0
        %423 = vmatpush1.msra.mxu0 %v322
        %424 = vmatprep.subr.mxu0 0.0
        %425 = vmatpush1.msra.mxu0 %v321
        %426 = vmatprep.subr.mxu0 0.0
        %427 = vmatpush1.msra.mxu0 %v320
        %428 = vmatprep.subr.mxu0 0.0
        %429 = vmatpush1.msra.mxu0 %v319
        %430 = vmatprep.subr.mxu0 0.0
        %431 = vmatpush1.msra.mxu0 %v318
        %432 = vmatprep.subr.mxu0 0.0
        %433 = vmatpush1.msra.mxu0 %v317
        %434 = vmatprep.subr.mxu0 0.0
        %435 = vmatpush1.msra.mxu0 %v316
        %436 = vmatprep.subr.mxu0 0.0
        %437 = vmatpush1.msra.mxu0 %v315
        %438 = vmatprep.subr.mxu0 0.0
        %439 = vmatpush1.msra.mxu0 %v314
        %440 = vmatprep.subr.mxu0 0.0
        %441 = vmatpush1.msra.mxu0 %v313
        %442 = vmatprep.subr.mxu0 0.0
        %443 = vmatpush1.msra.mxu0 %v312
        %444 = vmatprep.subr.mxu0 0.0
        %445 = vmatpush1.msra.mxu0 %v311
        %446 = vmatprep.subr.mxu0 0.0
        %447 = vmatpush2.msra.mxu0 0.0
        %448 = vmatprep.subr.mxu0 0.0
        %449 = vmatpush2.msra.mxu0 0.0
        %450 = vmatprep.subr.mxu0 0.0
        %451 = vmatpush2.msra.mxu0 0.0
        %452 = vmatprep.subr.mxu0 0.0
        %453 = vmatpush2.msra.mxu0 0.0
        %454 = vmatprep.subr.mxu0 0.0
        %455 = vmatpush2.msra.mxu0 0.0
        %456 = vmatprep.subr.mxu0 0.0
        %457 = vmatpush2.msra.mxu0 0.0
        %458 = vmatprep.subr.mxu0 0.0
        %459 = vmatpush2.msra.mxu0 0.0
        %460 = vmatprep.subr.mxu0 0.0
        %461 = vmatpush2.msra.mxu0 0.0
        %462 = vmatprep.subr.mxu0 0.0
        %463 = vmatpush2.msra.mxu0 0.0
        %464 = vmatprep.subr.mxu0 0.0
        %465 = vmatpush2.msra.mxu0 0.0
        %466 = vmatprep.subr.mxu0 0.0
        %467 = vmatpush2.msra.mxu0 0.0
        %468 = vmatprep.subr.mxu0 0.0
        %469 = vmatpush2.msra.mxu0 0.0
        %470 = vmatprep.subr.mxu0 0.0
        %471 = vmatpush2.msra.mxu0 0.0
        %472 = vmatprep.subr.mxu0 0.0
        %473 = vmatpush2.msra.mxu0 0.0
        %474 = vmatprep.subr.mxu0 0.0
        %475 = vmatpush2.msra.mxu0 0.0
        %476 = vmatprep.subr.mxu0 0.0
        %477 = vmatpush2.msra.mxu0 0.0
        %478 = vmatprep.mubr.f32.mxu0 0.0
        %479 = vmatmul.mubr.f32.gmra.mxu0 %v305
        %v480 = vpop.f32.mrf.mxu0
        %v481 = vadd.f32 %v411, %v480
        %v482 = vpop.f32.mrf.mxu0
        %483 = vdwg.mxu0
        %s484 = scalar_lea.vmem %s1, 256
        %v485 = vld [vmem:[%s484] sm:$0xff]
        %v486 = vld [vmem:[%s484 + $0x8] sm:$0xff]
        %v487 = vld [vmem:[%s484 + $0x10] sm:$0xff]
        %v488 = vld [vmem:[%s484 + $0x18] sm:$0xff]
        %v489 = vld [vmem:[%s484 + $0x20] sm:$0xff]
        %v490 = vld [vmem:[%s484 + $0x28] sm:$0xff]
        %v491 = vld [vmem:[%s484 + $0x30] sm:$0xff]
        %v492 = vld [vmem:[%s484 + $0x38] sm:$0xff]
        %v493 = vld [vmem:[%s484 + $0x40] sm:$0xff]
        %v494 = vld [vmem:[%s484 + $0x48] sm:$0xff]
        %v495 = vld [vmem:[%s484 + $0x50] sm:$0xff]
        %v496 = vld [vmem:[%s484 + $0x58] sm:$0xff]
        %v497 = vld [vmem:[%s484 + $0x60] sm:$0xff]
        %v498 = vld [vmem:[%s484 + $0x68] sm:$0xff]
        %v499 = vld [vmem:[%s484 + $0x70] sm:$0xff]
        %v500 = vld [vmem:[%s484 + $0x78] sm:$0xff]
        %501 = vmatprep.subr.mxu0 0.0
        %502 = vmatpush1.msra.mxu0 %v500
        %503 = vmatprep.subr.mxu0 0.0
        %504 = vmatpush1.msra.mxu0 %v499
        %505 = vmatprep.subr.mxu0 0.0
        %506 = vmatpush1.msra.mxu0 %v498
        %507 = vmatprep.subr.mxu0 0.0
        %508 = vmatpush1.msra.mxu0 %v497
        %509 = vmatprep.subr.mxu0 0.0
        %510 = vmatpush1.msra.mxu0 %v496
        %511 = vmatprep.subr.mxu0 0.0
        %512 = vmatpush1.msra.mxu0 %v495
        %513 = vmatprep.subr.mxu0 0.0
        %514 = vmatpush1.msra.mxu0 %v494
        %515 = vmatprep.subr.mxu0 0.0
        %516 = vmatpush1.msra.mxu0 %v493
        %517 = vmatprep.subr.mxu0 0.0
        %518 = vmatpush1.msra.mxu0 %v492
        %519 = vmatprep.subr.mxu0 0.0
        %520 = vmatpush1.msra.mxu0 %v491
        %521 = vmatprep.subr.mxu0 0.0
        %522 = vmatpush1.msra.mxu0 %v490
        %523 = vmatprep.subr.mxu0 0.0
        %524 = vmatpush1.msra.mxu0 %v489
        %525 = vmatprep.subr.mxu0 0.0
        %526 = vmatpush1.msra.mxu0 %v488
        %527 = vmatprep.subr.mxu0 0.0
        %528 = vmatpush1.msra.mxu0 %v487
        %529 = vmatprep.subr.mxu0 0.0
        %530 = vmatpush1.msra.mxu0 %v486
        %531 = vmatprep.subr.mxu0 0.0
        %532 = vmatpush1.msra.mxu0 %v485
        %533 = vmatprep.subr.mxu0 0.0
        %534 = vmatpush2.msra.mxu0 0.0
        %535 = vmatprep.subr.mxu0 0.0
        %536 = vmatpush2.msra.mxu0 0.0
        %537 = vmatprep.subr.mxu0 0.0
        %538 = vmatpush2.msra.mxu0 0.0
        %539 = vmatprep.subr.mxu0 0.0
        %540 = vmatpush2.msra.mxu0 0.0
        %541 = vmatprep.subr.mxu0 0.0
        %542 = vmatpush2.msra.mxu0 0.0
        %543 = vmatprep.subr.mxu0 0.0
        %544 = vmatpush2.msra.mxu0 0.0
        %545 = vmatprep.subr.mxu0 0.0
        %546 = vmatpush2.msra.mxu0 0.0
        %547 = vmatprep.subr.mxu0 0.0
        %548 = vmatpush2.msra.mxu0 0.0
        %549 = vmatprep.subr.mxu0 0.0
        %550 = vmatpush2.msra.mxu0 0.0
        %551 = vmatprep.subr.mxu0 0.0
        %552 = vmatpush2.msra.mxu0 0.0
        %553 = vmatprep.subr.mxu0 0.0
        %554 = vmatpush2.msra.mxu0 0.0
        %555 = vmatprep.subr.mxu0 0.0
        %556 = vmatpush2.msra.mxu0 0.0
        %557 = vmatprep.subr.mxu0 0.0
        %558 = vmatpush2.msra.mxu0 0.0
        %559 = vmatprep.subr.mxu0 0.0
        %560 = vmatpush2.msra.mxu0 0.0
        %561 = vmatprep.subr.mxu0 0.0
        %562 = vmatpush2.msra.mxu0 0.0
        %563 = vmatprep.subr.mxu0 0.0
        %564 = vmatpush2.msra.mxu0 0.0
        %565 = vmatprep.mubr.f32.mxu0 0.0
        %566 = vmatmul.mubr.f32.gmra.mxu0 %v310
        %v567 = vpop.f32.mrf.mxu0
        %v568 = vadd.f32 0.0, %v567
        %v569 = vpop.f32.mrf.mxu0
        %570 = vdwg.mxu0
        %v571 = vadd.f32 %v481, %v568
        %vm572 = vcmp.ge.f32.partialorder %v571, 0.0
        %v573 = vmul.f32 %v571, 0.01
        %v574 = vsel %vm572, %v571, %v573
        %s575 = scalar_lea.vmem %s264, %s284
        %576 = vst [vmem:[%s575] sm:$0xff] %v574
        %v577 = vrot.slane %v574, 4
        %v578 = vadd.f32 %v574, %v577
        %v579 = vrot.slane %v578, 2
        %v580 = vadd.f32 %v578, %v579
        %v581 = vrot.slane %v580, 1
        %v582 = vadd.f32 %v580, %v581
        %v583 = vadd.f32 %v282, %v582
        %v584 = vmul.f32 %v574, %v574
        %v585 = vrot.slane %v584, 4
        %v586 = vadd.f32 %v584, %v585
        %v587 = vrot.slane %v586, 2
        %v588 = vadd.f32 %v586, %v587
        %v589 = vrot.slane %v588, 1
        %v590 = vadd.f32 %v588, %v589
        %v591 = vadd.f32 %v283, %v590
      $region41: #{res_context_block.7} parent=35 // loop_footer
        %s281 = sadd.s32 1, %s277
      $region42: #{res_context_block.7} parent=35 // loop_footer_branch
        %276 = sbr.rel target = $region38
      $region43: #{res_context_block.7} parent=35 // loop_exit
        _
      %592 = vst [vmem:[%s268] sm:$0x1] %v282
      %593 = vst [vmem:[%s271] sm:$0x1] %v283
      %s594 = smul.u32 16, %s18
      %p595 = scmp.lt.s32.totalorder %s594, 31
      %s596 = scalar_select %p595, %s594, 31
      %s597 = smul.addr %s596, 8
      %s598 = scalar_lea.vmem %s4, %s597
      %p599 = scmp.lt.s32.totalorder %s18, 1
      %s600 = scalar_select %p599, %s18, 1
      %s601 = scalar_lea.vmem %s5, %s600
      %p602 = scmp.lt.s32.totalorder %s18, 1
      %s603 = scalar_select %p602, %s18, 1
      %s604 = scalar_lea.vmem %s6, %s603
      // Predicated region
      $region44: #{res_context_block.7} parent=35 // pred_check
        %p605 = pneg %p125
      $region45: #{res_context_block.7} parent=35 // pred_check_branch
        %607 = sbr.rel (%p605) target = $region47
      $region46: #{res_context_block.7} parent=35 // pred_region
        %s608 = smul.u32 16, %s18
      $region47: #{res_context_block.7} parent=35 // pred_fallthru
        _
      // Predicated region
      $region48: #{res_context_block.7} parent=35 // pred_check
        %p609 = pneg %p151
      $region49: #{res_context_block.7} parent=35 // pred_check_branch
        %611 = sbr.rel (%p609) target = $region51
      $region50: #{res_context_block.7} parent=35 // pred_region
        _
      $region51: #{res_context_block.7} parent=35 // pred_fallthru
        _
      // Predicated region
      $region52: #{res_context_block.7} parent=35 // pred_check
        %p612 = pneg %p177
      $region53: #{res_context_block.7} parent=35 // pred_check_branch
        %614 = sbr.rel (%p612) target = $region55
      $region54: #{res_context_block.7} parent=35 // pred_region
        _
      $region55: #{res_context_block.7} parent=35 // pred_fallthru
        _
    $region36: #{res_context_block.7} parent=5 // pred_fallthru
      _
    %p615 = scmp.le.s32.totalorder 2, %s13
    // Predicated region
    $region56: #{res_context_block.7} parent=5 // pred_check
      %p616 = pneg %p615
    $region57: #{res_context_block.7} parent=5 // pred_check_branch
      %618 = sbr.rel (%p616) target = $region59
    $region58: #{res_context_block.7} parent=5 // pred_region
      %s619 = ssub.s32 %s13, 2
      // Predicated region
      $region60: #{res_context_block.7} parent=58 // pred_check
        %p620 = pneg %p131
      $region61: #{res_context_block.7} parent=58 // pred_check_branch
        %622 = sbr.rel (%p620) target = $region63
      $region62: #{res_context_block.7} parent=58 // pred_region
        %s623 = smul.u32 16, %s19
        %p624 = scmp.lt.s32.totalorder %s623, 31
        %s625 = scalar_select %p624, %s623, 31
        %s626 = smul.addr %s625, 8
        %s627 = scalar_lea.vmem %s4, %s626
      $region63: #{res_context_block.7} parent=58 // pred_fallthru
        _
      // Predicated region
      $region64: #{res_context_block.7} parent=58 // pred_check
        %p628 = pneg %p157
      $region65: #{res_context_block.7} parent=58 // pred_check_branch
        %630 = sbr.rel (%p628) target = $region67
      $region66: #{res_context_block.7} parent=58 // pred_region
        %p631 = scmp.lt.s32.totalorder %s19, 1
        %s632 = scalar_select %p631, %s19, 1
        %s633 = scalar_lea.vmem %s5, %s632
      $region67: #{res_context_block.7} parent=58 // pred_fallthru
        _
      // Predicated region
      $region68: #{res_context_block.7} parent=58 // pred_check
        %p634 = pneg %p183
      $region69: #{res_context_block.7} parent=58 // pred_check_branch
        %636 = sbr.rel (%p634) target = $region71
      $region70: #{res_context_block.7} parent=58 // pred_region
        %p637 = scmp.lt.s32.totalorder %s19, 1
        %s638 = scalar_select %p637, %s19, 1
        %s639 = scalar_lea.vmem %s6, %s638
      $region71: #{res_context_block.7} parent=58 // pred_fallthru
        _
    $region59: #{res_context_block.7} parent=5 // pred_fallthru
      _
  $region6: #{res_context_block.7} parent=0 // loop_footer
    %s17 = sadd.s32 1, %s13
  $region7: #{res_context_block.7} parent=0 // loop_footer_branch
    %12 = sbr.rel target = $region3
  $region8: #{res_context_block.7} parent=0 // loop_exit
    _

</llo_original>
